<compile_context>
chip_gen: v5e
topology: v5e:2x2
jax: 0.10.0
libtpu: 0.0.40
codegen_flags: <defaults>
</compile_context>

<pallas_src>
import functools

import jax
import jax.numpy as jnp
import numpy as np
from jax.experimental import pallas as pl
from jax.experimental.pallas import tpu as pltpu


def _round_up(x, m):
    return (x + m - 1) // m * m


def _pick_row_tile(h, target):
    """Largest even divisor of h that is <= target."""
    t = min(target, h)
    while t > 1 and (h % t != 0 or t % 2 != 0):
        t -= 1
    return max(t, 1)


def _upsample_conv_kernel(x_main_ref, x_halo_ref, w_ref, b_ref, o_ref, xs_ref,
                          *, tile_h, width, c_pad):
    """One (batch, row-tile) step.

    x_main_ref: (tile_h,   Wpa, Cp)  padded source rows [t*tile_h, (t+1)*tile_h)
    x_halo_ref: (2,        Wpa, Cp)  2-row bottom halo of the same image
    w_ref:      (4, 4*Cp, Cp)        phase-packed effective 2x2 weights
    b_ref:      (1, Cp)              bias (f32)
    o_ref:      (tile_h, W, 4*Cp)    phase-major output block
    xs_ref:     (tile_h+2, Wpa, Cp)  VMEM scratch: assembled haloed slab
    """
    # Assemble the haloed slab once (single VMEM copy per step).
    xs_ref[0:tile_h, :, :] = x_main_ref[...]
    xs_ref[tile_h:tile_h + 2, :, :] = x_halo_ref[...]

    bias = b_ref[...]  # (1, Cp), broadcasts over rows

    # One matmul per output phase: im2col the 4 taps of the equivalent 2x2
    # conv along the lane axis (K = 4*Cp) -> no per-tap accumulator RMW.
    for pa in (0, 1):
        for pb in (0, 1):
            g = 2 * pa + pb
            taps = [
                xs_ref[pa + dr:pa + dr + tile_h, pb + dc:pb + dc + width, :]
                for dr in (0, 1) for dc in (0, 1)
            ]
            lhs = jnp.concatenate(taps, axis=-1).reshape(tile_h * width,
                                                         4 * c_pad)
            res = jnp.dot(lhs, w_ref[g],
                          preferred_element_type=jnp.float32) + bias
            o_ref[:, :, g * c_pad:(g + 1) * c_pad] = (
                res.reshape(tile_h, width, c_pad).astype(o_ref.dtype))


def upsample_forward(x, weight, bias, *, row_tile=16, compute_dtype=None):
    """x: (N, C, H, W) NCHW, weight: (C, C, 3, 3), bias: (C,).

    Returns (N, C, 2H, 2W), matching
        F.interpolate(x, scale_factor=2, mode='nearest') -> Conv2d(C, C, 3, pad=1).

    compute_dtype: set to jnp.bfloat16 for production (v6e/v7x MXU-native,
    halves weight/activation DMA).  Defaults to x.dtype.
    """
    N, C, H, W = x.shape
    assert weight.shape == (C, C, 3, 3) and bias.shape == (C,)
    # TODO(synk): odd input heights would need a 1-row halo variant.
    assert H % 2 == 0, "even input height expected for the 2-row halo blocks"

    out_dtype = x.dtype
    cdt = jnp.dtype(compute_dtype) if compute_dtype is not None else jnp.dtype(x.dtype)

    Cp = _round_up(C, 128)          # lane-dense channels
    Wpa = _round_up(W + 2, 8)       # sublane-aligned padded width
    TH = _pick_row_tile(H, row_tile)
    T = H // TH

    # ---- glue: NCHW -> NHWC, +1 conv halo pad (rows/cols), alignment pad,
    #      channel pad.  Only the ORIGINAL-resolution image is touched; the 2x
    #      upsampled intermediate never exists in HBM. ----
    x_nhwc = jnp.transpose(x, (0, 2, 3, 1)).astype(cdt)          # (N, H, W, C)
    xp = jnp.pad(x_nhwc,
                 ((0, 0), (1, 1), (1, Wpa - (W + 1)), (0, Cp - C)))

    # ---- fold the nearest-2x upsample into the weights:
    #      R[k, a, d] == 1 iff 3x3 tap k contributes to output phase a,
    #      2x2 tap d of the phase-specific conv on the source image. ----
    R = np.zeros((3, 2, 2), np.float32)
    R[0, 0, 0] = 1.0
    R[1, 0, 1] = 1.0
    R[2, 0, 1] = 1.0
    R[0, 1, 0] = 1.0
    R[1, 1, 0] = 1.0
    R[2, 1, 1] = 1.0
    w_t = jnp.transpose(weight, (2, 3, 1, 0)).astype(jnp.float32)  # (kh,kw,Ci,Co)
    eff = jnp.einsum('uad,vbe,uvio->abdeio', R, R, w_t)            # (2,2,2,2,C,C)
    eff = jnp.pad(eff, ((0, 0),) * 4 + ((0, Cp - C), (0, Cp - C)))
    # (phase g=2a+b, K=(2dr+dc)*Cp + cin, cout) -- matches the kernel's im2col.
    w_packed = eff.reshape(4, 4 * Cp, Cp).astype(cdt)
    b_packed = jnp.pad(bias, (0, Cp - C)).astype(jnp.float32).reshape(1, Cp)

    kernel = functools.partial(_upsample_conv_kernel,
                               tile_h=TH, width=W, c_pad=Cp)

    itemsize = jnp.dtype(cdt).itemsize
    flops = 2 * N * H * W * 4 * (4 * Cp) * Cp
    bytes_accessed = (xp.size * itemsize + w_packed.size * itemsize
                      + b_packed.size * 4
                      + N * H * W * 4 * Cp * jnp.dtype(out_dtype).itemsize)

    out = pl.pallas_call(
        kernel,
        out_shape=jax.ShapeDtypeStruct((N, H, W, 4 * Cp), out_dtype),
        grid_spec=pltpu.PrefetchScalarGridSpec(
            num_scalar_prefetch=0,
            grid=(N, T),
            in_specs=[
                # main row slab of the padded source image
                pl.BlockSpec((None, TH, Wpa, Cp), lambda n, t: (n, t, 0, 0)),
                # 2-row bottom halo of the same array (overlap via 2nd operand)
                pl.BlockSpec((None, 2, Wpa, Cp),
                             lambda n, t: (n, (t + 1) * (TH // 2), 0, 0)),
                # phase-packed weights / bias: constant block index -> DMA'd
                # once, resident across the whole grid (no re-fetch).
                pl.BlockSpec((4, 4 * Cp, Cp), lambda n, t: (0, 0, 0)),
                pl.BlockSpec((1, Cp), lambda n, t: (0, 0)),
            ],
            out_specs=pl.BlockSpec((None, TH, W, 4 * Cp),
                                   lambda n, t: (n, t, 0, 0)),
            scratch_shapes=[pltpu.VMEM((TH + 2, Wpa, Cp), cdt)],
        ),
        compiler_params=pltpu.CompilerParams(
            dimension_semantics=("parallel", "parallel"),
            vmem_limit_bytes=64 * 1024 * 1024,
        ),
        cost_estimate=pl.CostEstimate(
            flops=flops, transcendentals=0, bytes_accessed=bytes_accessed),
    )(xp, xp, w_packed, b_packed)

    # ---- glue: phase de-interleave + NHWC -> NCHW, once, in XLA ----
    out = out.reshape(N, H, W, 2, 2, Cp)[..., :C]
    out = jnp.transpose(out, (0, 5, 1, 3, 2, 4)).reshape(N, C, 2 * H, 2 * W)
    return out


def _reference(x, weight, bias):
    """Pure-JAX reference: nearest 2x upsample + SAME 3x3 conv (NCHW)."""
    up = jnp.repeat(jnp.repeat(x, 2, axis=2), 2, axis=3)
    out = jax.lax.conv_general_dilated(
        up, weight,
        window_strides=(1, 1),
        padding=((1, 1), (1, 1)),
        dimension_numbers=("NCHW", "OIHW", "NCHW"),
    )
    return out + bias.reshape(1, -1, 1, 1)


if __name__ == "__main__":
    key = jax.random.PRNGKey(0)
    k_x, k_w, k_b = jax.random.split(key, 3)

    N, C, H, W = 2, 4, 16, 16
    x = jax.random.normal(k_x, (N, C, H, W), dtype=jnp.float32)

    fan_in = C * 3 * 3
    bound = 1.0 / (fan_in ** 0.5)
    weight = jax.random.uniform(k_w, (C, C, 3, 3), jnp.float32, -bound, bound)
    bias = jax.random.uniform(k_b, (C,), jnp.float32, -bound, bound)

    ref = _reference(x, weight, bias)

    # Single row tile per image (T=1) and multi-tile (T=4) to exercise the
    # halo / tile-boundary path.
    for rt in (16, 4):
        out = jax.block_until_ready(upsample_forward(x, weight, bias,
                                                     row_tile=rt))
        assert out.shape == (N, C, 2 * H, 2 * W), out.shape
        err = float(jnp.max(jnp.abs(out - ref)))
        assert jnp.allclose(out, ref, atol=1e-4, rtol=1e-4), (rt, err)

    print("KERNEL_OK")
</pallas_src>

<mosaic_0001>
module attributes {stable_mosaic.version = 11 : i64} {
  func.func @_upsample_conv_kernel(%arg0: i32, %arg1: i32, %arg2: memref<1x16x24x128xf32, #tpu.memory_space<vmem>>, %arg3: memref<1x2x24x128xf32, #tpu.memory_space<vmem>>, %arg4: memref<4x512x128xf32, #tpu.memory_space<vmem>>, %arg5: memref<1x128xf32, #tpu.memory_space<vmem>>, %arg6: memref<1x16x16x512xf32, #tpu.memory_space<vmem>>, %arg7: memref<18x24x128xf32, #tpu.memory_space<vmem>>) attributes {dimension_semantics = [#tpu.dimension_semantics<parallel>, #tpu.dimension_semantics<parallel>], iteration_bounds = array<i64: 2, 1>, scalar_prefetch = 0 : i64, scratch_operands = 1 : i64, tpu.core_type = #tpu.core_type<tc>, window_params = [{transform_indices = @transform_0, window_bounds = array<i64: 1, 16, 24, 128>}, {transform_indices = @transform_1, window_bounds = array<i64: 1, 2, 24, 128>}, {pipeline_mode = #tpu.pipeline_mode<synchronous>, transform_indices = @transform_2, window_bounds = array<i64: 4, 512, 128>}, {pipeline_mode = #tpu.pipeline_mode<synchronous>, transform_indices = @transform_3, window_bounds = array<i64: 1, 128>}, {transform_indices = @transform_4, window_bounds = array<i64: 1, 16, 16, 512>}]} {
    %c0 = arith.constant 0 : index
    %c0_0 = arith.constant 0 : index
    %c0_1 = arith.constant 0 : index
    %c0_2 = arith.constant 0 : index
    %0 = vector.load %arg2[%c0, %c0_0, %c0_1, %c0_2] : memref<1x16x24x128xf32, #tpu.memory_space<vmem>>, vector<1x16x24x128xf32>
    %1 = vector.shape_cast %0 : vector<1x16x24x128xf32> to vector<16x24x128xf32>
    %c0_3 = arith.constant 0 : index
    %c0_4 = arith.constant 0 : index
    %c0_5 = arith.constant 0 : index
    %2 = vector.load %arg7[%c0_3, %c0_4, %c0_5] : memref<18x24x128xf32, #tpu.memory_space<vmem>>, vector<16x24x128xf32>
    tpu.vector_store %arg7[%c0_3, %c0_4, %c0_5], %1 {strides = array<i32>} : memref<18x24x128xf32, #tpu.memory_space<vmem>>, vector<16x24x128xf32>,
    %c0_6 = arith.constant 0 : index
    %c0_7 = arith.constant 0 : index
    %c0_8 = arith.constant 0 : index
    %c0_9 = arith.constant 0 : index
    %3 = vector.load %arg3[%c0_6, %c0_7, %c0_8, %c0_9] : memref<1x2x24x128xf32, #tpu.memory_space<vmem>>, vector<1x2x24x128xf32>
    %4 = vector.shape_cast %3 : vector<1x2x24x128xf32> to vector<2x24x128xf32>
    %c16 = arith.constant 16 : index
    %c0_10 = arith.constant 0 : index
    %c0_11 = arith.constant 0 : index
    %5 = vector.load %arg7[%c16, %c0_10, %c0_11] : memref<18x24x128xf32, #tpu.memory_space<vmem>>, vector<2x24x128xf32>
    tpu.vector_store %arg7[%c16, %c0_10, %c0_11], %4 {strides = array<i32>} : memref<18x24x128xf32, #tpu.memory_space<vmem>>, vector<2x24x128xf32>,
    %c0_12 = arith.constant 0 : index
    %c0_13 = arith.constant 0 : index
    %6 = vector.load %arg5[%c0_12, %c0_13] : memref<1x128xf32, #tpu.memory_space<vmem>>, vector<1x128xf32>
    %c0_14 = arith.constant 0 : index
    %c0_15 = arith.constant 0 : index
    %c0_16 = arith.constant 0 : index
    %7 = vector.load %arg7[%c0_14, %c0_15, %c0_16] : memref<18x24x128xf32, #tpu.memory_space<vmem>>, vector<16x16x128xf32>
    %c0_17 = arith.constant 0 : index
    %c1 = arith.constant 1 : index
    %c0_18 = arith.constant 0 : index
    %8 = vector.load %arg7[%c0_17, %c1, %c0_18] : memref<18x24x128xf32, #tpu.memory_space<vmem>>, vector<16x16x128xf32>
    %c1_19 = arith.constant 1 : index
    %c0_20 = arith.constant 0 : index
    %c0_21 = arith.constant 0 : index
    %9 = vector.load %arg7[%c1_19, %c0_20, %c0_21] : memref<18x24x128xf32, #tpu.memory_space<vmem>>, vector<16x16x128xf32>
    %c1_22 = arith.constant 1 : index
    %c1_23 = arith.constant 1 : index
    %c0_24 = arith.constant 0 : index
    %10 = vector.load %arg7[%c1_22, %c1_23, %c0_24] : memref<18x24x128xf32, #tpu.memory_space<vmem>>, vector<16x16x128xf32>
    %11 = tpu.concatenate %7, %8, %9, %10 in 2 : vector<16x16x128xf32>, vector<16x16x128xf32>, vector<16x16x128xf32>, vector<16x16x128xf32> -> vector<16x16x512xf32>
    %12 = vector.shape_cast %11 : vector<16x16x512xf32> to vector<256x512xf32>
    %c0_25 = arith.constant 0 : index
    %c0_26 = arith.constant 0 : index
    %c0_27 = arith.constant 0 : index
    %13 = vector.load %arg4[%c0_25, %c0_26, %c0_27] : memref<4x512x128xf32, #tpu.memory_space<vmem>>, vector<1x512x128xf32>
    %14 = vector.shape_cast %13 : vector<1x512x128xf32> to vector<512x128xf32>
    %cst = arith.constant dense<0.000000e+00> : vector<256x128xf32>
    %15 = tpu.matmul %12, %14, %cst {dimension_numbers = #tpu.dot_dimension_numbers<[1], [0], [0], [1], [0, 0, 1, 1], [], []>} : vector<256x512xf32>, vector<512x128xf32>, vector<256x128xf32> -> vector<256x128xf32>
    %16 = vector.broadcast %6 : vector<1x128xf32> to vector<256x128xf32>
    %17 = arith.addf %15, %16 : vector<256x128xf32>
    %18 = vector.shape_cast %17 : vector<256x128xf32> to vector<16x16x128xf32>
    %c0_28 = arith.constant 0 : index
    %c0_29 = arith.constant 0 : index
    %c0_30 = arith.constant 0 : index
    %c0_31 = arith.constant 0 : index
    %19 = vector.load %arg6[%c0_28, %c0_29, %c0_30, %c0_31] : memref<1x16x16x512xf32, #tpu.memory_space<vmem>>, vector<1x16x16x128xf32>
    %20 = vector.shape_cast %19 : vector<1x16x16x128xf32> to vector<16x16x128xf32>
    %21 = vector.shape_cast %18 : vector<16x16x128xf32> to vector<1x16x16x128xf32>
    tpu.vector_store %arg6[%c0_28, %c0_29, %c0_30, %c0_31], %21 {strides = array<i32>} : memref<1x16x16x512xf32, #tpu.memory_space<vmem>>, vector<1x16x16x128xf32>,
    %c0_32 = arith.constant 0 : index
    %c1_33 = arith.constant 1 : index
    %c0_34 = arith.constant 0 : index
    %22 = vector.load %arg7[%c0_32, %c1_33, %c0_34] : memref<18x24x128xf32, #tpu.memory_space<vmem>>, vector<16x16x128xf32>
    %c0_35 = arith.constant 0 : index
    %c2 = arith.constant 2 : index
    %c0_36 = arith.constant 0 : index
    %23 = vector.load %arg7[%c0_35, %c2, %c0_36] : memref<18x24x128xf32, #tpu.memory_space<vmem>>, vector<16x16x128xf32>
    %c1_37 = arith.constant 1 : index
    %c1_38 = arith.constant 1 : index
    %c0_39 = arith.constant 0 : index
    %24 = vector.load %arg7[%c1_37, %c1_38, %c0_39] : memref<18x24x128xf32, #tpu.memory_space<vmem>>, vector<16x16x128xf32>
    %c1_40 = arith.constant 1 : index
    %c2_41 = arith.constant 2 : index
    %c0_42 = arith.constant 0 : index
    %25 = vector.load %arg7[%c1_40, %c2_41, %c0_42] : memref<18x24x128xf32, #tpu.memory_space<vmem>>, vector<16x16x128xf32>
    %26 = tpu.concatenate %22, %23, %24, %25 in 2 : vector<16x16x128xf32>, vector<16x16x128xf32>, vector<16x16x128xf32>, vector<16x16x128xf32> -> vector<16x16x512xf32>
    %27 = vector.shape_cast %26 : vector<16x16x512xf32> to vector<256x512xf32>
    %c1_43 = arith.constant 1 : index
    %c0_44 = arith.constant 0 : index
    %c0_45 = arith.constant 0 : index
    %28 = vector.load %arg4[%c1_43, %c0_44, %c0_45] : memref<4x512x128xf32, #tpu.memory_space<vmem>>, vector<1x512x128xf32>
    %29 = vector.shape_cast %28 : vector<1x512x128xf32> to vector<512x128xf32>
    %cst_46 = arith.constant dense<0.000000e+00> : vector<256x128xf32>
    %30 = tpu.matmul %27, %29, %cst_46 {dimension_numbers = #tpu.dot_dimension_numbers<[1], [0], [0], [1], [0, 0, 1, 1], [], []>} : vector<256x512xf32>, vector<512x128xf32>, vector<256x128xf32> -> vector<256x128xf32>
    %31 = vector.broadcast %6 : vector<1x128xf32> to vector<256x128xf32>
    %32 = arith.addf %30, %31 : vector<256x128xf32>
    %33 = vector.shape_cast %32 : vector<256x128xf32> to vector<16x16x128xf32>
    %c0_47 = arith.constant 0 : index
    %c0_48 = arith.constant 0 : index
    %c0_49 = arith.constant 0 : index
    %c128 = arith.constant 128 : index
    %34 = vector.load %arg6[%c0_47, %c0_48, %c0_49, %c128] : memref<1x16x16x512xf32, #tpu.memory_space<vmem>>, vector<1x16x16x128xf32>
    %35 = vector.shape_cast %34 : vector<1x16x16x128xf32> to vector<16x16x128xf32>
    %36 = vector.shape_cast %33 : vector<16x16x128xf32> to vector<1x16x16x128xf32>
    tpu.vector_store %arg6[%c0_47, %c0_48, %c0_49, %c128], %36 {strides = array<i32>} : memref<1x16x16x512xf32, #tpu.memory_space<vmem>>, vector<1x16x16x128xf32>,
    %c1_50 = arith.constant 1 : index
    %c0_51 = arith.constant 0 : index
    %c0_52 = arith.constant 0 : index
    %37 = vector.load %arg7[%c1_50, %c0_51, %c0_52] : memref<18x24x128xf32, #tpu.memory_space<vmem>>, vector<16x16x128xf32>
    %c1_53 = arith.constant 1 : index
    %c1_54 = arith.constant 1 : index
    %c0_55 = arith.constant 0 : index
    %38 = vector.load %arg7[%c1_53, %c1_54, %c0_55] : memref<18x24x128xf32, #tpu.memory_space<vmem>>, vector<16x16x128xf32>
    %c2_56 = arith.constant 2 : index
    %c0_57 = arith.constant 0 : index
    %c0_58 = arith.constant 0 : index
    %39 = vector.load %arg7[%c2_56, %c0_57, %c0_58] : memref<18x24x128xf32, #tpu.memory_space<vmem>>, vector<16x16x128xf32>
    %c2_59 = arith.constant 2 : index
    %c1_60 = arith.constant 1 : index
    %c0_61 = arith.constant 0 : index
    %40 = vector.load %arg7[%c2_59, %c1_60, %c0_61] : memref<18x24x128xf32, #tpu.memory_space<vmem>>, vector<16x16x128xf32>
    %41 = tpu.concatenate %37, %38, %39, %40 in 2 : vector<16x16x128xf32>, vector<16x16x128xf32>, vector<16x16x128xf32>, vector<16x16x128xf32> -> vector<16x16x512xf32>
    %42 = vector.shape_cast %41 : vector<16x16x512xf32> to vector<256x512xf32>
    %c2_62 = arith.constant 2 : index
    %c0_63 = arith.constant 0 : index
    %c0_64 = arith.constant 0 : index
    %43 = vector.load %arg4[%c2_62, %c0_63, %c0_64] : memref<4x512x128xf32, #tpu.memory_space<vmem>>, vector<1x512x128xf32>
    %44 = vector.shape_cast %43 : vector<1x512x128xf32> to vector<512x128xf32>
    %cst_65 = arith.constant dense<0.000000e+00> : vector<256x128xf32>
    %45 = tpu.matmul %42, %44, %cst_65 {dimension_numbers = #tpu.dot_dimension_numbers<[1], [0], [0], [1], [0, 0, 1, 1], [], []>} : vector<256x512xf32>, vector<512x128xf32>, vector<256x128xf32> -> vector<256x128xf32>
    %46 = vector.broadcast %6 : vector<1x128xf32> to vector<256x128xf32>
    %47 = arith.addf %45, %46 : vector<256x128xf32>
    %48 = vector.shape_cast %47 : vector<256x128xf32> to vector<16x16x128xf32>
    %c0_66 = arith.constant 0 : index
    %c0_67 = arith.constant 0 : index
    %c0_68 = arith.constant 0 : index
    %c256 = arith.constant 256 : index
    %49 = vector.load %arg6[%c0_66, %c0_67, %c0_68, %c256] : memref<1x16x16x512xf32, #tpu.memory_space<vmem>>, vector<1x16x16x128xf32>
    %50 = vector.shape_cast %49 : vector<1x16x16x128xf32> to vector<16x16x128xf32>
    %51 = vector.shape_cast %48 : vector<16x16x128xf32> to vector<1x16x16x128xf32>
    tpu.vector_store %arg6[%c0_66, %c0_67, %c0_68, %c256], %51 {strides = array<i32>} : memref<1x16x16x512xf32, #tpu.memory_space<vmem>>, vector<1x16x16x128xf32>,
    %c1_69 = arith.constant 1 : index
    %c1_70 = arith.constant 1 : index
    %c0_71 = arith.constant 0 : index
    %52 = vector.load %arg7[%c1_69, %c1_70, %c0_71] : memref<18x24x128xf32, #tpu.memory_space<vmem>>, vector<16x16x128xf32>
    %c1_72 = arith.constant 1 : index
    %c2_73 = arith.constant 2 : index
    %c0_74 = arith.constant 0 : index
    %53 = vector.load %arg7[%c1_72, %c2_73, %c0_74] : memref<18x24x128xf32, #tpu.memory_space<vmem>>, vector<16x16x128xf32>
    %c2_75 = arith.constant 2 : index
    %c1_76 = arith.constant 1 : index
    %c0_77 = arith.constant 0 : index
    %54 = vector.load %arg7[%c2_75, %c1_76, %c0_77] : memref<18x24x128xf32, #tpu.memory_space<vmem>>, vector<16x16x128xf32>
    %c2_78 = arith.constant 2 : index
    %c2_79 = arith.constant 2 : index
    %c0_80 = arith.constant 0 : index
    %55 = vector.load %arg7[%c2_78, %c2_79, %c0_80] : memref<18x24x128xf32, #tpu.memory_space<vmem>>, vector<16x16x128xf32>
    %56 = tpu.concatenate %52, %53, %54, %55 in 2 : vector<16x16x128xf32>, vector<16x16x128xf32>, vector<16x16x128xf32>, vector<16x16x128xf32> -> vector<16x16x512xf32>
    %57 = vector.shape_cast %56 : vector<16x16x512xf32> to vector<256x512xf32>
    %c3 = arith.constant 3 : index
    %c0_81 = arith.constant 0 : index
    %c0_82 = arith.constant 0 : index
    %58 = vector.load %arg4[%c3, %c0_81, %c0_82] : memref<4x512x128xf32, #tpu.memory_space<vmem>>, vector<1x512x128xf32>
    %59 = vector.shape_cast %58 : vector<1x512x128xf32> to vector<512x128xf32>
    %cst_83 = arith.constant dense<0.000000e+00> : vector<256x128xf32>
    %60 = tpu.matmul %57, %59, %cst_83 {dimension_numbers = #tpu.dot_dimension_numbers<[1], [0], [0], [1], [0, 0, 1, 1], [], []>} : vector<256x512xf32>, vector<512x128xf32>, vector<256x128xf32> -> vector<256x128xf32>
    %61 = vector.broadcast %6 : vector<1x128xf32> to vector<256x128xf32>
    %62 = arith.addf %60, %61 : vector<256x128xf32>
    %63 = vector.shape_cast %62 : vector<256x128xf32> to vector<16x16x128xf32>
    %c0_84 = arith.constant 0 : index
    %c0_85 = arith.constant 0 : index
    %c0_86 = arith.constant 0 : index
    %c384 = arith.constant 384 : index
    %64 = vector.load %arg6[%c0_84, %c0_85, %c0_86, %c384] : memref<1x16x16x512xf32, #tpu.memory_space<vmem>>, vector<1x16x16x128xf32>
    %65 = vector.shape_cast %64 : vector<1x16x16x128xf32> to vector<16x16x128xf32>
    %66 = vector.shape_cast %63 : vector<16x16x128xf32> to vector<1x16x16x128xf32>
    tpu.vector_store %arg6[%c0_84, %c0_85, %c0_86, %c384], %66 {strides = array<i32>} : memref<1x16x16x512xf32, #tpu.memory_space<vmem>>, vector<1x16x16x128xf32>,
    return
  }
  func.func @transform_0(%arg0: i32, %arg1: i32) -> (i32, i32, i32, i32) {
    %c0_i32 = arith.constant 0 : i32
    %c0_i32_0 = arith.constant 0 : i32
    %c0_i32_1 = arith.constant 0 : i32
    return %arg0, %arg1, %c0_i32, %c0_i32_0 : i32, i32, i32, i32
  }
  func.func @transform_1(%arg0: i32, %arg1: i32) -> (i32, i32, i32, i32) {
    %c1_i32 = arith.constant 1 : i32
    %0 = arith.addi %arg1, %c1_i32 : i32
    %c8_i32 = arith.constant 8 : i32
    %1 = arith.muli %0, %c8_i32 : i32
    %c0_i32 = arith.constant 0 : i32
    %c0_i32_0 = arith.constant 0 : i32
    %c0_i32_1 = arith.constant 0 : i32
    return %arg0, %1, %c0_i32, %c0_i32_0 : i32, i32, i32, i32
  }
  func.func @transform_2(%arg0: i32, %arg1: i32) -> (i32, i32, i32) {
    %c0_i32 = arith.constant 0 : i32
    %c0_i32_0 = arith.constant 0 : i32
    %c0_i32_1 = arith.constant 0 : i32
    %c0_i32_2 = arith.constant 0 : i32
    return %c0_i32, %c0_i32_0, %c0_i32_1 : i32, i32, i32
  }
  func.func @transform_3(%arg0: i32, %arg1: i32) -> (i32, i32) {
    %c0_i32 = arith.constant 0 : i32
    %c0_i32_0 = arith.constant 0 : i32
    %c0_i32_1 = arith.constant 0 : i32
    return %c0_i32, %c0_i32_0 : i32, i32
  }
  func.func @transform_4(%arg0: i32, %arg1: i32) -> (i32, i32, i32, i32) {
    %c0_i32 = arith.constant 0 : i32
    %c0_i32_0 = arith.constant 0 : i32
    %c0_i32_1 = arith.constant 0 : i32
    return %arg0, %arg1, %c0_i32, %c0_i32_0 : i32, i32, i32, i32
  }
}

</mosaic_0001>

<llo_original>
// kernel: tpu_custom_call.1
$region0: #{tpu_custom_call.1}
  #allocation0 [shape = 'u32[]', space=smem, size = 0x4, offset = 0x4, fixed_abs, tag = 'smem constant byte address 0x4 - core index']
  #allocation1 [shape = 'u32[72,128]{1,0:T(1,128)}', space=vmem, size = 0x9000, scoped, tag = 'internal scratch']
  #allocation2 [shape = 'f32[18,24,128]{2,1,0:T(8,128)}', space=vmem, size = 0x36000, scoped, tag = 'scratch operand']
  %s0 = inlined_call_operand.hbm [shape: f32[2,18,24,128], index: 0, kind: input, shape index: {}]
  %s1 = inlined_call_operand.hbm [shape: f32[2,18,24,128], index: 1, kind: input, shape index: {}]
  %s2 = inlined_call_operand.hbm [shape: f32[4,512,128], index: 2, kind: input, shape index: {}]
  %s3 = inlined_call_operand.vmem [shape: f32[1,128], index: 3, kind: input, shape index: {}]
  %s4 = inlined_call_operand.hbm [shape: f32[2,16,16,512], index: 4, kind: output, shape index: {}]
  %s5 = sld [smem:[#allocation0]]
  $region61: #{tpu_custom_call.1} parent=0
    _
  %s7 = ssub.s32 1, %s5
  %s8 = scalar_select 0, %s7, %s5
  $region1: #{tpu_custom_call.1} parent=0
    #allocation3 [shape = 'u8[393216]{0}', space=vmem, size = 0x60000, scoped, tag = 'input window, operand 0']
    #allocation4 [shape = 's32[2]{0}', space=sflag, size = 0x8, scoped, tag = 'scoped memory for tpu_custom_call.1']
    #allocation5 [shape = 's32[2]{0}', space=sflag, size = 0x8, scoped, tag = 'scoped memory for tpu_custom_call.1']
    #allocation6 [shape = 'u8[49152]{0}', space=vmem, size = 0xc000, scoped, tag = 'input window, operand 1']
    #allocation7 [shape = 's32[2]{0}', space=sflag, size = 0x8, scoped, tag = 'scoped memory for tpu_custom_call.1']
    #allocation8 [shape = 'u8[1048576]{0}', space=vmem, size = 0x100000, scoped, tag = 'input window, operand 2, single buffered']
    #allocation9 [shape = 'u8[1048576]{0}', space=vmem, size = 0x100000, scoped, tag = 'output window, operand 0']
    %9 = vsyncpa [#allocation4], 0
    %s10 = scalar_lea.sflag [#allocation4], 1
    %11 = vsyncpa %s10, 0
    %12 = vsyncpa [#allocation7], 0
    %s13 = scalar_lea.sflag [#allocation7], 1
    %14 = vsyncpa %s13, 0
    %15 = vsyncpa [#allocation5], 0
    %s16 = scalar_lea.sflag [#allocation5], 1
    %17 = vsyncpa %s16, 0
    loop: start=0, step=1, limit=4
    $region2: #{tpu_custom_call.1} parent=1 // loop_pre_header
      _
    $region3: #{tpu_custom_call.1} parent=1 // loop_header
      %s19 = sphi 0, %s23
      %p20 = scmp.ge.s32.totalorder %s19, 4
      %s26 = sphi 0, %s38
      %s27 = sphi 0, %s34
      %s28 = sphi 0, %s26
      %s29 = sphi 0, %s27
      %s30 = sphi 0, %s28
      %s31 = sphi 0, %s29
      %s43 = sphi 0, %s45
      %s46 = sphi 0, %s43
      %s47 = sphi 0, %s46
      %s63 = sphi 0, %s47
      %s75 = sphi 0, %s77
      %s78 = sphi 0, %s75
      %s79 = sphi 0, %s78
      %s95 = sphi 0, %s79
      %s99 = sphi 0, %s99
      %s101 = sphi 0, %s99
      %s102 = sphi 0, %s101
      %s116 = sphi 0, %s102
      %s120 = sphi 0, %s120
      %s122 = sphi 0, %s120
      %s123 = sphi 0, %s122
      %s137 = sphi 0, %s123
      %s145 = sphi 0, %s147
      %s148 = sphi 0, %s145
      %s149 = sphi 0, %s148
      %s165 = sphi 0, %s149
    $region4: #{tpu_custom_call.1} parent=1 // loop_header_branch
      %22 = sbr.rel (%p20) target = $region8
    $region5: #{tpu_custom_call.1} parent=1 // loop_body
      %s24 = ssub.s32 %s19, 1
      %s25 = ssub.s32 %s19, 2
      %s32 = sadd.s32 1, %s27
      %p33 = scmp.ge.s32.totalorder %s32, 1
      %s34 = scalar_select %p33, 0, %s32
      %s35 = sadd.s32 1, %s26
      %s36 = scalar_select %p33, %s35, %s26
      %p37 = scmp.ge.s32.totalorder %s36, 2
      %s38 = scalar_select %p37, 0, %s36
      %s39 = ssub.s32 %s26, %s38
      %s40 = ssub.s32 %s27, %s34
      %s41 = sor.u32 %s39, %s40
      %p42 = scmp.eq.s32.totalorder %s41, 0
      %s44 = sadd.s32 %s43, 1
      %s45 = scalar_select %p42, %s43, %s44
      %p48 = pneg %p42
      %p49 = scmp.eq.s32.totalorder %s19, 1
      %p50 = por %p48, %p49
      %p51 = scmp.ne.s32.totalorder %s43, %s46
      %p52 = scmp.eq.s32.totalorder %s19, 0
      %p53 = por %p51, %p52
      %p54 = scmp.ne.s32.totalorder %s43, %s46
      %p55 = scmp.eq.s32.totalorder %s24, 1
      %p56 = por %p54, %p55
      %p57 = scmp.ne.s32.totalorder %s46, %s47
      %p58 = scmp.eq.s32.totalorder %s24, 0
      %p59 = por %p57, %p58
      %p60 = scmp.ne.s32.totalorder %s46, %s47
      %p61 = scmp.eq.s32.totalorder %s25, 1
      %p62 = por %p60, %p61
      %p64 = scmp.ne.s32.totalorder %s47, %s63
      %p65 = scmp.eq.s32.totalorder %s25, 0
      %p66 = por %p64, %p65
      %s67 = sadd.s32 %s27, 1
      %s68 = smul.u32 %s67, 8
      %s69 = sadd.s32 %s34, 1
      %s70 = smul.u32 %s69, 8
      %s71 = ssub.s32 %s26, %s38
      %s72 = ssub.s32 %s68, %s70
      %s73 = sor.u32 %s71, %s72
      %p74 = scmp.eq.s32.totalorder %s73, 0
      %s76 = sadd.s32 %s75, 1
      %s77 = scalar_select %p74, %s75, %s76
      %p80 = pneg %p74
      %p81 = scmp.eq.s32.totalorder %s19, 1
      %p82 = por %p80, %p81
      %p83 = scmp.ne.s32.totalorder %s75, %s78
      %p84 = scmp.eq.s32.totalorder %s19, 0
      %p85 = por %p83, %p84
      %p86 = scmp.ne.s32.totalorder %s75, %s78
      %p87 = scmp.eq.s32.totalorder %s24, 1
      %p88 = por %p86, %p87
      %p89 = scmp.ne.s32.totalorder %s78, %s79
      %p90 = scmp.eq.s32.totalorder %s24, 0
      %p91 = por %p89, %p90
      %p92 = scmp.ne.s32.totalorder %s78, %s79
      %p93 = scmp.eq.s32.totalorder %s25, 1
      %p94 = por %p92, %p93
      %p96 = scmp.ne.s32.totalorder %s79, %s95
      %p97 = scmp.eq.s32.totalorder %s25, 0
      %p98 = por %p96, %p97
      %s100 = sadd.s32 %s99, 1
      %p103 = scmp.eq.s32.totalorder %s19, 1
      %p104 = scmp.ne.s32.totalorder %s99, %s101
      %p105 = scmp.eq.s32.totalorder %s19, 0
      %p106 = por %p104, %p105
      %p107 = scmp.ne.s32.totalorder %s99, %s101
      %p108 = scmp.eq.s32.totalorder %s24, 1
      %p109 = por %p107, %p108
      %p110 = scmp.ne.s32.totalorder %s101, %s102
      %p111 = scmp.eq.s32.totalorder %s24, 0
      %p112 = por %p110, %p111
      %p113 = scmp.ne.s32.totalorder %s101, %s102
      %p114 = scmp.eq.s32.totalorder %s25, 1
      %p115 = por %p113, %p114
      %p117 = scmp.ne.s32.totalorder %s102, %s116
      %p118 = scmp.eq.s32.totalorder %s25, 0
      %p119 = por %p117, %p118
      %s121 = sadd.s32 %s120, 1
      %p124 = scmp.eq.s32.totalorder %s19, 1
      %p125 = scmp.ne.s32.totalorder %s120, %s122
      %p126 = scmp.eq.s32.totalorder %s19, 0
      %p127 = por %p125, %p126
      %p128 = scmp.ne.s32.totalorder %s120, %s122
      %p129 = scmp.eq.s32.totalorder %s24, 1
      %p130 = por %p128, %p129
      %p131 = scmp.ne.s32.totalorder %s122, %s123
      %p132 = scmp.eq.s32.totalorder %s24, 0
      %p133 = por %p131, %p132
      %p134 = scmp.ne.s32.totalorder %s122, %s123
      %p135 = scmp.eq.s32.totalorder %s25, 1
      %p136 = por %p134, %p135
      %p138 = scmp.ne.s32.totalorder %s123, %s137
      %p139 = scmp.eq.s32.totalorder %s25, 0
      %p140 = por %p138, %p139
      %s141 = ssub.s32 %s26, %s38
      %s142 = ssub.s32 %s27, %s34
      %s143 = sor.u32 %s141, %s142
      %p144 = scmp.eq.s32.totalorder %s143, 0
      %s146 = sadd.s32 %s145, 1
      %s147 = scalar_select %p144, %s145, %s146
      %p150 = pneg %p144
      %p151 = scmp.eq.s32.totalorder %s19, 1
      %p152 = por %p150, %p151
      %p153 = scmp.ne.s32.totalorder %s145, %s148
      %p154 = scmp.eq.s32.totalorder %s19, 0
      %p155 = por %p153, %p154
      %p156 = scmp.ne.s32.totalorder %s145, %s148
      %p157 = scmp.eq.s32.totalorder %s24, 1
      %p158 = por %p156, %p157
      %p159 = scmp.ne.s32.totalorder %s148, %s149
      %p160 = scmp.eq.s32.totalorder %s24, 0
      %p161 = por %p159, %p160
      %p162 = scmp.ne.s32.totalorder %s148, %s149
      %p163 = scmp.eq.s32.totalorder %s25, 1
      %p164 = por %p162, %p163
      %p166 = scmp.ne.s32.totalorder %s149, %s165
      %p167 = scmp.eq.s32.totalorder %s25, 0
      %p168 = por %p166, %p167
      %p169 = scmp.le.s32.totalorder 1, %s19
      %p170 = scmp.lt.s32.totalorder %s19, 3
      %p171 = pnand %p169, %p170
      %p172 = pneg %p171
      // Predicated region
      $region9: #{tpu_custom_call.1} parent=5 // pred_check
        _
      $region10: #{tpu_custom_call.1} parent=5 // pred_check_branch
        %174 = sbr.rel (%p171) target = $region12
      $region11: #{tpu_custom_call.1} parent=5 // pred_region
        %s175 = ssub.s32 %s19, 1
        // Predicated region
        $region13: #{tpu_custom_call.1} parent=11 // pred_check
          %p176 = pneg %p112
        $region14: #{tpu_custom_call.1} parent=11 // pred_check_branch
          %178 = sbr.rel (%p176) target = $region16
        $region15: #{tpu_custom_call.1} parent=11 // pred_region
          %180 = vsyncadd [#allocation7], 0
          %s181 = sshll.u32 %s2, 4
          %s182 = int_to_ptr.hbm [resolvable:$true] %s181
          %s183 = sshll.u32 [#allocation8], 4
          %s184 = int_to_ptr.vmem [resolvable:$true] %s183
          %189 = dma.hbm_to_vmem [thread:$0]  %s182, 32768, %s184, [#allocation7], 128, 128, 8
        $region16: #{tpu_custom_call.1} parent=11 // pred_fallthru
          _
        // Predicated region
        $region17: #{tpu_custom_call.1} parent=11 // pred_check
          %p190 = pneg %p133
        $region18: #{tpu_custom_call.1} parent=11 // pred_check_branch
          %192 = sbr.rel (%p190) target = $region20
        $region19: #{tpu_custom_call.1} parent=11 // pred_region
          _
        $region20: #{tpu_custom_call.1} parent=11 // pred_fallthru
          _
      $region12: #{tpu_custom_call.1} parent=5 // pred_fallthru
        _
      %p193 = scmp.lt.s32.totalorder %s19, 2
      // Predicated region
      $region21: #{tpu_custom_call.1} parent=5 // pred_check
        %p194 = pneg %p193
      $region22: #{tpu_custom_call.1} parent=5 // pred_check_branch
        %196 = sbr.rel (%p194) target = $region24
      $region23: #{tpu_custom_call.1} parent=5 // pred_region
        // Predicated region
        $region25: #{tpu_custom_call.1} parent=23 // pred_check
          %p197 = pneg %p53
        $region26: #{tpu_custom_call.1} parent=23 // pred_check_branch
          %199 = sbr.rel (%p197) target = $region28
        $region27: #{tpu_custom_call.1} parent=23 // pred_region
          %s200 = sand.u32 %s43, 1
          %s201 = scalar_lea.sflag [#allocation4], %s200
          %s202 = sand.u32 %s43, 1
          %s203 = smul.addr %s202, 384
          %s204 = scalar_lea.vmem [#allocation3], %s203
          %s205 = smul.u32 16, %s27
          %s206 = ssub.s32 18, %s205
          %p207 = scmp.lt.s32.totalorder %s206, 16
          %s208 = scalar_select %p207, %s206, 16
          %s209 = smul.u32 8, %s208
          %s210 = smul.u32 %s209, 3
          %s211 = ssub.s32 384, %s210
          %s212 = sshll.u32 %s211, 4
          %213 = vsyncadd %s201, %s212
          %p214 = scmp.ne.s32.totalorder 0, %s210
          %s215 = smul.addr %s205, 3
          %s216 = smul.addr %s26, 54
          %s217 = sadd.s32 %s215, %s216
          %s218 = smul.addr %s217, 8
          %s219 = scalar_lea.hbm %s0, %s218
          %s220 = smul.u32 %s208, 3
          %s221 = smul.u32 8, %s220
          %s222 = sshll.u32 %s219, 4
          %s223 = int_to_ptr.hbm [resolvable:$true] %s222
          %s224 = sshll.u32 %s204, 4
          %s225 = int_to_ptr.vmem [resolvable:$true] %s224
          %s226 = sshll.u32 %s221, 4
          %230 = dma.hbm_to_vmem [thread:$0]  (%p214), %s223, %s226, %s225, %s201, 128, 128, 8
        $region28: #{tpu_custom_call.1} parent=23 // pred_fallthru
          _
        // Predicated region
        $region29: #{tpu_custom_call.1} parent=23 // pred_check
          %p231 = pneg %p85
        $region30: #{tpu_custom_call.1} parent=23 // pred_check_branch
          %233 = sbr.rel (%p231) target = $region32
        $region31: #{tpu_custom_call.1} parent=23 // pred_region
          %s234 = sand.u32 %s19, 1
          %s235 = scalar_lea.sflag [#allocation7], %s234
          %s236 = sand.u32 %s75, 1
          %s237 = smul.addr %s236, 48
          %s238 = scalar_lea.vmem [#allocation6], %s237
          %s239 = sadd.s32 %s27, 1
          %s240 = smul.u32 %s239, 8
          %s241 = smul.u32 2, %s240
          %243 = vsyncadd %s235, 0
          %s244 = smul.addr %s241, 3
          %s245 = smul.addr %s26, 54
          %s246 = sadd.s32 %s244, %s245
          %s247 = smul.addr %s246, 8
          %s248 = scalar_lea.hbm %s1, %s247
          %s249 = sshll.u32 %s248, 4
          %s250 = int_to_ptr.hbm [resolvable:$true] %s249
          %s251 = sshll.u32 %s238, 4
          %s252 = int_to_ptr.vmem [resolvable:$true] %s251
          %257 = dma.hbm_to_vmem [thread:$0]  %s250, 768, %s252, %s235, 128, 128, 8
        $region32: #{tpu_custom_call.1} parent=23 // pred_fallthru
          _
      $region24: #{tpu_custom_call.1} parent=5 // pred_fallthru
        _
      %p258 = scmp.le.s32.totalorder 1, %s19
      %p259 = scmp.lt.s32.totalorder %s19, 3
      %p260 = pnand %p258, %p259
      %p261 = pneg %p260
      // Predicated region
      $region33: #{tpu_custom_call.1} parent=5 // pred_check
        _
      $region34: #{tpu_custom_call.1} parent=5 // pred_check_branch
        %263 = sbr.rel (%p260) target = $region36
      $region35: #{tpu_custom_call.1} parent=5 // pred_region
        %s264 = ssub.s32 %s19, 1
        %s265 = sand.u32 %s46, 1
        %s266 = scalar_lea.sflag [#allocation4], %s265
        %s267 = sand.u32 %s46, 1
        %s268 = smul.addr %s267, 384
        %s269 = scalar_lea.vmem [#allocation3], %s268
        // Predicated region
        $region37: #{tpu_custom_call.1} parent=35 // pred_check
          %p270 = pneg %p59
        $region38: #{tpu_custom_call.1} parent=35 // pred_check_branch
          %272 = sbr.rel (%p270) target = $region40
        $region39: #{tpu_custom_call.1} parent=35 // pred_region
          %274 = dma.done %s266, 6144
        $region40: #{tpu_custom_call.1} parent=35 // pred_fallthru
          _
        %s275 = sand.u32 %s24, 1
        %s276 = scalar_lea.sflag [#allocation7], %s275
        %s277 = sand.u32 %s78, 1
        %s278 = smul.addr %s277, 48
        %s279 = scalar_lea.vmem [#allocation6], %s278
        // Predicated region
        $region41: #{tpu_custom_call.1} parent=35 // pred_check
          %p280 = pneg %p91
        $region42: #{tpu_custom_call.1} parent=35 // pred_check_branch
          %282 = sbr.rel (%p280) target = $region44
        $region43: #{tpu_custom_call.1} parent=35 // pred_region
          %284 = dma.done %s276, 768
        $region44: #{tpu_custom_call.1} parent=35 // pred_fallthru
          _
        // Predicated region
        $region45: #{tpu_custom_call.1} parent=35 // pred_check
          %p285 = pneg %p112
        $region46: #{tpu_custom_call.1} parent=35 // pred_check_branch
          %287 = sbr.rel (%p285) target = $region48
        $region47: #{tpu_custom_call.1} parent=35 // pred_region
          %289 = dma.done [#allocation7], 32768
        $region48: #{tpu_custom_call.1} parent=35 // pred_fallthru
          _
        %s290 = sand.u32 %s46, 1
        %s291 = scalar_lea.sflag [#allocation4], %s290
        %s292 = sand.u32 %s46, 1
        %s293 = smul.addr %s292, 384
        %s294 = scalar_lea.vmem [#allocation3], %s293
        %p295 = pneg %p59
        %p296 = pneg %p56
        %s297 = sand.u32 %s24, 1
        %s298 = scalar_lea.sflag [#allocation7], %s297
        %s299 = sand.u32 %s78, 1
        %s300 = smul.addr %s299, 48
        %s301 = scalar_lea.vmem [#allocation6], %s300
        %p302 = pneg %p91
        %p303 = pneg %p88
        %p304 = pneg %p112
        %p305 = pneg %p109
        %p306 = pneg %p133
        %p307 = pneg %p130
        %p308 = pneg %p161
        %p309 = pneg %p158
        %s310 = sand.u32 %s148, 1
        %s311 = scalar_lea.sflag [#allocation5], %s310
        %s312 = sand.u32 %s148, 1
        %s313 = smul.addr %s312, 1024
        %s314 = scalar_lea.vmem [#allocation9], %s313
        %s315 = smul.u32 16, %s29
        %s316 = ssub.s32 18, %s315
        %p317 = scmp.lt.s32.totalorder %s316, 16
        %s318 = scalar_select %p317, %s316, 16
        %s319 = smul.u32 8, %s318
        %s320 = smul.u32 %s319, 3
        %s321 = sadd.s32 %s29, 1
        %s322 = smul.u32 %s321, 8
        %s323 = smul.u32 2, %s322
        %s324 = smul.u32 16, %s29
        %v325 = vld [vmem:[%s269] sm:$0xff]
        %v326 = vld [vmem:[%s269 + $0x8] sm:$0xff]
        %v327 = vld [vmem:[%s269 + $0x10] sm:$0xff]
        %v328 = vld [vmem:[%s269 + $0x18] sm:$0xff]
        %v329 = vld [vmem:[%s269 + $0x20] sm:$0xff]
        %v330 = vld [vmem:[%s269 + $0x28] sm:$0xff]
        %v331 = vld [vmem:[%s269 + $0x30] sm:$0xff]
        %v332 = vld [vmem:[%s269 + $0x38] sm:$0xff]
        %v333 = vld [vmem:[%s269 + $0x40] sm:$0xff]
        %v334 = vld [vmem:[%s269 + $0x48] sm:$0xff]
        %v335 = vld [vmem:[%s269 + $0x50] sm:$0xff]
        %v336 = vld [vmem:[%s269 + $0x58] sm:$0xff]
        %v337 = vld [vmem:[%s269 + $0x60] sm:$0xff]
        %v338 = vld [vmem:[%s269 + $0x68] sm:$0xff]
        %v339 = vld [vmem:[%s269 + $0x70] sm:$0xff]
        %v340 = vld [vmem:[%s269 + $0x78] sm:$0xff]
        %v341 = vld [vmem:[%s269 + $0x80] sm:$0xff]
        %v342 = vld [vmem:[%s269 + $0x88] sm:$0xff]
        %v343 = vld [vmem:[%s269 + $0x90] sm:$0xff]
        %v344 = vld [vmem:[%s269 + $0x98] sm:$0xff]
        %v345 = vld [vmem:[%s269 + $0xa0] sm:$0xff]
        %v346 = vld [vmem:[%s269 + $0xa8] sm:$0xff]
        %v347 = vld [vmem:[%s269 + $0xb0] sm:$0xff]
        %v348 = vld [vmem:[%s269 + $0xb8] sm:$0xff]
        %v349 = vld [vmem:[%s269 + $0xc0] sm:$0xff]
        %v350 = vld [vmem:[%s269 + $0xc8] sm:$0xff]
        %v351 = vld [vmem:[%s269 + $0xd0] sm:$0xff]
        %v352 = vld [vmem:[%s269 + $0xd8] sm:$0xff]
        %v353 = vld [vmem:[%s269 + $0xe0] sm:$0xff]
        %v354 = vld [vmem:[%s269 + $0xe8] sm:$0xff]
        %v355 = vld [vmem:[%s269 + $0xf0] sm:$0xff]
        %v356 = vld [vmem:[%s269 + $0xf8] sm:$0xff]
        %v357 = vld [vmem:[%s269 + $0x100] sm:$0xff]
        %v358 = vld [vmem:[%s269 + $0x108] sm:$0xff]
        %v359 = vld [vmem:[%s269 + $0x110] sm:$0xff]
        %v360 = vld [vmem:[%s269 + $0x118] sm:$0xff]
        %v361 = vld [vmem:[%s269 + $0x120] sm:$0xff]
        %v362 = vld [vmem:[%s269 + $0x128] sm:$0xff]
        %v363 = vld [vmem:[%s269 + $0x130] sm:$0xff]
        %v364 = vld [vmem:[%s269 + $0x138] sm:$0xff]
        %v365 = vld [vmem:[%s269 + $0x140] sm:$0xff]
        %v366 = vld [vmem:[%s269 + $0x148] sm:$0xff]
        %v367 = vld [vmem:[%s269 + $0x150] sm:$0xff]
        %v368 = vld [vmem:[%s269 + $0x158] sm:$0xff]
        %v369 = vld [vmem:[%s269 + $0x160] sm:$0xff]
        %v370 = vld [vmem:[%s269 + $0x168] sm:$0xff]
        %v371 = vld [vmem:[%s269 + $0x170] sm:$0xff]
        %v372 = vld [vmem:[%s269 + $0x178] sm:$0xff]
        %373 = vst [vmem:[#allocation2] sm:$0xff] %v325
        %374 = vst [vmem:[#allocation2 + $0x8] sm:$0xff] %v326
        %375 = vst [vmem:[#allocation2 + $0x10] sm:$0xff] %v327
        %376 = vst [vmem:[#allocation2 + $0x18] sm:$0xff] %v328
        %377 = vst [vmem:[#allocation2 + $0x20] sm:$0xff] %v329
        %378 = vst [vmem:[#allocation2 + $0x28] sm:$0xff] %v330
        %379 = vst [vmem:[#allocation2 + $0x30] sm:$0xff] %v331
        %380 = vst [vmem:[#allocation2 + $0x38] sm:$0xff] %v332
        %381 = vst [vmem:[#allocation2 + $0x40] sm:$0xff] %v333
        %382 = vst [vmem:[#allocation2 + $0x48] sm:$0xff] %v334
        %383 = vst [vmem:[#allocation2 + $0x50] sm:$0xff] %v335
        %384 = vst [vmem:[#allocation2 + $0x58] sm:$0xff] %v336
        %385 = vst [vmem:[#allocation2 + $0x60] sm:$0xff] %v337
        %386 = vst [vmem:[#allocation2 + $0x68] sm:$0xff] %v338
        %387 = vst [vmem:[#allocation2 + $0x70] sm:$0xff] %v339
        %388 = vst [vmem:[#allocation2 + $0x78] sm:$0xff] %v340
        %389 = vst [vmem:[#allocation2 + $0x80] sm:$0xff] %v341
        %390 = vst [vmem:[#allocation2 + $0x88] sm:$0xff] %v342
        %391 = vst [vmem:[#allocation2 + $0x90] sm:$0xff] %v343
        %392 = vst [vmem:[#allocation2 + $0x98] sm:$0xff] %v344
        %393 = vst [vmem:[#allocation2 + $0xa0] sm:$0xff] %v345
        %394 = vst [vmem:[#allocation2 + $0xa8] sm:$0xff] %v346
        %395 = vst [vmem:[#allocation2 + $0xb0] sm:$0xff] %v347
        %396 = vst [vmem:[#allocation2 + $0xb8] sm:$0xff] %v348
        %397 = vst [vmem:[#allocation2 + $0xc0] sm:$0xff] %v349
        %398 = vst [vmem:[#allocation2 + $0xc8] sm:$0xff] %v350
        %399 = vst [vmem:[#allocation2 + $0xd0] sm:$0xff] %v351
        %400 = vst [vmem:[#allocation2 + $0xd8] sm:$0xff] %v352
        %401 = vst [vmem:[#allocation2 + $0xe0] sm:$0xff] %v353
        %402 = vst [vmem:[#allocation2 + $0xe8] sm:$0xff] %v354
        %403 = vst [vmem:[#allocation2 + $0xf0] sm:$0xff] %v355
        %404 = vst [vmem:[#allocation2 + $0xf8] sm:$0xff] %v356
        %405 = vst [vmem:[#allocation2 + $0x100] sm:$0xff] %v357
        %406 = vst [vmem:[#allocation2 + $0x108] sm:$0xff] %v358
        %407 = vst [vmem:[#allocation2 + $0x110] sm:$0xff] %v359
        %408 = vst [vmem:[#allocation2 + $0x118] sm:$0xff] %v360
        %409 = vst [vmem:[#allocation2 + $0x120] sm:$0xff] %v361
        %410 = vst [vmem:[#allocation2 + $0x128] sm:$0xff] %v362
        %411 = vst [vmem:[#allocation2 + $0x130] sm:$0xff] %v363
        %412 = vst [vmem:[#allocation2 + $0x138] sm:$0xff] %v364
        %413 = vst [vmem:[#allocation2 + $0x140] sm:$0xff] %v365
        %414 = vst [vmem:[#allocation2 + $0x148] sm:$0xff] %v366
        %415 = vst [vmem:[#allocation2 + $0x150] sm:$0xff] %v367
        %416 = vst [vmem:[#allocation2 + $0x158] sm:$0xff] %v368
        %417 = vst [vmem:[#allocation2 + $0x160] sm:$0xff] %v369
        %418 = vst [vmem:[#allocation2 + $0x168] sm:$0xff] %v370
        %419 = vst [vmem:[#allocation2 + $0x170] sm:$0xff] %v371
        %420 = vst [vmem:[#allocation2 + $0x178] sm:$0xff] %v372
        %v421 = vld [vmem:[%s279] sm:$0xff]
        %v422 = vld [vmem:[%s279 + $0x8] sm:$0xff]
        %v423 = vld [vmem:[%s279 + $0x10] sm:$0xff]
        %v424 = vld [vmem:[%s279 + $0x18] sm:$0xff]
        %v425 = vld [vmem:[%s279 + $0x20] sm:$0xff]
        %v426 = vld [vmem:[%s279 + $0x28] sm:$0xff]
        %s427 = scalar_lea.vmem [#allocation2], 384
        %428 = vst [vmem:[%s427] sm:$0xff] %v421
        %429 = vst [vmem:[%s427 + $0x8] sm:$0xff] %v422
        %430 = vst [vmem:[%s427 + $0x10] sm:$0xff] %v423
        %431 = vst [vmem:[%s427 + $0x18] sm:$0xff] %v424
        %432 = vst [vmem:[%s427 + $0x20] sm:$0xff] %v425
        %433 = vst [vmem:[%s427 + $0x28] sm:$0xff] %v426
        %v434 = vld [vmem:[%s3] sm:$0x1]
        %v435 = vld [vmem:[#allocation2] sm:$0xff]
        %v436 = vld [vmem:[#allocation2 + $0x8] sm:$0xff]
        %v437 = vld [vmem:[#allocation2 + $0x18] sm:$0xff]
        %v438 = vld [vmem:[#allocation2 + $0x20] sm:$0xff]
        %v439 = vld [vmem:[#allocation2 + $0x30] sm:$0xff]
        %v440 = vld [vmem:[#allocation2 + $0x38] sm:$0xff]
        %v441 = vld [vmem:[#allocation2 + $0x48] sm:$0xff]
        %v442 = vld [vmem:[#allocation2 + $0x50] sm:$0xff]
        %v443 = vld [vmem:[#allocation2 + $0x60] sm:$0xff]
        %v444 = vld [vmem:[#allocation2 + $0x68] sm:$0xff]
        %v445 = vld [vmem:[#allocation2 + $0x78] sm:$0xff]
        %v446 = vld [vmem:[#allocation2 + $0x80] sm:$0xff]
        %v447 = vld [vmem:[#allocation2 + $0x90] sm:$0xff]
        %v448 = vld [vmem:[#allocation2 + $0x98] sm:$0xff]
        %v449 = vld [vmem:[#allocation2 + $0xa8] sm:$0xff]
        %v450 = vld [vmem:[#allocation2 + $0xb0] sm:$0xff]
        %v451 = vld [vmem:[#allocation2 + $0xc0] sm:$0xff]
        %v452 = vld [vmem:[#allocation2 + $0xc8] sm:$0xff]
        %v453 = vld [vmem:[#allocation2 + $0xd8] sm:$0xff]
        %v454 = vld [vmem:[#allocation2 + $0xe0] sm:$0xff]
        %v455 = vld [vmem:[#allocation2 + $0xf0] sm:$0xff]
        %v456 = vld [vmem:[#allocation2 + $0xf8] sm:$0xff]
        %v457 = vld [vmem:[#allocation2 + $0x108] sm:$0xff]
        %v458 = vld [vmem:[#allocation2 + $0x110] sm:$0xff]
        %v459 = vld [vmem:[#allocation2 + $0x120] sm:$0xff]
        %v460 = vld [vmem:[#allocation2 + $0x128] sm:$0xff]
        %v461 = vld [vmem:[#allocation2 + $0x138] sm:$0xff]
        %v462 = vld [vmem:[#allocation2 + $0x140] sm:$0xff]
        %v463 = vld [vmem:[#allocation2 + $0x150] sm:$0xff]
        %v464 = vld [vmem:[#allocation2 + $0x158] sm:$0xff]
        %v465 = vld [vmem:[#allocation2 + $0x168] sm:$0xff]
        %v466 = vld [vmem:[#allocation2 + $0x170] sm:$0xff]
        %v467 = vld [vmem:[#allocation2 + $0x1] sm:$0xff]
        %v468 = vld [vmem:[#allocation2 + $0x9] sm:$0xff]
        %v469 = vld [vmem:[#allocation2 + $0x19] sm:$0xff]
        %v470 = vld [vmem:[#allocation2 + $0x21] sm:$0xff]
        %v471 = vld [vmem:[#allocation2 + $0x31] sm:$0xff]
        %v472 = vld [vmem:[#allocation2 + $0x39] sm:$0xff]
        %v473 = vld [vmem:[#allocation2 + $0x49] sm:$0xff]
        %v474 = vld [vmem:[#allocation2 + $0x51] sm:$0xff]
        %v475 = vld [vmem:[#allocation2 + $0x61] sm:$0xff]
        %v476 = vld [vmem:[#allocation2 + $0x69] sm:$0xff]
        %v477 = vld [vmem:[#allocation2 + $0x79] sm:$0xff]
        %v478 = vld [vmem:[#allocation2 + $0x81] sm:$0xff]
        %v479 = vld [vmem:[#allocation2 + $0x91] sm:$0xff]
        %v480 = vld [vmem:[#allocation2 + $0x99] sm:$0xff]
        %v481 = vld [vmem:[#allocation2 + $0xa9] sm:$0xff]
        %v482 = vld [vmem:[#allocation2 + $0xb1] sm:$0xff]
        %v483 = vld [vmem:[#allocation2 + $0xc1] sm:$0xff]
        %v484 = vld [vmem:[#allocation2 + $0xc9] sm:$0xff]
        %v485 = vld [vmem:[#allocation2 + $0xd9] sm:$0xff]
        %v486 = vld [vmem:[#allocation2 + $0xe1] sm:$0xff]
        %v487 = vld [vmem:[#allocation2 + $0xf1] sm:$0xff]
        %v488 = vld [vmem:[#allocation2 + $0xf9] sm:$0xff]
        %v489 = vld [vmem:[#allocation2 + $0x109] sm:$0xff]
        %v490 = vld [vmem:[#allocation2 + $0x111] sm:$0xff]
        %v491 = vld [vmem:[#allocation2 + $0x121] sm:$0xff]
        %v492 = vld [vmem:[#allocation2 + $0x129] sm:$0xff]
        %v493 = vld [vmem:[#allocation2 + $0x139] sm:$0xff]
        %v494 = vld [vmem:[#allocation2 + $0x141] sm:$0xff]
        %v495 = vld [vmem:[#allocation2 + $0x151] sm:$0xff]
        %v496 = vld [vmem:[#allocation2 + $0x159] sm:$0xff]
        %v497 = vld [vmem:[#allocation2 + $0x169] sm:$0xff]
        %v498 = vld [vmem:[#allocation2 + $0x171] sm:$0xff]
        %s499 = scalar_lea.vmem [#allocation2], 24
        %v500 = vld [vmem:[%s499] sm:$0xff]
        %v501 = vld [vmem:[%s499 + $0x8] sm:$0xff]
        %v502 = vld [vmem:[%s499 + $0x18] sm:$0xff]
        %v503 = vld [vmem:[%s499 + $0x20] sm:$0xff]
        %v504 = vld [vmem:[%s499 + $0x30] sm:$0xff]
        %v505 = vld [vmem:[%s499 + $0x38] sm:$0xff]
        %v506 = vld [vmem:[%s499 + $0x48] sm:$0xff]
        %v507 = vld [vmem:[%s499 + $0x50] sm:$0xff]
        %v508 = vld [vmem:[%s499 + $0x60] sm:$0xff]
        %v509 = vld [vmem:[%s499 + $0x68] sm:$0xff]
        %v510 = vld [vmem:[%s499 + $0x78] sm:$0xff]
        %v511 = vld [vmem:[%s499 + $0x80] sm:$0xff]
        %v512 = vld [vmem:[%s499 + $0x90] sm:$0xff]
        %v513 = vld [vmem:[%s499 + $0x98] sm:$0xff]
        %v514 = vld [vmem:[%s499 + $0xa8] sm:$0xff]
        %v515 = vld [vmem:[%s499 + $0xb0] sm:$0xff]
        %v516 = vld [vmem:[%s499 + $0xc0] sm:$0xff]
        %v517 = vld [vmem:[%s499 + $0xc8] sm:$0xff]
        %v518 = vld [vmem:[%s499 + $0xd8] sm:$0xff]
        %v519 = vld [vmem:[%s499 + $0xe0] sm:$0xff]
        %v520 = vld [vmem:[%s499 + $0xf0] sm:$0xff]
        %v521 = vld [vmem:[%s499 + $0xf8] sm:$0xff]
        %v522 = vld [vmem:[%s499 + $0x108] sm:$0xff]
        %v523 = vld [vmem:[%s499 + $0x110] sm:$0xff]
        %v524 = vld [vmem:[%s499 + $0x120] sm:$0xff]
        %v525 = vld [vmem:[%s499 + $0x128] sm:$0xff]
        %v526 = vld [vmem:[%s499 + $0x138] sm:$0xff]
        %v527 = vld [vmem:[%s499 + $0x140] sm:$0xff]
        %v528 = vld [vmem:[%s499 + $0x150] sm:$0xff]
        %v529 = vld [vmem:[%s499 + $0x158] sm:$0xff]
        %v530 = vld [vmem:[%s499 + $0x168] sm:$0xff]
        %v531 = vld [vmem:[%s499 + $0x170] sm:$0xff]
        %v532 = vld [vmem:[%s499 + $0x1] sm:$0xff]
        %v533 = vld [vmem:[%s499 + $0x9] sm:$0xff]
        %v534 = vld [vmem:[%s499 + $0x19] sm:$0xff]
        %v535 = vld [vmem:[%s499 + $0x21] sm:$0xff]
        %v536 = vld [vmem:[%s499 + $0x31] sm:$0xff]
        %v537 = vld [vmem:[%s499 + $0x39] sm:$0xff]
        %v538 = vld [vmem:[%s499 + $0x49] sm:$0xff]
        %v539 = vld [vmem:[%s499 + $0x51] sm:$0xff]
        %v540 = vld [vmem:[%s499 + $0x61] sm:$0xff]
        %v541 = vld [vmem:[%s499 + $0x69] sm:$0xff]
        %v542 = vld [vmem:[%s499 + $0x79] sm:$0xff]
        %v543 = vld [vmem:[%s499 + $0x81] sm:$0xff]
        %v544 = vld [vmem:[%s499 + $0x91] sm:$0xff]
        %v545 = vld [vmem:[%s499 + $0x99] sm:$0xff]
        %v546 = vld [vmem:[%s499 + $0xa9] sm:$0xff]
        %v547 = vld [vmem:[%s499 + $0xb1] sm:$0xff]
        %v548 = vld [vmem:[%s499 + $0xc1] sm:$0xff]
        %v549 = vld [vmem:[%s499 + $0xc9] sm:$0xff]
        %v550 = vld [vmem:[%s499 + $0xd9] sm:$0xff]
        %v551 = vld [vmem:[%s499 + $0xe1] sm:$0xff]
        %v552 = vld [vmem:[%s499 + $0xf1] sm:$0xff]
        %v553 = vld [vmem:[%s499 + $0xf9] sm:$0xff]
        %v554 = vld [vmem:[%s499 + $0x109] sm:$0xff]
        %v555 = vld [vmem:[%s499 + $0x111] sm:$0xff]
        %v556 = vld [vmem:[%s499 + $0x121] sm:$0xff]
        %v557 = vld [vmem:[%s499 + $0x129] sm:$0xff]
        %v558 = vld [vmem:[%s499 + $0x139] sm:$0xff]
        %v559 = vld [vmem:[%s499 + $0x141] sm:$0xff]
        %v560 = vld [vmem:[%s499 + $0x151] sm:$0xff]
        %v561 = vld [vmem:[%s499 + $0x159] sm:$0xff]
        %v562 = vld [vmem:[%s499 + $0x169] sm:$0xff]
        %v563 = vld [vmem:[%s499 + $0x171] sm:$0xff]
        %v564 = vld [vmem:[#allocation8] sm:$0xff]
        %v565 = vld [vmem:[#allocation8 + $0x8] sm:$0xff]
        %v566 = vld [vmem:[#allocation8 + $0x10] sm:$0xff]
        %v567 = vld [vmem:[#allocation8 + $0x18] sm:$0xff]
        %v568 = vld [vmem:[#allocation8 + $0x20] sm:$0xff]
        %v569 = vld [vmem:[#allocation8 + $0x28] sm:$0xff]
        %v570 = vld [vmem:[#allocation8 + $0x30] sm:$0xff]
        %v571 = vld [vmem:[#allocation8 + $0x38] sm:$0xff]
        %v572 = vld [vmem:[#allocation8 + $0x40] sm:$0xff]
        %v573 = vld [vmem:[#allocation8 + $0x48] sm:$0xff]
        %v574 = vld [vmem:[#allocation8 + $0x50] sm:$0xff]
        %v575 = vld [vmem:[#allocation8 + $0x58] sm:$0xff]
        %v576 = vld [vmem:[#allocation8 + $0x60] sm:$0xff]
        %v577 = vld [vmem:[#allocation8 + $0x68] sm:$0xff]
        %v578 = vld [vmem:[#allocation8 + $0x70] sm:$0xff]
        %v579 = vld [vmem:[#allocation8 + $0x78] sm:$0xff]
        %v580 = vld [vmem:[#allocation8 + $0x80] sm:$0xff]
        %v581 = vld [vmem:[#allocation8 + $0x88] sm:$0xff]
        %v582 = vld [vmem:[#allocation8 + $0x90] sm:$0xff]
        %v583 = vld [vmem:[#allocation8 + $0x98] sm:$0xff]
        %v584 = vld [vmem:[#allocation8 + $0xa0] sm:$0xff]
        %v585 = vld [vmem:[#allocation8 + $0xa8] sm:$0xff]
        %v586 = vld [vmem:[#allocation8 + $0xb0] sm:$0xff]
        %v587 = vld [vmem:[#allocation8 + $0xb8] sm:$0xff]
        %v588 = vld [vmem:[#allocation8 + $0xc0] sm:$0xff]
        %v589 = vld [vmem:[#allocation8 + $0xc8] sm:$0xff]
        %v590 = vld [vmem:[#allocation8 + $0xd0] sm:$0xff]
        %v591 = vld [vmem:[#allocation8 + $0xd8] sm:$0xff]
        %v592 = vld [vmem:[#allocation8 + $0xe0] sm:$0xff]
        %v593 = vld [vmem:[#allocation8 + $0xe8] sm:$0xff]
        %v594 = vld [vmem:[#allocation8 + $0xf0] sm:$0xff]
        %v595 = vld [vmem:[#allocation8 + $0xf8] sm:$0xff]
        %v596 = vld [vmem:[#allocation8 + $0x100] sm:$0xff]
        %v597 = vld [vmem:[#allocation8 + $0x108] sm:$0xff]
        %v598 = vld [vmem:[#allocation8 + $0x110] sm:$0xff]
        %v599 = vld [vmem:[#allocation8 + $0x118] sm:$0xff]
        %v600 = vld [vmem:[#allocation8 + $0x120] sm:$0xff]
        %v601 = vld [vmem:[#allocation8 + $0x128] sm:$0xff]
        %v602 = vld [vmem:[#allocation8 + $0x130] sm:$0xff]
        %v603 = vld [vmem:[#allocation8 + $0x138] sm:$0xff]
        %v604 = vld [vmem:[#allocation8 + $0x140] sm:$0xff]
        %v605 = vld [vmem:[#allocation8 + $0x148] sm:$0xff]
        %v606 = vld [vmem:[#allocation8 + $0x150] sm:$0xff]
        %v607 = vld [vmem:[#allocation8 + $0x158] sm:$0xff]
        %v608 = vld [vmem:[#allocation8 + $0x160] sm:$0xff]
        %v609 = vld [vmem:[#allocation8 + $0x168] sm:$0xff]
        %v610 = vld [vmem:[#allocation8 + $0x170] sm:$0xff]
        %v611 = vld [vmem:[#allocation8 + $0x178] sm:$0xff]
        %v612 = vld [vmem:[#allocation8 + $0x180] sm:$0xff]
        %v613 = vld [vmem:[#allocation8 + $0x188] sm:$0xff]
        %v614 = vld [vmem:[#allocation8 + $0x190] sm:$0xff]
        %v615 = vld [vmem:[#allocation8 + $0x198] sm:$0xff]
        %v616 = vld [vmem:[#allocation8 + $0x1a0] sm:$0xff]
        %v617 = vld [vmem:[#allocation8 + $0x1a8] sm:$0xff]
        %v618 = vld [vmem:[#allocation8 + $0x1b0] sm:$0xff]
        %v619 = vld [vmem:[#allocation8 + $0x1b8] sm:$0xff]
        %v620 = vld [vmem:[#allocation8 + $0x1c0] sm:$0xff]
        %v621 = vld [vmem:[#allocation8 + $0x1c8] sm:$0xff]
        %v622 = vld [vmem:[#allocation8 + $0x1d0] sm:$0xff]
        %v623 = vld [vmem:[#allocation8 + $0x1d8] sm:$0xff]
        %v624 = vld [vmem:[#allocation8 + $0x1e0] sm:$0xff]
        %v625 = vld [vmem:[#allocation8 + $0x1e8] sm:$0xff]
        %v626 = vld [vmem:[#allocation8 + $0x1f0] sm:$0xff]
        %v627 = vld [vmem:[#allocation8 + $0x1f8] sm:$0xff]
        %v629 = vperm.slane %v434, 0
        %631 = vmatpush.msra.mxu0 %v579
        %632 = vmatpush.msra.mxu0 %v578
        %633 = vmatpush.msra.mxu0 %v577
        %634 = vmatpush.msra.mxu0 %v576
        %635 = vmatpush.msra.mxu0 %v575
        %636 = vmatpush.msra.mxu0 %v574
        %637 = vmatpush.msra.mxu0 %v573
        %638 = vmatpush.msra.mxu0 %v572
        %639 = vmatpush.msra.mxu0 %v571
        %640 = vmatpush.msra.mxu0 %v570
        %641 = vmatpush.msra.mxu0 %v569
        %642 = vmatpush.msra.mxu0 %v568
        %643 = vmatpush.msra.mxu0 %v567
        %644 = vmatpush.msra.mxu0 %v566
        %645 = vmatpush.msra.mxu0 %v565
        %646 = vmatpush.msra.mxu0 %v564
        %647 = vmatmul.f32.gmra.mxu0 %v435
        %v648 = vpop.f32.mrf.mxu0
        %v649 = vadd.f32 %v629, %v648
        %650 = vmatmul.f32.gmra.mxu0 %v436
        %v651 = vpop.f32.mrf.mxu0
        %v652 = vadd.f32 %v629, %v651
        %653 = vmatmul.f32.gmra.mxu0 %v437
        %v654 = vpop.f32.mrf.mxu0
        %v655 = vadd.f32 %v629, %v654
        %656 = vmatmul.f32.gmra.mxu0 %v438
        %v657 = vpop.f32.mrf.mxu0
        %v658 = vadd.f32 %v629, %v657
        %659 = vmatmul.f32.gmra.mxu0 %v439
        %v660 = vpop.f32.mrf.mxu0
        %v661 = vadd.f32 %v629, %v660
        %662 = vmatmul.f32.gmra.mxu0 %v440
        %v663 = vpop.f32.mrf.mxu0
        %v664 = vadd.f32 %v629, %v663
        %665 = vmatmul.f32.gmra.mxu0 %v441
        %v666 = vpop.f32.mrf.mxu0
        %v667 = vadd.f32 %v629, %v666
        %668 = vmatmul.f32.gmra.mxu0 %v442
        %v669 = vpop.f32.mrf.mxu0
        %v670 = vadd.f32 %v629, %v669
        %671 = vmatmul.f32.gmra.mxu0 %v443
        %v672 = vpop.f32.mrf.mxu0
        %v673 = vadd.f32 %v629, %v672
        %674 = vmatmul.f32.gmra.mxu0 %v444
        %v675 = vpop.f32.mrf.mxu0
        %v676 = vadd.f32 %v629, %v675
        %677 = vmatmul.f32.gmra.mxu0 %v445
        %v678 = vpop.f32.mrf.mxu0
        %v679 = vadd.f32 %v629, %v678
        %680 = vmatmul.f32.gmra.mxu0 %v446
        %v681 = vpop.f32.mrf.mxu0
        %v682 = vadd.f32 %v629, %v681
        %683 = vmatmul.f32.gmra.mxu0 %v447
        %v684 = vpop.f32.mrf.mxu0
        %v685 = vadd.f32 %v629, %v684
        %686 = vmatmul.f32.gmra.mxu0 %v448
        %v687 = vpop.f32.mrf.mxu0
        %v688 = vadd.f32 %v629, %v687
        %689 = vmatmul.f32.gmra.mxu0 %v449
        %v690 = vpop.f32.mrf.mxu0
        %v691 = vadd.f32 %v629, %v690
        %692 = vmatmul.f32.gmra.mxu0 %v450
        %v693 = vpop.f32.mrf.mxu0
        %v694 = vadd.f32 %v629, %v693
        %695 = vmatmul.f32.gmra.mxu0 %v451
        %v696 = vpop.f32.mrf.mxu0
        %v697 = vadd.f32 %v629, %v696
        %698 = vmatmul.f32.gmra.mxu0 %v452
        %v699 = vpop.f32.mrf.mxu0
        %v700 = vadd.f32 %v629, %v699
        %701 = vmatmul.f32.gmra.mxu0 %v453
        %v702 = vpop.f32.mrf.mxu0
        %v703 = vadd.f32 %v629, %v702
        %704 = vmatmul.f32.gmra.mxu0 %v454
        %v705 = vpop.f32.mrf.mxu0
        %v706 = vadd.f32 %v629, %v705
        %707 = vmatmul.f32.gmra.mxu0 %v455
        %v708 = vpop.f32.mrf.mxu0
        %v709 = vadd.f32 %v629, %v708
        %710 = vmatmul.f32.gmra.mxu0 %v456
        %v711 = vpop.f32.mrf.mxu0
        %v712 = vadd.f32 %v629, %v711
        %713 = vmatmul.f32.gmra.mxu0 %v457
        %v714 = vpop.f32.mrf.mxu0
        %v715 = vadd.f32 %v629, %v714
        %716 = vmatmul.f32.gmra.mxu0 %v458
        %v717 = vpop.f32.mrf.mxu0
        %v718 = vadd.f32 %v629, %v717
        %719 = vmatmul.f32.gmra.mxu0 %v459
        %v720 = vpop.f32.mrf.mxu0
        %v721 = vadd.f32 %v629, %v720
        %722 = vmatmul.f32.gmra.mxu0 %v460
        %v723 = vpop.f32.mrf.mxu0
        %v724 = vadd.f32 %v629, %v723
        %725 = vmatmul.f32.gmra.mxu0 %v461
        %v726 = vpop.f32.mrf.mxu0
        %v727 = vadd.f32 %v629, %v726
        %728 = vmatmul.f32.gmra.mxu0 %v462
        %v729 = vpop.f32.mrf.mxu0
        %v730 = vadd.f32 %v629, %v729
        %731 = vmatmul.f32.gmra.mxu0 %v463
        %v732 = vpop.f32.mrf.mxu0
        %v733 = vadd.f32 %v629, %v732
        %734 = vmatmul.f32.gmra.mxu0 %v464
        %v735 = vpop.f32.mrf.mxu0
        %v736 = vadd.f32 %v629, %v735
        %737 = vmatmul.f32.gmra.mxu0 %v465
        %v738 = vpop.f32.mrf.mxu0
        %v739 = vadd.f32 %v629, %v738
        %740 = vmatmul.f32.gmra.mxu0 %v466
        %v741 = vpop.f32.mrf.mxu0
        %v742 = vadd.f32 %v629, %v741
        %743 = vdwg.mxu0
        %744 = vmatpush.msra.mxu0 %v595
        %745 = vmatpush.msra.mxu0 %v594
        %746 = vmatpush.msra.mxu0 %v593
        %747 = vmatpush.msra.mxu0 %v592
        %748 = vmatpush.msra.mxu0 %v591
        %749 = vmatpush.msra.mxu0 %v590
        %750 = vmatpush.msra.mxu0 %v589
        %751 = vmatpush.msra.mxu0 %v588
        %752 = vmatpush.msra.mxu0 %v587
        %753 = vmatpush.msra.mxu0 %v586
        %754 = vmatpush.msra.mxu0 %v585
        %755 = vmatpush.msra.mxu0 %v584
        %756 = vmatpush.msra.mxu0 %v583
        %757 = vmatpush.msra.mxu0 %v582
        %758 = vmatpush.msra.mxu0 %v581
        %759 = vmatpush.msra.mxu0 %v580
        %760 = vmatmul.f32.gmra.mxu0 %v467
        %v761 = vpop.f32.mrf.mxu0
        %v762 = vadd.f32 %v649, %v761
        %763 = vmatmul.f32.gmra.mxu0 %v468
        %v764 = vpop.f32.mrf.mxu0
        %v765 = vadd.f32 %v652, %v764
        %766 = vmatmul.f32.gmra.mxu0 %v469
        %v767 = vpop.f32.mrf.mxu0
        %v768 = vadd.f32 %v655, %v767
        %769 = vmatmul.f32.gmra.mxu0 %v470
        %v770 = vpop.f32.mrf.mxu0
        %v771 = vadd.f32 %v658, %v770
        %772 = vmatmul.f32.gmra.mxu0 %v471
        %v773 = vpop.f32.mrf.mxu0
        %v774 = vadd.f32 %v661, %v773
        %775 = vmatmul.f32.gmra.mxu0 %v472
        %v776 = vpop.f32.mrf.mxu0
        %v777 = vadd.f32 %v664, %v776
        %778 = vmatmul.f32.gmra.mxu0 %v473
        %v779 = vpop.f32.mrf.mxu0
        %v780 = vadd.f32 %v667, %v779
        %781 = vmatmul.f32.gmra.mxu0 %v474
        %v782 = vpop.f32.mrf.mxu0
        %v783 = vadd.f32 %v670, %v782
        %784 = vmatmul.f32.gmra.mxu0 %v475
        %v785 = vpop.f32.mrf.mxu0
        %v786 = vadd.f32 %v673, %v785
        %787 = vmatmul.f32.gmra.mxu0 %v476
        %v788 = vpop.f32.mrf.mxu0
        %v789 = vadd.f32 %v676, %v788
        %790 = vmatmul.f32.gmra.mxu0 %v477
        %v791 = vpop.f32.mrf.mxu0
        %v792 = vadd.f32 %v679, %v791
        %793 = vmatmul.f32.gmra.mxu0 %v478
        %v794 = vpop.f32.mrf.mxu0
        %v795 = vadd.f32 %v682, %v794
        %796 = vmatmul.f32.gmra.mxu0 %v479
        %v797 = vpop.f32.mrf.mxu0
        %v798 = vadd.f32 %v685, %v797
        %799 = vmatmul.f32.gmra.mxu0 %v480
        %v800 = vpop.f32.mrf.mxu0
        %v801 = vadd.f32 %v688, %v800
        %802 = vmatmul.f32.gmra.mxu0 %v481
        %v803 = vpop.f32.mrf.mxu0
        %v804 = vadd.f32 %v691, %v803
        %805 = vmatmul.f32.gmra.mxu0 %v482
        %v806 = vpop.f32.mrf.mxu0
        %v807 = vadd.f32 %v694, %v806
        %808 = vmatmul.f32.gmra.mxu0 %v483
        %v809 = vpop.f32.mrf.mxu0
        %v810 = vadd.f32 %v697, %v809
        %811 = vmatmul.f32.gmra.mxu0 %v484
        %v812 = vpop.f32.mrf.mxu0
        %v813 = vadd.f32 %v700, %v812
        %814 = vmatmul.f32.gmra.mxu0 %v485
        %v815 = vpop.f32.mrf.mxu0
        %v816 = vadd.f32 %v703, %v815
        %817 = vmatmul.f32.gmra.mxu0 %v486
        %v818 = vpop.f32.mrf.mxu0
        %v819 = vadd.f32 %v706, %v818
        %820 = vmatmul.f32.gmra.mxu0 %v487
        %v821 = vpop.f32.mrf.mxu0
        %v822 = vadd.f32 %v709, %v821
        %823 = vmatmul.f32.gmra.mxu0 %v488
        %v824 = vpop.f32.mrf.mxu0
        %v825 = vadd.f32 %v712, %v824
        %826 = vmatmul.f32.gmra.mxu0 %v489
        %v827 = vpop.f32.mrf.mxu0
        %v828 = vadd.f32 %v715, %v827
        %829 = vmatmul.f32.gmra.mxu0 %v490
        %v830 = vpop.f32.mrf.mxu0
        %v831 = vadd.f32 %v718, %v830
        %832 = vmatmul.f32.gmra.mxu0 %v491
        %v833 = vpop.f32.mrf.mxu0
        %v834 = vadd.f32 %v721, %v833
        %835 = vmatmul.f32.gmra.mxu0 %v492
        %v836 = vpop.f32.mrf.mxu0
        %v837 = vadd.f32 %v724, %v836
        %838 = vmatmul.f32.gmra.mxu0 %v493
        %v839 = vpop.f32.mrf.mxu0
        %v840 = vadd.f32 %v727, %v839
        %841 = vmatmul.f32.gmra.mxu0 %v494
        %v842 = vpop.f32.mrf.mxu0
        %v843 = vadd.f32 %v730, %v842
        %844 = vmatmul.f32.gmra.mxu0 %v495
        %v845 = vpop.f32.mrf.mxu0
        %v846 = vadd.f32 %v733, %v845
        %847 = vmatmul.f32.gmra.mxu0 %v496
        %v848 = vpop.f32.mrf.mxu0
        %v849 = vadd.f32 %v736, %v848
        %850 = vmatmul.f32.gmra.mxu0 %v497
        %v851 = vpop.f32.mrf.mxu0
        %v852 = vadd.f32 %v739, %v851
        %853 = vmatmul.f32.gmra.mxu0 %v498
        %v854 = vpop.f32.mrf.mxu0
        %v855 = vadd.f32 %v742, %v854
        %856 = vdwg.mxu0
        %857 = vmatpush.msra.mxu0 %v611
        %858 = vmatpush.msra.mxu0 %v610
        %859 = vmatpush.msra.mxu0 %v609
        %860 = vmatpush.msra.mxu0 %v608
        %861 = vmatpush.msra.mxu0 %v607
        %862 = vmatpush.msra.mxu0 %v606
        %863 = vmatpush.msra.mxu0 %v605
        %864 = vmatpush.msra.mxu0 %v604
        %865 = vmatpush.msra.mxu0 %v603
        %866 = vmatpush.msra.mxu0 %v602
        %867 = vmatpush.msra.mxu0 %v601
        %868 = vmatpush.msra.mxu0 %v600
        %869 = vmatpush.msra.mxu0 %v599
        %870 = vmatpush.msra.mxu0 %v598
        %871 = vmatpush.msra.mxu0 %v597
        %872 = vmatpush.msra.mxu0 %v596
        %873 = vmatmul.f32.gmra.mxu0 %v500
        %v874 = vpop.f32.mrf.mxu0
        %v875 = vadd.f32 %v762, %v874
        %876 = vmatmul.f32.gmra.mxu0 %v501
        %v877 = vpop.f32.mrf.mxu0
        %v878 = vadd.f32 %v765, %v877
        %879 = vmatmul.f32.gmra.mxu0 %v502
        %v880 = vpop.f32.mrf.mxu0
        %v881 = vadd.f32 %v768, %v880
        %882 = vmatmul.f32.gmra.mxu0 %v503
        %v883 = vpop.f32.mrf.mxu0
        %v884 = vadd.f32 %v771, %v883
        %885 = vmatmul.f32.gmra.mxu0 %v504
        %v886 = vpop.f32.mrf.mxu0
        %v887 = vadd.f32 %v774, %v886
        %888 = vmatmul.f32.gmra.mxu0 %v505
        %v889 = vpop.f32.mrf.mxu0
        %v890 = vadd.f32 %v777, %v889
        %891 = vmatmul.f32.gmra.mxu0 %v506
        %v892 = vpop.f32.mrf.mxu0
        %v893 = vadd.f32 %v780, %v892
        %894 = vmatmul.f32.gmra.mxu0 %v507
        %v895 = vpop.f32.mrf.mxu0
        %v896 = vadd.f32 %v783, %v895
        %897 = vmatmul.f32.gmra.mxu0 %v508
        %v898 = vpop.f32.mrf.mxu0
        %v899 = vadd.f32 %v786, %v898
        %900 = vmatmul.f32.gmra.mxu0 %v509
        %v901 = vpop.f32.mrf.mxu0
        %v902 = vadd.f32 %v789, %v901
        %903 = vmatmul.f32.gmra.mxu0 %v510
        %v904 = vpop.f32.mrf.mxu0
        %v905 = vadd.f32 %v792, %v904
        %906 = vmatmul.f32.gmra.mxu0 %v511
        %v907 = vpop.f32.mrf.mxu0
        %v908 = vadd.f32 %v795, %v907
        %909 = vmatmul.f32.gmra.mxu0 %v512
        %v910 = vpop.f32.mrf.mxu0
        %v911 = vadd.f32 %v798, %v910
        %912 = vmatmul.f32.gmra.mxu0 %v513
        %v913 = vpop.f32.mrf.mxu0
        %v914 = vadd.f32 %v801, %v913
        %915 = vmatmul.f32.gmra.mxu0 %v514
        %v916 = vpop.f32.mrf.mxu0
        %v917 = vadd.f32 %v804, %v916
        %918 = vmatmul.f32.gmra.mxu0 %v515
        %v919 = vpop.f32.mrf.mxu0
        %v920 = vadd.f32 %v807, %v919
        %921 = vmatmul.f32.gmra.mxu0 %v516
        %v922 = vpop.f32.mrf.mxu0
        %v923 = vadd.f32 %v810, %v922
        %924 = vmatmul.f32.gmra.mxu0 %v517
        %v925 = vpop.f32.mrf.mxu0
        %v926 = vadd.f32 %v813, %v925
        %927 = vmatmul.f32.gmra.mxu0 %v518
        %v928 = vpop.f32.mrf.mxu0
        %v929 = vadd.f32 %v816, %v928
        %930 = vmatmul.f32.gmra.mxu0 %v519
        %v931 = vpop.f32.mrf.mxu0
        %v932 = vadd.f32 %v819, %v931
        %933 = vmatmul.f32.gmra.mxu0 %v520
        %v934 = vpop.f32.mrf.mxu0
        %v935 = vadd.f32 %v822, %v934
        %936 = vmatmul.f32.gmra.mxu0 %v521
        %v937 = vpop.f32.mrf.mxu0
        %v938 = vadd.f32 %v825, %v937
        %939 = vmatmul.f32.gmra.mxu0 %v522
        %v940 = vpop.f32.mrf.mxu0
        %v941 = vadd.f32 %v828, %v940
        %942 = vmatmul.f32.gmra.mxu0 %v523
        %v943 = vpop.f32.mrf.mxu0
        %v944 = vadd.f32 %v831, %v943
        %945 = vmatmul.f32.gmra.mxu0 %v524
        %v946 = vpop.f32.mrf.mxu0
        %v947 = vadd.f32 %v834, %v946
        %948 = vmatmul.f32.gmra.mxu0 %v525
        %v949 = vpop.f32.mrf.mxu0
        %v950 = vadd.f32 %v837, %v949
        %951 = vmatmul.f32.gmra.mxu0 %v526
        %v952 = vpop.f32.mrf.mxu0
        %v953 = vadd.f32 %v840, %v952
        %954 = vmatmul.f32.gmra.mxu0 %v527
        %v955 = vpop.f32.mrf.mxu0
        %v956 = vadd.f32 %v843, %v955
        %957 = vmatmul.f32.gmra.mxu0 %v528
        %v958 = vpop.f32.mrf.mxu0
        %v959 = vadd.f32 %v846, %v958
        %960 = vmatmul.f32.gmra.mxu0 %v529
        %v961 = vpop.f32.mrf.mxu0
        %v962 = vadd.f32 %v849, %v961
        %963 = vmatmul.f32.gmra.mxu0 %v530
        %v964 = vpop.f32.mrf.mxu0
        %v965 = vadd.f32 %v852, %v964
        %966 = vmatmul.f32.gmra.mxu0 %v531
        %v967 = vpop.f32.mrf.mxu0
        %v968 = vadd.f32 %v855, %v967
        %969 = vdwg.mxu0
        %970 = vmatpush.msra.mxu0 %v627
        %971 = vmatpush.msra.mxu0 %v626
        %972 = vmatpush.msra.mxu0 %v625
        %973 = vmatpush.msra.mxu0 %v624
        %974 = vmatpush.msra.mxu0 %v623
        %975 = vmatpush.msra.mxu0 %v622
        %976 = vmatpush.msra.mxu0 %v621
        %977 = vmatpush.msra.mxu0 %v620
        %978 = vmatpush.msra.mxu0 %v619
        %979 = vmatpush.msra.mxu0 %v618
        %980 = vmatpush.msra.mxu0 %v617
        %981 = vmatpush.msra.mxu0 %v616
        %982 = vmatpush.msra.mxu0 %v615
        %983 = vmatpush.msra.mxu0 %v614
        %984 = vmatpush.msra.mxu0 %v613
        %985 = vmatpush.msra.mxu0 %v612
        %986 = vmatmul.f32.gmra.mxu0 %v532
        %v987 = vpop.f32.mrf.mxu0
        %v988 = vadd.f32 %v875, %v987
        %989 = vmatmul.f32.gmra.mxu0 %v533
        %v990 = vpop.f32.mrf.mxu0
        %v991 = vadd.f32 %v878, %v990
        %992 = vmatmul.f32.gmra.mxu0 %v534
        %v993 = vpop.f32.mrf.mxu0
        %v994 = vadd.f32 %v881, %v993
        %995 = vmatmul.f32.gmra.mxu0 %v535
        %v996 = vpop.f32.mrf.mxu0
        %v997 = vadd.f32 %v884, %v996
        %998 = vmatmul.f32.gmra.mxu0 %v536
        %v999 = vpop.f32.mrf.mxu0
        %v1000 = vadd.f32 %v887, %v999
        %1001 = vmatmul.f32.gmra.mxu0 %v537
        %v1002 = vpop.f32.mrf.mxu0
        %v1003 = vadd.f32 %v890, %v1002
        %1004 = vmatmul.f32.gmra.mxu0 %v538
        %v1005 = vpop.f32.mrf.mxu0
        %v1006 = vadd.f32 %v893, %v1005
        %1007 = vmatmul.f32.gmra.mxu0 %v539
        %v1008 = vpop.f32.mrf.mxu0
        %v1009 = vadd.f32 %v896, %v1008
        %1010 = vmatmul.f32.gmra.mxu0 %v540
        %v1011 = vpop.f32.mrf.mxu0
        %v1012 = vadd.f32 %v899, %v1011
        %1013 = vmatmul.f32.gmra.mxu0 %v541
        %v1014 = vpop.f32.mrf.mxu0
        %v1015 = vadd.f32 %v902, %v1014
        %1016 = vmatmul.f32.gmra.mxu0 %v542
        %v1017 = vpop.f32.mrf.mxu0
        %v1018 = vadd.f32 %v905, %v1017
        %1019 = vmatmul.f32.gmra.mxu0 %v543
        %v1020 = vpop.f32.mrf.mxu0
        %v1021 = vadd.f32 %v908, %v1020
        %1022 = vmatmul.f32.gmra.mxu0 %v544
        %v1023 = vpop.f32.mrf.mxu0
        %v1024 = vadd.f32 %v911, %v1023
        %1025 = vmatmul.f32.gmra.mxu0 %v545
        %v1026 = vpop.f32.mrf.mxu0
        %v1027 = vadd.f32 %v914, %v1026
        %1028 = vmatmul.f32.gmra.mxu0 %v546
        %v1029 = vpop.f32.mrf.mxu0
        %v1030 = vadd.f32 %v917, %v1029
        %1031 = vmatmul.f32.gmra.mxu0 %v547
        %v1032 = vpop.f32.mrf.mxu0
        %v1033 = vadd.f32 %v920, %v1032
        %1034 = vmatmul.f32.gmra.mxu0 %v548
        %v1035 = vpop.f32.mrf.mxu0
        %v1036 = vadd.f32 %v923, %v1035
        %1037 = vmatmul.f32.gmra.mxu0 %v549
        %v1038 = vpop.f32.mrf.mxu0
        %v1039 = vadd.f32 %v926, %v1038
        %1040 = vmatmul.f32.gmra.mxu0 %v550
        %v1041 = vpop.f32.mrf.mxu0
        %v1042 = vadd.f32 %v929, %v1041
        %1043 = vmatmul.f32.gmra.mxu0 %v551
        %v1044 = vpop.f32.mrf.mxu0
        %v1045 = vadd.f32 %v932, %v1044
        %1046 = vmatmul.f32.gmra.mxu0 %v552
        %v1047 = vpop.f32.mrf.mxu0
        %v1048 = vadd.f32 %v935, %v1047
        %1049 = vmatmul.f32.gmra.mxu0 %v553
        %v1050 = vpop.f32.mrf.mxu0
        %v1051 = vadd.f32 %v938, %v1050
        %1052 = vmatmul.f32.gmra.mxu0 %v554
        %v1053 = vpop.f32.mrf.mxu0
        %v1054 = vadd.f32 %v941, %v1053
        %1055 = vmatmul.f32.gmra.mxu0 %v555
        %v1056 = vpop.f32.mrf.mxu0
        %v1057 = vadd.f32 %v944, %v1056
        %1058 = vmatmul.f32.gmra.mxu0 %v556
        %v1059 = vpop.f32.mrf.mxu0
        %v1060 = vadd.f32 %v947, %v1059
        %1061 = vmatmul.f32.gmra.mxu0 %v557
        %v1062 = vpop.f32.mrf.mxu0
        %v1063 = vadd.f32 %v950, %v1062
        %1064 = vmatmul.f32.gmra.mxu0 %v558
        %v1065 = vpop.f32.mrf.mxu0
        %v1066 = vadd.f32 %v953, %v1065
        %1067 = vmatmul.f32.gmra.mxu0 %v559
        %v1068 = vpop.f32.mrf.mxu0
        %v1069 = vadd.f32 %v956, %v1068
        %1070 = vmatmul.f32.gmra.mxu0 %v560
        %v1071 = vpop.f32.mrf.mxu0
        %v1072 = vadd.f32 %v959, %v1071
        %1073 = vmatmul.f32.gmra.mxu0 %v561
        %v1074 = vpop.f32.mrf.mxu0
        %v1075 = vadd.f32 %v962, %v1074
        %1076 = vmatmul.f32.gmra.mxu0 %v562
        %v1077 = vpop.f32.mrf.mxu0
        %v1078 = vadd.f32 %v965, %v1077
        %1079 = vmatmul.f32.gmra.mxu0 %v563
        %v1080 = vpop.f32.mrf.mxu0
        %v1081 = vadd.f32 %v968, %v1080
        %1082 = vdwg.mxu0
        %1083 = vst [vmem:[%s314] sm:$0xff] %v988
        %1084 = vst [vmem:[%s314 + $0x20] sm:$0xff] %v991
        %1085 = vst [vmem:[%s314 + $0x40] sm:$0xff] %v994
        %1086 = vst [vmem:[%s314 + $0x60] sm:$0xff] %v997
        %1087 = vst [vmem:[%s314 + $0x80] sm:$0xff] %v1000
        %1088 = vst [vmem:[%s314 + $0xa0] sm:$0xff] %v1003
        %1089 = vst [vmem:[%s314 + $0xc0] sm:$0xff] %v1006
        %1090 = vst [vmem:[%s314 + $0xe0] sm:$0xff] %v1009
        %1091 = vst [vmem:[%s314 + $0x100] sm:$0xff] %v1012
        %1092 = vst [vmem:[%s314 + $0x120] sm:$0xff] %v1015
        %1093 = vst [vmem:[%s314 + $0x140] sm:$0xff] %v1018
        %1094 = vst [vmem:[%s314 + $0x160] sm:$0xff] %v1021
        %1095 = vst [vmem:[%s314 + $0x180] sm:$0xff] %v1024
        %1096 = vst [vmem:[%s314 + $0x1a0] sm:$0xff] %v1027
        %1097 = vst [vmem:[%s314 + $0x1c0] sm:$0xff] %v1030
        %1098 = vst [vmem:[%s314 + $0x1e0] sm:$0xff] %v1033
        %1099 = vst [vmem:[%s314 + $0x200] sm:$0xff] %v1036
        %1100 = vst [vmem:[%s314 + $0x220] sm:$0xff] %v1039
        %1101 = vst [vmem:[%s314 + $0x240] sm:$0xff] %v1042
        %1102 = vst [vmem:[%s314 + $0x260] sm:$0xff] %v1045
        %1103 = vst [vmem:[%s314 + $0x280] sm:$0xff] %v1048
        %1104 = vst [vmem:[%s314 + $0x2a0] sm:$0xff] %v1051
        %1105 = vst [vmem:[%s314 + $0x2c0] sm:$0xff] %v1054
        %1106 = vst [vmem:[%s314 + $0x2e0] sm:$0xff] %v1057
        %1107 = vst [vmem:[%s314 + $0x300] sm:$0xff] %v1060
        %1108 = vst [vmem:[%s314 + $0x320] sm:$0xff] %v1063
        %1109 = vst [vmem:[%s314 + $0x340] sm:$0xff] %v1066
        %1110 = vst [vmem:[%s314 + $0x360] sm:$0xff] %v1069
        %1111 = vst [vmem:[%s314 + $0x380] sm:$0xff] %v1072
        %1112 = vst [vmem:[%s314 + $0x3a0] sm:$0xff] %v1075
        %1113 = vst [vmem:[%s314 + $0x3c0] sm:$0xff] %v1078
        %1114 = vst [vmem:[%s314 + $0x3e0] sm:$0xff] %v1081
        %v1115 = vld [vmem:[#allocation2 + $0x1] sm:$0xff]
        %v1116 = vld [vmem:[#allocation2 + $0x9] sm:$0xff]
        %v1117 = vld [vmem:[#allocation2 + $0x19] sm:$0xff]
        %v1118 = vld [vmem:[#allocation2 + $0x21] sm:$0xff]
        %v1119 = vld [vmem:[#allocation2 + $0x31] sm:$0xff]
        %v1120 = vld [vmem:[#allocation2 + $0x39] sm:$0xff]
        %v1121 = vld [vmem:[#allocation2 + $0x49] sm:$0xff]
        %v1122 = vld [vmem:[#allocation2 + $0x51] sm:$0xff]
        %v1123 = vld [vmem:[#allocation2 + $0x61] sm:$0xff]
        %v1124 = vld [vmem:[#allocation2 + $0x69] sm:$0xff]
        %v1125 = vld [vmem:[#allocation2 + $0x79] sm:$0xff]
        %v1126 = vld [vmem:[#allocation2 + $0x81] sm:$0xff]
        %v1127 = vld [vmem:[#allocation2 + $0x91] sm:$0xff]
        %v1128 = vld [vmem:[#allocation2 + $0x99] sm:$0xff]
        %v1129 = vld [vmem:[#allocation2 + $0xa9] sm:$0xff]
        %v1130 = vld [vmem:[#allocation2 + $0xb1] sm:$0xff]
        %v1131 = vld [vmem:[#allocation2 + $0xc1] sm:$0xff]
        %v1132 = vld [vmem:[#allocation2 + $0xc9] sm:$0xff]
        %v1133 = vld [vmem:[#allocation2 + $0xd9] sm:$0xff]
        %v1134 = vld [vmem:[#allocation2 + $0xe1] sm:$0xff]
        %v1135 = vld [vmem:[#allocation2 + $0xf1] sm:$0xff]
        %v1136 = vld [vmem:[#allocation2 + $0xf9] sm:$0xff]
        %v1137 = vld [vmem:[#allocation2 + $0x109] sm:$0xff]
        %v1138 = vld [vmem:[#allocation2 + $0x111] sm:$0xff]
        %v1139 = vld [vmem:[#allocation2 + $0x121] sm:$0xff]
        %v1140 = vld [vmem:[#allocation2 + $0x129] sm:$0xff]
        %v1141 = vld [vmem:[#allocation2 + $0x139] sm:$0xff]
        %v1142 = vld [vmem:[#allocation2 + $0x141] sm:$0xff]
        %v1143 = vld [vmem:[#allocation2 + $0x151] sm:$0xff]
        %v1144 = vld [vmem:[#allocation2 + $0x159] sm:$0xff]
        %v1145 = vld [vmem:[#allocation2 + $0x169] sm:$0xff]
        %v1146 = vld [vmem:[#allocation2 + $0x171] sm:$0xff]
        %v1147 = vld [vmem:[#allocation2 + $0x2] sm:$0xff]
        %v1148 = vld [vmem:[#allocation2 + $0xa] sm:$0xff]
        %v1149 = vld [vmem:[#allocation2 + $0x1a] sm:$0xff]
        %v1150 = vld [vmem:[#allocation2 + $0x22] sm:$0xff]
        %v1151 = vld [vmem:[#allocation2 + $0x32] sm:$0xff]
        %v1152 = vld [vmem:[#allocation2 + $0x3a] sm:$0xff]
        %v1153 = vld [vmem:[#allocation2 + $0x4a] sm:$0xff]
        %v1154 = vld [vmem:[#allocation2 + $0x52] sm:$0xff]
        %v1155 = vld [vmem:[#allocation2 + $0x62] sm:$0xff]
        %v1156 = vld [vmem:[#allocation2 + $0x6a] sm:$0xff]
        %v1157 = vld [vmem:[#allocation2 + $0x7a] sm:$0xff]
        %v1158 = vld [vmem:[#allocation2 + $0x82] sm:$0xff]
        %v1159 = vld [vmem:[#allocation2 + $0x92] sm:$0xff]
        %v1160 = vld [vmem:[#allocation2 + $0x9a] sm:$0xff]
        %v1161 = vld [vmem:[#allocation2 + $0xaa] sm:$0xff]
        %v1162 = vld [vmem:[#allocation2 + $0xb2] sm:$0xff]
        %v1163 = vld [vmem:[#allocation2 + $0xc2] sm:$0xff]
        %v1164 = vld [vmem:[#allocation2 + $0xca] sm:$0xff]
        %v1165 = vld [vmem:[#allocation2 + $0xda] sm:$0xff]
        %v1166 = vld [vmem:[#allocation2 + $0xe2] sm:$0xff]
        %v1167 = vld [vmem:[#allocation2 + $0xf2] sm:$0xff]
        %v1168 = vld [vmem:[#allocation2 + $0xfa] sm:$0xff]
        %v1169 = vld [vmem:[#allocation2 + $0x10a] sm:$0xff]
        %v1170 = vld [vmem:[#allocation2 + $0x112] sm:$0xff]
        %v1171 = vld [vmem:[#allocation2 + $0x122] sm:$0xff]
        %v1172 = vld [vmem:[#allocation2 + $0x12a] sm:$0xff]
        %v1173 = vld [vmem:[#allocation2 + $0x13a] sm:$0xff]
        %v1174 = vld [vmem:[#allocation2 + $0x142] sm:$0xff]
        %v1175 = vld [vmem:[#allocation2 + $0x152] sm:$0xff]
        %v1176 = vld [vmem:[#allocation2 + $0x15a] sm:$0xff]
        %v1177 = vld [vmem:[#allocation2 + $0x16a] sm:$0xff]
        %v1178 = vld [vmem:[#allocation2 + $0x172] sm:$0xff]
        %v1179 = vld [vmem:[%s499 + $0x1] sm:$0xff]
        %v1180 = vld [vmem:[%s499 + $0x9] sm:$0xff]
        %v1181 = vld [vmem:[%s499 + $0x19] sm:$0xff]
        %v1182 = vld [vmem:[%s499 + $0x21] sm:$0xff]
        %v1183 = vld [vmem:[%s499 + $0x31] sm:$0xff]
        %v1184 = vld [vmem:[%s499 + $0x39] sm:$0xff]
        %v1185 = vld [vmem:[%s499 + $0x49] sm:$0xff]
        %v1186 = vld [vmem:[%s499 + $0x51] sm:$0xff]
        %v1187 = vld [vmem:[%s499 + $0x61] sm:$0xff]
        %v1188 = vld [vmem:[%s499 + $0x69] sm:$0xff]
        %v1189 = vld [vmem:[%s499 + $0x79] sm:$0xff]
        %v1190 = vld [vmem:[%s499 + $0x81] sm:$0xff]
        %v1191 = vld [vmem:[%s499 + $0x91] sm:$0xff]
        %v1192 = vld [vmem:[%s499 + $0x99] sm:$0xff]
        %v1193 = vld [vmem:[%s499 + $0xa9] sm:$0xff]
        %v1194 = vld [vmem:[%s499 + $0xb1] sm:$0xff]
        %v1195 = vld [vmem:[%s499 + $0xc1] sm:$0xff]
        %v1196 = vld [vmem:[%s499 + $0xc9] sm:$0xff]
        %v1197 = vld [vmem:[%s499 + $0xd9] sm:$0xff]
        %v1198 = vld [vmem:[%s499 + $0xe1] sm:$0xff]
        %v1199 = vld [vmem:[%s499 + $0xf1] sm:$0xff]
        %v1200 = vld [vmem:[%s499 + $0xf9] sm:$0xff]
        %v1201 = vld [vmem:[%s499 + $0x109] sm:$0xff]
        %v1202 = vld [vmem:[%s499 + $0x111] sm:$0xff]
        %v1203 = vld [vmem:[%s499 + $0x121] sm:$0xff]
        %v1204 = vld [vmem:[%s499 + $0x129] sm:$0xff]
        %v1205 = vld [vmem:[%s499 + $0x139] sm:$0xff]
        %v1206 = vld [vmem:[%s499 + $0x141] sm:$0xff]
        %v1207 = vld [vmem:[%s499 + $0x151] sm:$0xff]
        %v1208 = vld [vmem:[%s499 + $0x159] sm:$0xff]
        %v1209 = vld [vmem:[%s499 + $0x169] sm:$0xff]
        %v1210 = vld [vmem:[%s499 + $0x171] sm:$0xff]
        %v1211 = vld [vmem:[%s499 + $0x2] sm:$0xff]
        %v1212 = vld [vmem:[%s499 + $0xa] sm:$0xff]
        %v1213 = vld [vmem:[%s499 + $0x1a] sm:$0xff]
        %v1214 = vld [vmem:[%s499 + $0x22] sm:$0xff]
        %v1215 = vld [vmem:[%s499 + $0x32] sm:$0xff]
        %v1216 = vld [vmem:[%s499 + $0x3a] sm:$0xff]
        %v1217 = vld [vmem:[%s499 + $0x4a] sm:$0xff]
        %v1218 = vld [vmem:[%s499 + $0x52] sm:$0xff]
        %v1219 = vld [vmem:[%s499 + $0x62] sm:$0xff]
        %v1220 = vld [vmem:[%s499 + $0x6a] sm:$0xff]
        %v1221 = vld [vmem:[%s499 + $0x7a] sm:$0xff]
        %v1222 = vld [vmem:[%s499 + $0x82] sm:$0xff]
        %v1223 = vld [vmem:[%s499 + $0x92] sm:$0xff]
        %v1224 = vld [vmem:[%s499 + $0x9a] sm:$0xff]
        %v1225 = vld [vmem:[%s499 + $0xaa] sm:$0xff]
        %v1226 = vld [vmem:[%s499 + $0xb2] sm:$0xff]
        %v1227 = vld [vmem:[%s499 + $0xc2] sm:$0xff]
        %v1228 = vld [vmem:[%s499 + $0xca] sm:$0xff]
        %v1229 = vld [vmem:[%s499 + $0xda] sm:$0xff]
        %v1230 = vld [vmem:[%s499 + $0xe2] sm:$0xff]
        %v1231 = vld [vmem:[%s499 + $0xf2] sm:$0xff]
        %v1232 = vld [vmem:[%s499 + $0xfa] sm:$0xff]
        %v1233 = vld [vmem:[%s499 + $0x10a] sm:$0xff]
        %v1234 = vld [vmem:[%s499 + $0x112] sm:$0xff]
        %v1235 = vld [vmem:[%s499 + $0x122] sm:$0xff]
        %v1236 = vld [vmem:[%s499 + $0x12a] sm:$0xff]
        %v1237 = vld [vmem:[%s499 + $0x13a] sm:$0xff]
        %v1238 = vld [vmem:[%s499 + $0x142] sm:$0xff]
        %v1239 = vld [vmem:[%s499 + $0x152] sm:$0xff]
        %v1240 = vld [vmem:[%s499 + $0x15a] sm:$0xff]
        %v1241 = vld [vmem:[%s499 + $0x16a] sm:$0xff]
        %v1242 = vld [vmem:[%s499 + $0x172] sm:$0xff]
        %s1243 = scalar_lea.vmem [#allocation8], 512
        %v1244 = vld [vmem:[%s1243] sm:$0xff]
        %v1245 = vld [vmem:[%s1243 + $0x8] sm:$0xff]
        %v1246 = vld [vmem:[%s1243 + $0x10] sm:$0xff]
        %v1247 = vld [vmem:[%s1243 + $0x18] sm:$0xff]
        %v1248 = vld [vmem:[%s1243 + $0x20] sm:$0xff]
        %v1249 = vld [vmem:[%s1243 + $0x28] sm:$0xff]
        %v1250 = vld [vmem:[%s1243 + $0x30] sm:$0xff]
        %v1251 = vld [vmem:[%s1243 + $0x38] sm:$0xff]
        %v1252 = vld [vmem:[%s1243 + $0x40] sm:$0xff]
        %v1253 = vld [vmem:[%s1243 + $0x48] sm:$0xff]
        %v1254 = vld [vmem:[%s1243 + $0x50] sm:$0xff]
        %v1255 = vld [vmem:[%s1243 + $0x58] sm:$0xff]
        %v1256 = vld [vmem:[%s1243 + $0x60] sm:$0xff]
        %v1257 = vld [vmem:[%s1243 + $0x68] sm:$0xff]
        %v1258 = vld [vmem:[%s1243 + $0x70] sm:$0xff]
        %v1259 = vld [vmem:[%s1243 + $0x78] sm:$0xff]
        %v1260 = vld [vmem:[%s1243 + $0x80] sm:$0xff]
        %v1261 = vld [vmem:[%s1243 + $0x88] sm:$0xff]
        %v1262 = vld [vmem:[%s1243 + $0x90] sm:$0xff]
        %v1263 = vld [vmem:[%s1243 + $0x98] sm:$0xff]
        %v1264 = vld [vmem:[%s1243 + $0xa0] sm:$0xff]
        %v1265 = vld [vmem:[%s1243 + $0xa8] sm:$0xff]
        %v1266 = vld [vmem:[%s1243 + $0xb0] sm:$0xff]
        %v1267 = vld [vmem:[%s1243 + $0xb8] sm:$0xff]
        %v1268 = vld [vmem:[%s1243 + $0xc0] sm:$0xff]
        %v1269 = vld [vmem:[%s1243 + $0xc8] sm:$0xff]
        %v1270 = vld [vmem:[%s1243 + $0xd0] sm:$0xff]
        %v1271 = vld [vmem:[%s1243 + $0xd8] sm:$0xff]
        %v1272 = vld [vmem:[%s1243 + $0xe0] sm:$0xff]
        %v1273 = vld [vmem:[%s1243 + $0xe8] sm:$0xff]
        %v1274 = vld [vmem:[%s1243 + $0xf0] sm:$0xff]
        %v1275 = vld [vmem:[%s1243 + $0xf8] sm:$0xff]
        %v1276 = vld [vmem:[%s1243 + $0x100] sm:$0xff]
        %v1277 = vld [vmem:[%s1243 + $0x108] sm:$0xff]
        %v1278 = vld [vmem:[%s1243 + $0x110] sm:$0xff]
        %v1279 = vld [vmem:[%s1243 + $0x118] sm:$0xff]
        %v1280 = vld [vmem:[%s1243 + $0x120] sm:$0xff]
        %v1281 = vld [vmem:[%s1243 + $0x128] sm:$0xff]
        %v1282 = vld [vmem:[%s1243 + $0x130] sm:$0xff]
        %v1283 = vld [vmem:[%s1243 + $0x138] sm:$0xff]
        %v1284 = vld [vmem:[%s1243 + $0x140] sm:$0xff]
        %v1285 = vld [vmem:[%s1243 + $0x148] sm:$0xff]
        %v1286 = vld [vmem:[%s1243 + $0x150] sm:$0xff]
        %v1287 = vld [vmem:[%s1243 + $0x158] sm:$0xff]
        %v1288 = vld [vmem:[%s1243 + $0x160] sm:$0xff]
        %v1289 = vld [vmem:[%s1243 + $0x168] sm:$0xff]
        %v1290 = vld [vmem:[%s1243 + $0x170] sm:$0xff]
        %v1291 = vld [vmem:[%s1243 + $0x178] sm:$0xff]
        %v1292 = vld [vmem:[%s1243 + $0x180] sm:$0xff]
        %v1293 = vld [vmem:[%s1243 + $0x188] sm:$0xff]
        %v1294 = vld [vmem:[%s1243 + $0x190] sm:$0xff]
        %v1295 = vld [vmem:[%s1243 + $0x198] sm:$0xff]
        %v1296 = vld [vmem:[%s1243 + $0x1a0] sm:$0xff]
        %v1297 = vld [vmem:[%s1243 + $0x1a8] sm:$0xff]
        %v1298 = vld [vmem:[%s1243 + $0x1b0] sm:$0xff]
        %v1299 = vld [vmem:[%s1243 + $0x1b8] sm:$0xff]
        %v1300 = vld [vmem:[%s1243 + $0x1c0] sm:$0xff]
        %v1301 = vld [vmem:[%s1243 + $0x1c8] sm:$0xff]
        %v1302 = vld [vmem:[%s1243 + $0x1d0] sm:$0xff]
        %v1303 = vld [vmem:[%s1243 + $0x1d8] sm:$0xff]
        %v1304 = vld [vmem:[%s1243 + $0x1e0] sm:$0xff]
        %v1305 = vld [vmem:[%s1243 + $0x1e8] sm:$0xff]
        %v1306 = vld [vmem:[%s1243 + $0x1f0] sm:$0xff]
        %v1307 = vld [vmem:[%s1243 + $0x1f8] sm:$0xff]
        %1308 = vmatpush.msra.mxu0 %v1259
        %1309 = vmatpush.msra.mxu0 %v1258
        %1310 = vmatpush.msra.mxu0 %v1257
        %1311 = vmatpush.msra.mxu0 %v1256
        %1312 = vmatpush.msra.mxu0 %v1255
        %1313 = vmatpush.msra.mxu0 %v1254
        %1314 = vmatpush.msra.mxu0 %v1253
        %1315 = vmatpush.msra.mxu0 %v1252
        %1316 = vmatpush.msra.mxu0 %v1251
        %1317 = vmatpush.msra.mxu0 %v1250
        %1318 = vmatpush.msra.mxu0 %v1249
        %1319 = vmatpush.msra.mxu0 %v1248
        %1320 = vmatpush.msra.mxu0 %v1247
        %1321 = vmatpush.msra.mxu0 %v1246
        %1322 = vmatpush.msra.mxu0 %v1245
        %1323 = vmatpush.msra.mxu0 %v1244
        %1324 = vmatmul.f32.gmra.mxu0 %v1115
        %v1325 = vpop.f32.mrf.mxu0
        %v1326 = vadd.f32 %v629, %v1325
        %1327 = vmatmul.f32.gmra.mxu0 %v1116
        %v1328 = vpop.f32.mrf.mxu0
        %v1329 = vadd.f32 %v629, %v1328
        %1330 = vmatmul.f32.gmra.mxu0 %v1117
        %v1331 = vpop.f32.mrf.mxu0
        %v1332 = vadd.f32 %v629, %v1331
        %1333 = vmatmul.f32.gmra.mxu0 %v1118
        %v1334 = vpop.f32.mrf.mxu0
        %v1335 = vadd.f32 %v629, %v1334
        %1336 = vmatmul.f32.gmra.mxu0 %v1119
        %v1337 = vpop.f32.mrf.mxu0
        %v1338 = vadd.f32 %v629, %v1337
        %1339 = vmatmul.f32.gmra.mxu0 %v1120
        %v1340 = vpop.f32.mrf.mxu0
        %v1341 = vadd.f32 %v629, %v1340
        %1342 = vmatmul.f32.gmra.mxu0 %v1121
        %v1343 = vpop.f32.mrf.mxu0
        %v1344 = vadd.f32 %v629, %v1343
        %1345 = vmatmul.f32.gmra.mxu0 %v1122
        %v1346 = vpop.f32.mrf.mxu0
        %v1347 = vadd.f32 %v629, %v1346
        %1348 = vmatmul.f32.gmra.mxu0 %v1123
        %v1349 = vpop.f32.mrf.mxu0
        %v1350 = vadd.f32 %v629, %v1349
        %1351 = vmatmul.f32.gmra.mxu0 %v1124
        %v1352 = vpop.f32.mrf.mxu0
        %v1353 = vadd.f32 %v629, %v1352
        %1354 = vmatmul.f32.gmra.mxu0 %v1125
        %v1355 = vpop.f32.mrf.mxu0
        %v1356 = vadd.f32 %v629, %v1355
        %1357 = vmatmul.f32.gmra.mxu0 %v1126
        %v1358 = vpop.f32.mrf.mxu0
        %v1359 = vadd.f32 %v629, %v1358
        %1360 = vmatmul.f32.gmra.mxu0 %v1127
        %v1361 = vpop.f32.mrf.mxu0
        %v1362 = vadd.f32 %v629, %v1361
        %1363 = vmatmul.f32.gmra.mxu0 %v1128
        %v1364 = vpop.f32.mrf.mxu0
        %v1365 = vadd.f32 %v629, %v1364
        %1366 = vmatmul.f32.gmra.mxu0 %v1129
        %v1367 = vpop.f32.mrf.mxu0
        %v1368 = vadd.f32 %v629, %v1367
        %1369 = vmatmul.f32.gmra.mxu0 %v1130
        %v1370 = vpop.f32.mrf.mxu0
        %v1371 = vadd.f32 %v629, %v1370
        %1372 = vmatmul.f32.gmra.mxu0 %v1131
        %v1373 = vpop.f32.mrf.mxu0
        %v1374 = vadd.f32 %v629, %v1373
        %1375 = vmatmul.f32.gmra.mxu0 %v1132
        %v1376 = vpop.f32.mrf.mxu0
        %v1377 = vadd.f32 %v629, %v1376
        %1378 = vmatmul.f32.gmra.mxu0 %v1133
        %v1379 = vpop.f32.mrf.mxu0
        %v1380 = vadd.f32 %v629, %v1379
        %1381 = vmatmul.f32.gmra.mxu0 %v1134
        %v1382 = vpop.f32.mrf.mxu0
        %v1383 = vadd.f32 %v629, %v1382
        %1384 = vmatmul.f32.gmra.mxu0 %v1135
        %v1385 = vpop.f32.mrf.mxu0
        %v1386 = vadd.f32 %v629, %v1385
        %1387 = vmatmul.f32.gmra.mxu0 %v1136
        %v1388 = vpop.f32.mrf.mxu0
        %v1389 = vadd.f32 %v629, %v1388
        %1390 = vmatmul.f32.gmra.mxu0 %v1137
        %v1391 = vpop.f32.mrf.mxu0
        %v1392 = vadd.f32 %v629, %v1391
        %1393 = vmatmul.f32.gmra.mxu0 %v1138
        %v1394 = vpop.f32.mrf.mxu0
        %v1395 = vadd.f32 %v629, %v1394
        %1396 = vmatmul.f32.gmra.mxu0 %v1139
        %v1397 = vpop.f32.mrf.mxu0
        %v1398 = vadd.f32 %v629, %v1397
        %1399 = vmatmul.f32.gmra.mxu0 %v1140
        %v1400 = vpop.f32.mrf.mxu0
        %v1401 = vadd.f32 %v629, %v1400
        %1402 = vmatmul.f32.gmra.mxu0 %v1141
        %v1403 = vpop.f32.mrf.mxu0
        %v1404 = vadd.f32 %v629, %v1403
        %1405 = vmatmul.f32.gmra.mxu0 %v1142
        %v1406 = vpop.f32.mrf.mxu0
        %v1407 = vadd.f32 %v629, %v1406
        %1408 = vmatmul.f32.gmra.mxu0 %v1143
        %v1409 = vpop.f32.mrf.mxu0
        %v1410 = vadd.f32 %v629, %v1409
        %1411 = vmatmul.f32.gmra.mxu0 %v1144
        %v1412 = vpop.f32.mrf.mxu0
        %v1413 = vadd.f32 %v629, %v1412
        %1414 = vmatmul.f32.gmra.mxu0 %v1145
        %v1415 = vpop.f32.mrf.mxu0
        %v1416 = vadd.f32 %v629, %v1415
        %1417 = vmatmul.f32.gmra.mxu0 %v1146
        %v1418 = vpop.f32.mrf.mxu0
        %v1419 = vadd.f32 %v629, %v1418
        %1420 = vdwg.mxu0
        %1421 = vmatpush.msra.mxu0 %v1275
        %1422 = vmatpush.msra.mxu0 %v1274
        %1423 = vmatpush.msra.mxu0 %v1273
        %1424 = vmatpush.msra.mxu0 %v1272
        %1425 = vmatpush.msra.mxu0 %v1271
        %1426 = vmatpush.msra.mxu0 %v1270
        %1427 = vmatpush.msra.mxu0 %v1269
        %1428 = vmatpush.msra.mxu0 %v1268
        %1429 = vmatpush.msra.mxu0 %v1267
        %1430 = vmatpush.msra.mxu0 %v1266
        %1431 = vmatpush.msra.mxu0 %v1265
        %1432 = vmatpush.msra.mxu0 %v1264
        %1433 = vmatpush.msra.mxu0 %v1263
        %1434 = vmatpush.msra.mxu0 %v1262
        %1435 = vmatpush.msra.mxu0 %v1261
        %1436 = vmatpush.msra.mxu0 %v1260
        %1437 = vmatmul.f32.gmra.mxu0 %v1147
        %v1438 = vpop.f32.mrf.mxu0
        %v1439 = vadd.f32 %v1326, %v1438
        %1440 = vmatmul.f32.gmra.mxu0 %v1148
        %v1441 = vpop.f32.mrf.mxu0
        %v1442 = vadd.f32 %v1329, %v1441
        %1443 = vmatmul.f32.gmra.mxu0 %v1149
        %v1444 = vpop.f32.mrf.mxu0
        %v1445 = vadd.f32 %v1332, %v1444
        %1446 = vmatmul.f32.gmra.mxu0 %v1150
        %v1447 = vpop.f32.mrf.mxu0
        %v1448 = vadd.f32 %v1335, %v1447
        %1449 = vmatmul.f32.gmra.mxu0 %v1151
        %v1450 = vpop.f32.mrf.mxu0
        %v1451 = vadd.f32 %v1338, %v1450
        %1452 = vmatmul.f32.gmra.mxu0 %v1152
        %v1453 = vpop.f32.mrf.mxu0
        %v1454 = vadd.f32 %v1341, %v1453
        %1455 = vmatmul.f32.gmra.mxu0 %v1153
        %v1456 = vpop.f32.mrf.mxu0
        %v1457 = vadd.f32 %v1344, %v1456
        %1458 = vmatmul.f32.gmra.mxu0 %v1154
        %v1459 = vpop.f32.mrf.mxu0
        %v1460 = vadd.f32 %v1347, %v1459
        %1461 = vmatmul.f32.gmra.mxu0 %v1155
        %v1462 = vpop.f32.mrf.mxu0
        %v1463 = vadd.f32 %v1350, %v1462
        %1464 = vmatmul.f32.gmra.mxu0 %v1156
        %v1465 = vpop.f32.mrf.mxu0
        %v1466 = vadd.f32 %v1353, %v1465
        %1467 = vmatmul.f32.gmra.mxu0 %v1157
        %v1468 = vpop.f32.mrf.mxu0
        %v1469 = vadd.f32 %v1356, %v1468
        %1470 = vmatmul.f32.gmra.mxu0 %v1158
        %v1471 = vpop.f32.mrf.mxu0
        %v1472 = vadd.f32 %v1359, %v1471
        %1473 = vmatmul.f32.gmra.mxu0 %v1159
        %v1474 = vpop.f32.mrf.mxu0
        %v1475 = vadd.f32 %v1362, %v1474
        %1476 = vmatmul.f32.gmra.mxu0 %v1160
        %v1477 = vpop.f32.mrf.mxu0
        %v1478 = vadd.f32 %v1365, %v1477
        %1479 = vmatmul.f32.gmra.mxu0 %v1161
        %v1480 = vpop.f32.mrf.mxu0
        %v1481 = vadd.f32 %v1368, %v1480
        %1482 = vmatmul.f32.gmra.mxu0 %v1162
        %v1483 = vpop.f32.mrf.mxu0
        %v1484 = vadd.f32 %v1371, %v1483
        %1485 = vmatmul.f32.gmra.mxu0 %v1163
        %v1486 = vpop.f32.mrf.mxu0
        %v1487 = vadd.f32 %v1374, %v1486
        %1488 = vmatmul.f32.gmra.mxu0 %v1164
        %v1489 = vpop.f32.mrf.mxu0
        %v1490 = vadd.f32 %v1377, %v1489
        %1491 = vmatmul.f32.gmra.mxu0 %v1165
        %v1492 = vpop.f32.mrf.mxu0
        %v1493 = vadd.f32 %v1380, %v1492
        %1494 = vmatmul.f32.gmra.mxu0 %v1166
        %v1495 = vpop.f32.mrf.mxu0
        %v1496 = vadd.f32 %v1383, %v1495
        %1497 = vmatmul.f32.gmra.mxu0 %v1167
        %v1498 = vpop.f32.mrf.mxu0
        %v1499 = vadd.f32 %v1386, %v1498
        %1500 = vmatmul.f32.gmra.mxu0 %v1168
        %v1501 = vpop.f32.mrf.mxu0
        %v1502 = vadd.f32 %v1389, %v1501
        %1503 = vmatmul.f32.gmra.mxu0 %v1169
        %v1504 = vpop.f32.mrf.mxu0
        %v1505 = vadd.f32 %v1392, %v1504
        %1506 = vmatmul.f32.gmra.mxu0 %v1170
        %v1507 = vpop.f32.mrf.mxu0
        %v1508 = vadd.f32 %v1395, %v1507
        %1509 = vmatmul.f32.gmra.mxu0 %v1171
        %v1510 = vpop.f32.mrf.mxu0
        %v1511 = vadd.f32 %v1398, %v1510
        %1512 = vmatmul.f32.gmra.mxu0 %v1172
        %v1513 = vpop.f32.mrf.mxu0
        %v1514 = vadd.f32 %v1401, %v1513
        %1515 = vmatmul.f32.gmra.mxu0 %v1173
        %v1516 = vpop.f32.mrf.mxu0
        %v1517 = vadd.f32 %v1404, %v1516
        %1518 = vmatmul.f32.gmra.mxu0 %v1174
        %v1519 = vpop.f32.mrf.mxu0
        %v1520 = vadd.f32 %v1407, %v1519
        %1521 = vmatmul.f32.gmra.mxu0 %v1175
        %v1522 = vpop.f32.mrf.mxu0
        %v1523 = vadd.f32 %v1410, %v1522
        %1524 = vmatmul.f32.gmra.mxu0 %v1176
        %v1525 = vpop.f32.mrf.mxu0
        %v1526 = vadd.f32 %v1413, %v1525
        %1527 = vmatmul.f32.gmra.mxu0 %v1177
        %v1528 = vpop.f32.mrf.mxu0
        %v1529 = vadd.f32 %v1416, %v1528
        %1530 = vmatmul.f32.gmra.mxu0 %v1178
        %v1531 = vpop.f32.mrf.mxu0
        %v1532 = vadd.f32 %v1419, %v1531
        %1533 = vdwg.mxu0
        %1534 = vmatpush.msra.mxu0 %v1291
        %1535 = vmatpush.msra.mxu0 %v1290
        %1536 = vmatpush.msra.mxu0 %v1289
        %1537 = vmatpush.msra.mxu0 %v1288
        %1538 = vmatpush.msra.mxu0 %v1287
        %1539 = vmatpush.msra.mxu0 %v1286
        %1540 = vmatpush.msra.mxu0 %v1285
        %1541 = vmatpush.msra.mxu0 %v1284
        %1542 = vmatpush.msra.mxu0 %v1283
        %1543 = vmatpush.msra.mxu0 %v1282
        %1544 = vmatpush.msra.mxu0 %v1281
        %1545 = vmatpush.msra.mxu0 %v1280
        %1546 = vmatpush.msra.mxu0 %v1279
        %1547 = vmatpush.msra.mxu0 %v1278
        %1548 = vmatpush.msra.mxu0 %v1277
        %1549 = vmatpush.msra.mxu0 %v1276
        %1550 = vmatmul.f32.gmra.mxu0 %v1179
        %v1551 = vpop.f32.mrf.mxu0
        %v1552 = vadd.f32 %v1439, %v1551
        %1553 = vmatmul.f32.gmra.mxu0 %v1180
        %v1554 = vpop.f32.mrf.mxu0
        %v1555 = vadd.f32 %v1442, %v1554
        %1556 = vmatmul.f32.gmra.mxu0 %v1181
        %v1557 = vpop.f32.mrf.mxu0
        %v1558 = vadd.f32 %v1445, %v1557
        %1559 = vmatmul.f32.gmra.mxu0 %v1182
        %v1560 = vpop.f32.mrf.mxu0
        %v1561 = vadd.f32 %v1448, %v1560
        %1562 = vmatmul.f32.gmra.mxu0 %v1183
        %v1563 = vpop.f32.mrf.mxu0
        %v1564 = vadd.f32 %v1451, %v1563
        %1565 = vmatmul.f32.gmra.mxu0 %v1184
        %v1566 = vpop.f32.mrf.mxu0
        %v1567 = vadd.f32 %v1454, %v1566
        %1568 = vmatmul.f32.gmra.mxu0 %v1185
        %v1569 = vpop.f32.mrf.mxu0
        %v1570 = vadd.f32 %v1457, %v1569
        %1571 = vmatmul.f32.gmra.mxu0 %v1186
        %v1572 = vpop.f32.mrf.mxu0
        %v1573 = vadd.f32 %v1460, %v1572
        %1574 = vmatmul.f32.gmra.mxu0 %v1187
        %v1575 = vpop.f32.mrf.mxu0
        %v1576 = vadd.f32 %v1463, %v1575
        %1577 = vmatmul.f32.gmra.mxu0 %v1188
        %v1578 = vpop.f32.mrf.mxu0
        %v1579 = vadd.f32 %v1466, %v1578
        %1580 = vmatmul.f32.gmra.mxu0 %v1189
        %v1581 = vpop.f32.mrf.mxu0
        %v1582 = vadd.f32 %v1469, %v1581
        %1583 = vmatmul.f32.gmra.mxu0 %v1190
        %v1584 = vpop.f32.mrf.mxu0
        %v1585 = vadd.f32 %v1472, %v1584
        %1586 = vmatmul.f32.gmra.mxu0 %v1191
        %v1587 = vpop.f32.mrf.mxu0
        %v1588 = vadd.f32 %v1475, %v1587
        %1589 = vmatmul.f32.gmra.mxu0 %v1192
        %v1590 = vpop.f32.mrf.mxu0
        %v1591 = vadd.f32 %v1478, %v1590
        %1592 = vmatmul.f32.gmra.mxu0 %v1193
        %v1593 = vpop.f32.mrf.mxu0
        %v1594 = vadd.f32 %v1481, %v1593
        %1595 = vmatmul.f32.gmra.mxu0 %v1194
        %v1596 = vpop.f32.mrf.mxu0
        %v1597 = vadd.f32 %v1484, %v1596
        %1598 = vmatmul.f32.gmra.mxu0 %v1195
        %v1599 = vpop.f32.mrf.mxu0
        %v1600 = vadd.f32 %v1487, %v1599
        %1601 = vmatmul.f32.gmra.mxu0 %v1196
        %v1602 = vpop.f32.mrf.mxu0
        %v1603 = vadd.f32 %v1490, %v1602
        %1604 = vmatmul.f32.gmra.mxu0 %v1197
        %v1605 = vpop.f32.mrf.mxu0
        %v1606 = vadd.f32 %v1493, %v1605
        %1607 = vmatmul.f32.gmra.mxu0 %v1198
        %v1608 = vpop.f32.mrf.mxu0
        %v1609 = vadd.f32 %v1496, %v1608
        %1610 = vmatmul.f32.gmra.mxu0 %v1199
        %v1611 = vpop.f32.mrf.mxu0
        %v1612 = vadd.f32 %v1499, %v1611
        %1613 = vmatmul.f32.gmra.mxu0 %v1200
        %v1614 = vpop.f32.mrf.mxu0
        %v1615 = vadd.f32 %v1502, %v1614
        %1616 = vmatmul.f32.gmra.mxu0 %v1201
        %v1617 = vpop.f32.mrf.mxu0
        %v1618 = vadd.f32 %v1505, %v1617
        %1619 = vmatmul.f32.gmra.mxu0 %v1202
        %v1620 = vpop.f32.mrf.mxu0
        %v1621 = vadd.f32 %v1508, %v1620
        %1622 = vmatmul.f32.gmra.mxu0 %v1203
        %v1623 = vpop.f32.mrf.mxu0
        %v1624 = vadd.f32 %v1511, %v1623
        %1625 = vmatmul.f32.gmra.mxu0 %v1204
        %v1626 = vpop.f32.mrf.mxu0
        %v1627 = vadd.f32 %v1514, %v1626
        %1628 = vmatmul.f32.gmra.mxu0 %v1205
        %v1629 = vpop.f32.mrf.mxu0
        %v1630 = vadd.f32 %v1517, %v1629
        %1631 = vmatmul.f32.gmra.mxu0 %v1206
        %v1632 = vpop.f32.mrf.mxu0
        %v1633 = vadd.f32 %v1520, %v1632
        %1634 = vmatmul.f32.gmra.mxu0 %v1207
        %v1635 = vpop.f32.mrf.mxu0
        %v1636 = vadd.f32 %v1523, %v1635
        %1637 = vmatmul.f32.gmra.mxu0 %v1208
        %v1638 = vpop.f32.mrf.mxu0
        %v1639 = vadd.f32 %v1526, %v1638
        %1640 = vmatmul.f32.gmra.mxu0 %v1209
        %v1641 = vpop.f32.mrf.mxu0
        %v1642 = vadd.f32 %v1529, %v1641
        %1643 = vmatmul.f32.gmra.mxu0 %v1210
        %v1644 = vpop.f32.mrf.mxu0
        %v1645 = vadd.f32 %v1532, %v1644
        %1646 = vdwg.mxu0
        %1647 = vmatpush.msra.mxu0 %v1307
        %1648 = vmatpush.msra.mxu0 %v1306
        %1649 = vmatpush.msra.mxu0 %v1305
        %1650 = vmatpush.msra.mxu0 %v1304
        %1651 = vmatpush.msra.mxu0 %v1303
        %1652 = vmatpush.msra.mxu0 %v1302
        %1653 = vmatpush.msra.mxu0 %v1301
        %1654 = vmatpush.msra.mxu0 %v1300
        %1655 = vmatpush.msra.mxu0 %v1299
        %1656 = vmatpush.msra.mxu0 %v1298
        %1657 = vmatpush.msra.mxu0 %v1297
        %1658 = vmatpush.msra.mxu0 %v1296
        %1659 = vmatpush.msra.mxu0 %v1295
        %1660 = vmatpush.msra.mxu0 %v1294
        %1661 = vmatpush.msra.mxu0 %v1293
        %1662 = vmatpush.msra.mxu0 %v1292
        %1663 = vmatmul.f32.gmra.mxu0 %v1211
        %v1664 = vpop.f32.mrf.mxu0
        %v1665 = vadd.f32 %v1552, %v1664
        %1666 = vmatmul.f32.gmra.mxu0 %v1212
        %v1667 = vpop.f32.mrf.mxu0
        %v1668 = vadd.f32 %v1555, %v1667
        %1669 = vmatmul.f32.gmra.mxu0 %v1213
        %v1670 = vpop.f32.mrf.mxu0
        %v1671 = vadd.f32 %v1558, %v1670
        %1672 = vmatmul.f32.gmra.mxu0 %v1214
        %v1673 = vpop.f32.mrf.mxu0
        %v1674 = vadd.f32 %v1561, %v1673
        %1675 = vmatmul.f32.gmra.mxu0 %v1215
        %v1676 = vpop.f32.mrf.mxu0
        %v1677 = vadd.f32 %v1564, %v1676
        %1678 = vmatmul.f32.gmra.mxu0 %v1216
        %v1679 = vpop.f32.mrf.mxu0
        %v1680 = vadd.f32 %v1567, %v1679
        %1681 = vmatmul.f32.gmra.mxu0 %v1217
        %v1682 = vpop.f32.mrf.mxu0
        %v1683 = vadd.f32 %v1570, %v1682
        %1684 = vmatmul.f32.gmra.mxu0 %v1218
        %v1685 = vpop.f32.mrf.mxu0
        %v1686 = vadd.f32 %v1573, %v1685
        %1687 = vmatmul.f32.gmra.mxu0 %v1219
        %v1688 = vpop.f32.mrf.mxu0
        %v1689 = vadd.f32 %v1576, %v1688
        %1690 = vmatmul.f32.gmra.mxu0 %v1220
        %v1691 = vpop.f32.mrf.mxu0
        %v1692 = vadd.f32 %v1579, %v1691
        %1693 = vmatmul.f32.gmra.mxu0 %v1221
        %v1694 = vpop.f32.mrf.mxu0
        %v1695 = vadd.f32 %v1582, %v1694
        %1696 = vmatmul.f32.gmra.mxu0 %v1222
        %v1697 = vpop.f32.mrf.mxu0
        %v1698 = vadd.f32 %v1585, %v1697
        %1699 = vmatmul.f32.gmra.mxu0 %v1223
        %v1700 = vpop.f32.mrf.mxu0
        %v1701 = vadd.f32 %v1588, %v1700
        %1702 = vmatmul.f32.gmra.mxu0 %v1224
        %v1703 = vpop.f32.mrf.mxu0
        %v1704 = vadd.f32 %v1591, %v1703
        %1705 = vmatmul.f32.gmra.mxu0 %v1225
        %v1706 = vpop.f32.mrf.mxu0
        %v1707 = vadd.f32 %v1594, %v1706
        %1708 = vmatmul.f32.gmra.mxu0 %v1226
        %v1709 = vpop.f32.mrf.mxu0
        %v1710 = vadd.f32 %v1597, %v1709
        %1711 = vmatmul.f32.gmra.mxu0 %v1227
        %v1712 = vpop.f32.mrf.mxu0
        %v1713 = vadd.f32 %v1600, %v1712
        %1714 = vmatmul.f32.gmra.mxu0 %v1228
        %v1715 = vpop.f32.mrf.mxu0
        %v1716 = vadd.f32 %v1603, %v1715
        %1717 = vmatmul.f32.gmra.mxu0 %v1229
        %v1718 = vpop.f32.mrf.mxu0
        %v1719 = vadd.f32 %v1606, %v1718
        %1720 = vmatmul.f32.gmra.mxu0 %v1230
        %v1721 = vpop.f32.mrf.mxu0
        %v1722 = vadd.f32 %v1609, %v1721
        %1723 = vmatmul.f32.gmra.mxu0 %v1231
        %v1724 = vpop.f32.mrf.mxu0
        %v1725 = vadd.f32 %v1612, %v1724
        %1726 = vmatmul.f32.gmra.mxu0 %v1232
        %v1727 = vpop.f32.mrf.mxu0
        %v1728 = vadd.f32 %v1615, %v1727
        %1729 = vmatmul.f32.gmra.mxu0 %v1233
        %v1730 = vpop.f32.mrf.mxu0
        %v1731 = vadd.f32 %v1618, %v1730
        %1732 = vmatmul.f32.gmra.mxu0 %v1234
        %v1733 = vpop.f32.mrf.mxu0
        %v1734 = vadd.f32 %v1621, %v1733
        %1735 = vmatmul.f32.gmra.mxu0 %v1235
        %v1736 = vpop.f32.mrf.mxu0
        %v1737 = vadd.f32 %v1624, %v1736
        %1738 = vmatmul.f32.gmra.mxu0 %v1236
        %v1739 = vpop.f32.mrf.mxu0
        %v1740 = vadd.f32 %v1627, %v1739
        %1741 = vmatmul.f32.gmra.mxu0 %v1237
        %v1742 = vpop.f32.mrf.mxu0
        %v1743 = vadd.f32 %v1630, %v1742
        %1744 = vmatmul.f32.gmra.mxu0 %v1238
        %v1745 = vpop.f32.mrf.mxu0
        %v1746 = vadd.f32 %v1633, %v1745
        %1747 = vmatmul.f32.gmra.mxu0 %v1239
        %v1748 = vpop.f32.mrf.mxu0
        %v1749 = vadd.f32 %v1636, %v1748
        %1750 = vmatmul.f32.gmra.mxu0 %v1240
        %v1751 = vpop.f32.mrf.mxu0
        %v1752 = vadd.f32 %v1639, %v1751
        %1753 = vmatmul.f32.gmra.mxu0 %v1241
        %v1754 = vpop.f32.mrf.mxu0
        %v1755 = vadd.f32 %v1642, %v1754
        %1756 = vmatmul.f32.gmra.mxu0 %v1242
        %v1757 = vpop.f32.mrf.mxu0
        %v1758 = vadd.f32 %v1645, %v1757
        %1759 = vdwg.mxu0
        %1760 = vst [vmem:[%s314 + $0x8] sm:$0xff] %v1665
        %1761 = vst [vmem:[%s314 + $0x28] sm:$0xff] %v1668
        %1762 = vst [vmem:[%s314 + $0x48] sm:$0xff] %v1671
        %1763 = vst [vmem:[%s314 + $0x68] sm:$0xff] %v1674
        %1764 = vst [vmem:[%s314 + $0x88] sm:$0xff] %v1677
        %1765 = vst [vmem:[%s314 + $0xa8] sm:$0xff] %v1680
        %1766 = vst [vmem:[%s314 + $0xc8] sm:$0xff] %v1683
        %1767 = vst [vmem:[%s314 + $0xe8] sm:$0xff] %v1686
        %1768 = vst [vmem:[%s314 + $0x108] sm:$0xff] %v1689
        %1769 = vst [vmem:[%s314 + $0x128] sm:$0xff] %v1692
        %1770 = vst [vmem:[%s314 + $0x148] sm:$0xff] %v1695
        %1771 = vst [vmem:[%s314 + $0x168] sm:$0xff] %v1698
        %1772 = vst [vmem:[%s314 + $0x188] sm:$0xff] %v1701
        %1773 = vst [vmem:[%s314 + $0x1a8] sm:$0xff] %v1704
        %1774 = vst [vmem:[%s314 + $0x1c8] sm:$0xff] %v1707
        %1775 = vst [vmem:[%s314 + $0x1e8] sm:$0xff] %v1710
        %1776 = vst [vmem:[%s314 + $0x208] sm:$0xff] %v1713
        %1777 = vst [vmem:[%s314 + $0x228] sm:$0xff] %v1716
        %1778 = vst [vmem:[%s314 + $0x248] sm:$0xff] %v1719
        %1779 = vst [vmem:[%s314 + $0x268] sm:$0xff] %v1722
        %1780 = vst [vmem:[%s314 + $0x288] sm:$0xff] %v1725
        %1781 = vst [vmem:[%s314 + $0x2a8] sm:$0xff] %v1728
        %1782 = vst [vmem:[%s314 + $0x2c8] sm:$0xff] %v1731
        %1783 = vst [vmem:[%s314 + $0x2e8] sm:$0xff] %v1734
        %1784 = vst [vmem:[%s314 + $0x308] sm:$0xff] %v1737
        %1785 = vst [vmem:[%s314 + $0x328] sm:$0xff] %v1740
        %1786 = vst [vmem:[%s314 + $0x348] sm:$0xff] %v1743
        %1787 = vst [vmem:[%s314 + $0x368] sm:$0xff] %v1746
        %1788 = vst [vmem:[%s314 + $0x388] sm:$0xff] %v1749
        %1789 = vst [vmem:[%s314 + $0x3a8] sm:$0xff] %v1752
        %1790 = vst [vmem:[%s314 + $0x3c8] sm:$0xff] %v1755
        %1791 = vst [vmem:[%s314 + $0x3e8] sm:$0xff] %v1758
        %v1792 = vld [vmem:[%s499] sm:$0xff]
        %v1793 = vld [vmem:[%s499 + $0x8] sm:$0xff]
        %v1794 = vld [vmem:[%s499 + $0x18] sm:$0xff]
        %v1795 = vld [vmem:[%s499 + $0x20] sm:$0xff]
        %v1796 = vld [vmem:[%s499 + $0x30] sm:$0xff]
        %v1797 = vld [vmem:[%s499 + $0x38] sm:$0xff]
        %v1798 = vld [vmem:[%s499 + $0x48] sm:$0xff]
        %v1799 = vld [vmem:[%s499 + $0x50] sm:$0xff]
        %v1800 = vld [vmem:[%s499 + $0x60] sm:$0xff]
        %v1801 = vld [vmem:[%s499 + $0x68] sm:$0xff]
        %v1802 = vld [vmem:[%s499 + $0x78] sm:$0xff]
        %v1803 = vld [vmem:[%s499 + $0x80] sm:$0xff]
        %v1804 = vld [vmem:[%s499 + $0x90] sm:$0xff]
        %v1805 = vld [vmem:[%s499 + $0x98] sm:$0xff]
        %v1806 = vld [vmem:[%s499 + $0xa8] sm:$0xff]
        %v1807 = vld [vmem:[%s499 + $0xb0] sm:$0xff]
        %v1808 = vld [vmem:[%s499 + $0xc0] sm:$0xff]
        %v1809 = vld [vmem:[%s499 + $0xc8] sm:$0xff]
        %v1810 = vld [vmem:[%s499 + $0xd8] sm:$0xff]
        %v1811 = vld [vmem:[%s499 + $0xe0] sm:$0xff]
        %v1812 = vld [vmem:[%s499 + $0xf0] sm:$0xff]
        %v1813 = vld [vmem:[%s499 + $0xf8] sm:$0xff]
        %v1814 = vld [vmem:[%s499 + $0x108] sm:$0xff]
        %v1815 = vld [vmem:[%s499 + $0x110] sm:$0xff]
        %v1816 = vld [vmem:[%s499 + $0x120] sm:$0xff]
        %v1817 = vld [vmem:[%s499 + $0x128] sm:$0xff]
        %v1818 = vld [vmem:[%s499 + $0x138] sm:$0xff]
        %v1819 = vld [vmem:[%s499 + $0x140] sm:$0xff]
        %v1820 = vld [vmem:[%s499 + $0x150] sm:$0xff]
        %v1821 = vld [vmem:[%s499 + $0x158] sm:$0xff]
        %v1822 = vld [vmem:[%s499 + $0x168] sm:$0xff]
        %v1823 = vld [vmem:[%s499 + $0x170] sm:$0xff]
        %v1824 = vld [vmem:[%s499 + $0x1] sm:$0xff]
        %v1825 = vld [vmem:[%s499 + $0x9] sm:$0xff]
        %v1826 = vld [vmem:[%s499 + $0x19] sm:$0xff]
        %v1827 = vld [vmem:[%s499 + $0x21] sm:$0xff]
        %v1828 = vld [vmem:[%s499 + $0x31] sm:$0xff]
        %v1829 = vld [vmem:[%s499 + $0x39] sm:$0xff]
        %v1830 = vld [vmem:[%s499 + $0x49] sm:$0xff]
        %v1831 = vld [vmem:[%s499 + $0x51] sm:$0xff]
        %v1832 = vld [vmem:[%s499 + $0x61] sm:$0xff]
        %v1833 = vld [vmem:[%s499 + $0x69] sm:$0xff]
        %v1834 = vld [vmem:[%s499 + $0x79] sm:$0xff]
        %v1835 = vld [vmem:[%s499 + $0x81] sm:$0xff]
        %v1836 = vld [vmem:[%s499 + $0x91] sm:$0xff]
        %v1837 = vld [vmem:[%s499 + $0x99] sm:$0xff]
        %v1838 = vld [vmem:[%s499 + $0xa9] sm:$0xff]
        %v1839 = vld [vmem:[%s499 + $0xb1] sm:$0xff]
        %v1840 = vld [vmem:[%s499 + $0xc1] sm:$0xff]
        %v1841 = vld [vmem:[%s499 + $0xc9] sm:$0xff]
        %v1842 = vld [vmem:[%s499 + $0xd9] sm:$0xff]
        %v1843 = vld [vmem:[%s499 + $0xe1] sm:$0xff]
        %v1844 = vld [vmem:[%s499 + $0xf1] sm:$0xff]
        %v1845 = vld [vmem:[%s499 + $0xf9] sm:$0xff]
        %v1846 = vld [vmem:[%s499 + $0x109] sm:$0xff]
        %v1847 = vld [vmem:[%s499 + $0x111] sm:$0xff]
        %v1848 = vld [vmem:[%s499 + $0x121] sm:$0xff]
        %v1849 = vld [vmem:[%s499 + $0x129] sm:$0xff]
        %v1850 = vld [vmem:[%s499 + $0x139] sm:$0xff]
        %v1851 = vld [vmem:[%s499 + $0x141] sm:$0xff]
        %v1852 = vld [vmem:[%s499 + $0x151] sm:$0xff]
        %v1853 = vld [vmem:[%s499 + $0x159] sm:$0xff]
        %v1854 = vld [vmem:[%s499 + $0x169] sm:$0xff]
        %v1855 = vld [vmem:[%s499 + $0x171] sm:$0xff]
        %s1856 = scalar_lea.vmem [#allocation2], 48
        %v1857 = vld [vmem:[%s1856] sm:$0xff]
        %v1858 = vld [vmem:[%s1856 + $0x8] sm:$0xff]
        %v1859 = vld [vmem:[%s1856 + $0x18] sm:$0xff]
        %v1860 = vld [vmem:[%s1856 + $0x20] sm:$0xff]
        %v1861 = vld [vmem:[%s1856 + $0x30] sm:$0xff]
        %v1862 = vld [vmem:[%s1856 + $0x38] sm:$0xff]
        %v1863 = vld [vmem:[%s1856 + $0x48] sm:$0xff]
        %v1864 = vld [vmem:[%s1856 + $0x50] sm:$0xff]
        %v1865 = vld [vmem:[%s1856 + $0x60] sm:$0xff]
        %v1866 = vld [vmem:[%s1856 + $0x68] sm:$0xff]
        %v1867 = vld [vmem:[%s1856 + $0x78] sm:$0xff]
        %v1868 = vld [vmem:[%s1856 + $0x80] sm:$0xff]
        %v1869 = vld [vmem:[%s1856 + $0x90] sm:$0xff]
        %v1870 = vld [vmem:[%s1856 + $0x98] sm:$0xff]
        %v1871 = vld [vmem:[%s1856 + $0xa8] sm:$0xff]
        %v1872 = vld [vmem:[%s1856 + $0xb0] sm:$0xff]
        %v1873 = vld [vmem:[%s1856 + $0xc0] sm:$0xff]
        %v1874 = vld [vmem:[%s1856 + $0xc8] sm:$0xff]
        %v1875 = vld [vmem:[%s1856 + $0xd8] sm:$0xff]
        %v1876 = vld [vmem:[%s1856 + $0xe0] sm:$0xff]
        %v1877 = vld [vmem:[%s1856 + $0xf0] sm:$0xff]
        %v1878 = vld [vmem:[%s1856 + $0xf8] sm:$0xff]
        %v1879 = vld [vmem:[%s1856 + $0x108] sm:$0xff]
        %v1880 = vld [vmem:[%s1856 + $0x110] sm:$0xff]
        %v1881 = vld [vmem:[%s1856 + $0x120] sm:$0xff]
        %v1882 = vld [vmem:[%s1856 + $0x128] sm:$0xff]
        %v1883 = vld [vmem:[%s1856 + $0x138] sm:$0xff]
        %v1884 = vld [vmem:[%s1856 + $0x140] sm:$0xff]
        %v1885 = vld [vmem:[%s1856 + $0x150] sm:$0xff]
        %v1886 = vld [vmem:[%s1856 + $0x158] sm:$0xff]
        %v1887 = vld [vmem:[%s1856 + $0x168] sm:$0xff]
        %v1888 = vld [vmem:[%s1856 + $0x170] sm:$0xff]
        %v1889 = vld [vmem:[%s1856 + $0x1] sm:$0xff]
        %v1890 = vld [vmem:[%s1856 + $0x9] sm:$0xff]
        %v1891 = vld [vmem:[%s1856 + $0x19] sm:$0xff]
        %v1892 = vld [vmem:[%s1856 + $0x21] sm:$0xff]
        %v1893 = vld [vmem:[%s1856 + $0x31] sm:$0xff]
        %v1894 = vld [vmem:[%s1856 + $0x39] sm:$0xff]
        %v1895 = vld [vmem:[%s1856 + $0x49] sm:$0xff]
        %v1896 = vld [vmem:[%s1856 + $0x51] sm:$0xff]
        %v1897 = vld [vmem:[%s1856 + $0x61] sm:$0xff]
        %v1898 = vld [vmem:[%s1856 + $0x69] sm:$0xff]
        %v1899 = vld [vmem:[%s1856 + $0x79] sm:$0xff]
        %v1900 = vld [vmem:[%s1856 + $0x81] sm:$0xff]
        %v1901 = vld [vmem:[%s1856 + $0x91] sm:$0xff]
        %v1902 = vld [vmem:[%s1856 + $0x99] sm:$0xff]
        %v1903 = vld [vmem:[%s1856 + $0xa9] sm:$0xff]
        %v1904 = vld [vmem:[%s1856 + $0xb1] sm:$0xff]
        %v1905 = vld [vmem:[%s1856 + $0xc1] sm:$0xff]
        %v1906 = vld [vmem:[%s1856 + $0xc9] sm:$0xff]
        %v1907 = vld [vmem:[%s1856 + $0xd9] sm:$0xff]
        %v1908 = vld [vmem:[%s1856 + $0xe1] sm:$0xff]
        %v1909 = vld [vmem:[%s1856 + $0xf1] sm:$0xff]
        %v1910 = vld [vmem:[%s1856 + $0xf9] sm:$0xff]
        %v1911 = vld [vmem:[%s1856 + $0x109] sm:$0xff]
        %v1912 = vld [vmem:[%s1856 + $0x111] sm:$0xff]
        %v1913 = vld [vmem:[%s1856 + $0x121] sm:$0xff]
        %v1914 = vld [vmem:[%s1856 + $0x129] sm:$0xff]
        %v1915 = vld [vmem:[%s1856 + $0x139] sm:$0xff]
        %v1916 = vld [vmem:[%s1856 + $0x141] sm:$0xff]
        %v1917 = vld [vmem:[%s1856 + $0x151] sm:$0xff]
        %v1918 = vld [vmem:[%s1856 + $0x159] sm:$0xff]
        %v1919 = vld [vmem:[%s1856 + $0x169] sm:$0xff]
        %v1920 = vld [vmem:[%s1856 + $0x171] sm:$0xff]
        %s1921 = scalar_lea.vmem [#allocation8], 1024
        %v1922 = vld [vmem:[%s1921] sm:$0xff]
        %v1923 = vld [vmem:[%s1921 + $0x8] sm:$0xff]
        %v1924 = vld [vmem:[%s1921 + $0x10] sm:$0xff]
        %v1925 = vld [vmem:[%s1921 + $0x18] sm:$0xff]
        %v1926 = vld [vmem:[%s1921 + $0x20] sm:$0xff]
        %v1927 = vld [vmem:[%s1921 + $0x28] sm:$0xff]
        %v1928 = vld [vmem:[%s1921 + $0x30] sm:$0xff]
        %v1929 = vld [vmem:[%s1921 + $0x38] sm:$0xff]
        %v1930 = vld [vmem:[%s1921 + $0x40] sm:$0xff]
        %v1931 = vld [vmem:[%s1921 + $0x48] sm:$0xff]
        %v1932 = vld [vmem:[%s1921 + $0x50] sm:$0xff]
        %v1933 = vld [vmem:[%s1921 + $0x58] sm:$0xff]
        %v1934 = vld [vmem:[%s1921 + $0x60] sm:$0xff]
        %v1935 = vld [vmem:[%s1921 + $0x68] sm:$0xff]
        %v1936 = vld [vmem:[%s1921 + $0x70] sm:$0xff]
        %v1937 = vld [vmem:[%s1921 + $0x78] sm:$0xff]
        %v1938 = vld [vmem:[%s1921 + $0x80] sm:$0xff]
        %v1939 = vld [vmem:[%s1921 + $0x88] sm:$0xff]
        %v1940 = vld [vmem:[%s1921 + $0x90] sm:$0xff]
        %v1941 = vld [vmem:[%s1921 + $0x98] sm:$0xff]
        %v1942 = vld [vmem:[%s1921 + $0xa0] sm:$0xff]
        %v1943 = vld [vmem:[%s1921 + $0xa8] sm:$0xff]
        %v1944 = vld [vmem:[%s1921 + $0xb0] sm:$0xff]
        %v1945 = vld [vmem:[%s1921 + $0xb8] sm:$0xff]
        %v1946 = vld [vmem:[%s1921 + $0xc0] sm:$0xff]
        %v1947 = vld [vmem:[%s1921 + $0xc8] sm:$0xff]
        %v1948 = vld [vmem:[%s1921 + $0xd0] sm:$0xff]
        %v1949 = vld [vmem:[%s1921 + $0xd8] sm:$0xff]
        %v1950 = vld [vmem:[%s1921 + $0xe0] sm:$0xff]
        %v1951 = vld [vmem:[%s1921 + $0xe8] sm:$0xff]
        %v1952 = vld [vmem:[%s1921 + $0xf0] sm:$0xff]
        %v1953 = vld [vmem:[%s1921 + $0xf8] sm:$0xff]
        %v1954 = vld [vmem:[%s1921 + $0x100] sm:$0xff]
        %v1955 = vld [vmem:[%s1921 + $0x108] sm:$0xff]
        %v1956 = vld [vmem:[%s1921 + $0x110] sm:$0xff]
        %v1957 = vld [vmem:[%s1921 + $0x118] sm:$0xff]
        %v1958 = vld [vmem:[%s1921 + $0x120] sm:$0xff]
        %v1959 = vld [vmem:[%s1921 + $0x128] sm:$0xff]
        %v1960 = vld [vmem:[%s1921 + $0x130] sm:$0xff]
        %v1961 = vld [vmem:[%s1921 + $0x138] sm:$0xff]
        %v1962 = vld [vmem:[%s1921 + $0x140] sm:$0xff]
        %v1963 = vld [vmem:[%s1921 + $0x148] sm:$0xff]
        %v1964 = vld [vmem:[%s1921 + $0x150] sm:$0xff]
        %v1965 = vld [vmem:[%s1921 + $0x158] sm:$0xff]
        %v1966 = vld [vmem:[%s1921 + $0x160] sm:$0xff]
        %v1967 = vld [vmem:[%s1921 + $0x168] sm:$0xff]
        %v1968 = vld [vmem:[%s1921 + $0x170] sm:$0xff]
        %v1969 = vld [vmem:[%s1921 + $0x178] sm:$0xff]
        %v1970 = vld [vmem:[%s1921 + $0x180] sm:$0xff]
        %v1971 = vld [vmem:[%s1921 + $0x188] sm:$0xff]
        %v1972 = vld [vmem:[%s1921 + $0x190] sm:$0xff]
        %v1973 = vld [vmem:[%s1921 + $0x198] sm:$0xff]
        %v1974 = vld [vmem:[%s1921 + $0x1a0] sm:$0xff]
        %v1975 = vld [vmem:[%s1921 + $0x1a8] sm:$0xff]
        %v1976 = vld [vmem:[%s1921 + $0x1b0] sm:$0xff]
        %v1977 = vld [vmem:[%s1921 + $0x1b8] sm:$0xff]
        %v1978 = vld [vmem:[%s1921 + $0x1c0] sm:$0xff]
        %v1979 = vld [vmem:[%s1921 + $0x1c8] sm:$0xff]
        %v1980 = vld [vmem:[%s1921 + $0x1d0] sm:$0xff]
        %v1981 = vld [vmem:[%s1921 + $0x1d8] sm:$0xff]
        %v1982 = vld [vmem:[%s1921 + $0x1e0] sm:$0xff]
        %v1983 = vld [vmem:[%s1921 + $0x1e8] sm:$0xff]
        %v1984 = vld [vmem:[%s1921 + $0x1f0] sm:$0xff]
        %v1985 = vld [vmem:[%s1921 + $0x1f8] sm:$0xff]
        %1986 = vmatpush.msra.mxu0 %v1937
        %1987 = vmatpush.msra.mxu0 %v1936
        %1988 = vmatpush.msra.mxu0 %v1935
        %1989 = vmatpush.msra.mxu0 %v1934
        %1990 = vmatpush.msra.mxu0 %v1933
        %1991 = vmatpush.msra.mxu0 %v1932
        %1992 = vmatpush.msra.mxu0 %v1931
        %1993 = vmatpush.msra.mxu0 %v1930
        %1994 = vmatpush.msra.mxu0 %v1929
        %1995 = vmatpush.msra.mxu0 %v1928
        %1996 = vmatpush.msra.mxu0 %v1927
        %1997 = vmatpush.msra.mxu0 %v1926
        %1998 = vmatpush.msra.mxu0 %v1925
        %1999 = vmatpush.msra.mxu0 %v1924
        %2000 = vmatpush.msra.mxu0 %v1923
        %2001 = vmatpush.msra.mxu0 %v1922
        %2002 = vmatmul.f32.gmra.mxu0 %v1792
        %v2003 = vpop.f32.mrf.mxu0
        %v2004 = vadd.f32 %v629, %v2003
        %2005 = vmatmul.f32.gmra.mxu0 %v1793
        %v2006 = vpop.f32.mrf.mxu0
        %v2007 = vadd.f32 %v629, %v2006
        %2008 = vmatmul.f32.gmra.mxu0 %v1794
        %v2009 = vpop.f32.mrf.mxu0
        %v2010 = vadd.f32 %v629, %v2009
        %2011 = vmatmul.f32.gmra.mxu0 %v1795
        %v2012 = vpop.f32.mrf.mxu0
        %v2013 = vadd.f32 %v629, %v2012
        %2014 = vmatmul.f32.gmra.mxu0 %v1796
        %v2015 = vpop.f32.mrf.mxu0
        %v2016 = vadd.f32 %v629, %v2015
        %2017 = vmatmul.f32.gmra.mxu0 %v1797
        %v2018 = vpop.f32.mrf.mxu0
        %v2019 = vadd.f32 %v629, %v2018
        %2020 = vmatmul.f32.gmra.mxu0 %v1798
        %v2021 = vpop.f32.mrf.mxu0
        %v2022 = vadd.f32 %v629, %v2021
        %2023 = vmatmul.f32.gmra.mxu0 %v1799
        %v2024 = vpop.f32.mrf.mxu0
        %v2025 = vadd.f32 %v629, %v2024
        %2026 = vmatmul.f32.gmra.mxu0 %v1800
        %v2027 = vpop.f32.mrf.mxu0
        %v2028 = vadd.f32 %v629, %v2027
        %2029 = vmatmul.f32.gmra.mxu0 %v1801
        %v2030 = vpop.f32.mrf.mxu0
        %v2031 = vadd.f32 %v629, %v2030
        %2032 = vmatmul.f32.gmra.mxu0 %v1802
        %v2033 = vpop.f32.mrf.mxu0
        %v2034 = vadd.f32 %v629, %v2033
        %2035 = vmatmul.f32.gmra.mxu0 %v1803
        %v2036 = vpop.f32.mrf.mxu0
        %v2037 = vadd.f32 %v629, %v2036
        %2038 = vmatmul.f32.gmra.mxu0 %v1804
        %v2039 = vpop.f32.mrf.mxu0
        %v2040 = vadd.f32 %v629, %v2039
        %2041 = vmatmul.f32.gmra.mxu0 %v1805
        %v2042 = vpop.f32.mrf.mxu0
        %v2043 = vadd.f32 %v629, %v2042
        %2044 = vmatmul.f32.gmra.mxu0 %v1806
        %v2045 = vpop.f32.mrf.mxu0
        %v2046 = vadd.f32 %v629, %v2045
        %2047 = vmatmul.f32.gmra.mxu0 %v1807
        %v2048 = vpop.f32.mrf.mxu0
        %v2049 = vadd.f32 %v629, %v2048
        %2050 = vmatmul.f32.gmra.mxu0 %v1808
        %v2051 = vpop.f32.mrf.mxu0
        %v2052 = vadd.f32 %v629, %v2051
        %2053 = vmatmul.f32.gmra.mxu0 %v1809
        %v2054 = vpop.f32.mrf.mxu0
        %v2055 = vadd.f32 %v629, %v2054
        %2056 = vmatmul.f32.gmra.mxu0 %v1810
        %v2057 = vpop.f32.mrf.mxu0
        %v2058 = vadd.f32 %v629, %v2057
        %2059 = vmatmul.f32.gmra.mxu0 %v1811
        %v2060 = vpop.f32.mrf.mxu0
        %v2061 = vadd.f32 %v629, %v2060
        %2062 = vmatmul.f32.gmra.mxu0 %v1812
        %v2063 = vpop.f32.mrf.mxu0
        %v2064 = vadd.f32 %v629, %v2063
        %2065 = vmatmul.f32.gmra.mxu0 %v1813
        %v2066 = vpop.f32.mrf.mxu0
        %v2067 = vadd.f32 %v629, %v2066
        %2068 = vmatmul.f32.gmra.mxu0 %v1814
        %v2069 = vpop.f32.mrf.mxu0
        %v2070 = vadd.f32 %v629, %v2069
        %2071 = vmatmul.f32.gmra.mxu0 %v1815
        %v2072 = vpop.f32.mrf.mxu0
        %v2073 = vadd.f32 %v629, %v2072
        %2074 = vmatmul.f32.gmra.mxu0 %v1816
        %v2075 = vpop.f32.mrf.mxu0
        %v2076 = vadd.f32 %v629, %v2075
        %2077 = vmatmul.f32.gmra.mxu0 %v1817
        %v2078 = vpop.f32.mrf.mxu0
        %v2079 = vadd.f32 %v629, %v2078
        %2080 = vmatmul.f32.gmra.mxu0 %v1818
        %v2081 = vpop.f32.mrf.mxu0
        %v2082 = vadd.f32 %v629, %v2081
        %2083 = vmatmul.f32.gmra.mxu0 %v1819
        %v2084 = vpop.f32.mrf.mxu0
        %v2085 = vadd.f32 %v629, %v2084
        %2086 = vmatmul.f32.gmra.mxu0 %v1820
        %v2087 = vpop.f32.mrf.mxu0
        %v2088 = vadd.f32 %v629, %v2087
        %2089 = vmatmul.f32.gmra.mxu0 %v1821
        %v2090 = vpop.f32.mrf.mxu0
        %v2091 = vadd.f32 %v629, %v2090
        %2092 = vmatmul.f32.gmra.mxu0 %v1822
        %v2093 = vpop.f32.mrf.mxu0
        %v2094 = vadd.f32 %v629, %v2093
        %2095 = vmatmul.f32.gmra.mxu0 %v1823
        %v2096 = vpop.f32.mrf.mxu0
        %v2097 = vadd.f32 %v629, %v2096
        %2098 = vdwg.mxu0
        %2099 = vmatpush.msra.mxu0 %v1953
        %2100 = vmatpush.msra.mxu0 %v1952
        %2101 = vmatpush.msra.mxu0 %v1951
        %2102 = vmatpush.msra.mxu0 %v1950
        %2103 = vmatpush.msra.mxu0 %v1949
        %2104 = vmatpush.msra.mxu0 %v1948
        %2105 = vmatpush.msra.mxu0 %v1947
        %2106 = vmatpush.msra.mxu0 %v1946
        %2107 = vmatpush.msra.mxu0 %v1945
        %2108 = vmatpush.msra.mxu0 %v1944
        %2109 = vmatpush.msra.mxu0 %v1943
        %2110 = vmatpush.msra.mxu0 %v1942
        %2111 = vmatpush.msra.mxu0 %v1941
        %2112 = vmatpush.msra.mxu0 %v1940
        %2113 = vmatpush.msra.mxu0 %v1939
        %2114 = vmatpush.msra.mxu0 %v1938
        %2115 = vmatmul.f32.gmra.mxu0 %v1824
        %v2116 = vpop.f32.mrf.mxu0
        %v2117 = vadd.f32 %v2004, %v2116
        %2118 = vmatmul.f32.gmra.mxu0 %v1825
        %v2119 = vpop.f32.mrf.mxu0
        %v2120 = vadd.f32 %v2007, %v2119
        %2121 = vmatmul.f32.gmra.mxu0 %v1826
        %v2122 = vpop.f32.mrf.mxu0
        %v2123 = vadd.f32 %v2010, %v2122
        %2124 = vmatmul.f32.gmra.mxu0 %v1827
        %v2125 = vpop.f32.mrf.mxu0
        %v2126 = vadd.f32 %v2013, %v2125
        %2127 = vmatmul.f32.gmra.mxu0 %v1828
        %v2128 = vpop.f32.mrf.mxu0
        %v2129 = vadd.f32 %v2016, %v2128
        %2130 = vmatmul.f32.gmra.mxu0 %v1829
        %v2131 = vpop.f32.mrf.mxu0
        %v2132 = vadd.f32 %v2019, %v2131
        %2133 = vmatmul.f32.gmra.mxu0 %v1830
        %v2134 = vpop.f32.mrf.mxu0
        %v2135 = vadd.f32 %v2022, %v2134
        %2136 = vmatmul.f32.gmra.mxu0 %v1831
        %v2137 = vpop.f32.mrf.mxu0
        %v2138 = vadd.f32 %v2025, %v2137
        %2139 = vmatmul.f32.gmra.mxu0 %v1832
        %v2140 = vpop.f32.mrf.mxu0
        %v2141 = vadd.f32 %v2028, %v2140
        %2142 = vmatmul.f32.gmra.mxu0 %v1833
        %v2143 = vpop.f32.mrf.mxu0
        %v2144 = vadd.f32 %v2031, %v2143
        %2145 = vmatmul.f32.gmra.mxu0 %v1834
        %v2146 = vpop.f32.mrf.mxu0
        %v2147 = vadd.f32 %v2034, %v2146
        %2148 = vmatmul.f32.gmra.mxu0 %v1835
        %v2149 = vpop.f32.mrf.mxu0
        %v2150 = vadd.f32 %v2037, %v2149
        %2151 = vmatmul.f32.gmra.mxu0 %v1836
        %v2152 = vpop.f32.mrf.mxu0
        %v2153 = vadd.f32 %v2040, %v2152
        %2154 = vmatmul.f32.gmra.mxu0 %v1837
        %v2155 = vpop.f32.mrf.mxu0
        %v2156 = vadd.f32 %v2043, %v2155
        %2157 = vmatmul.f32.gmra.mxu0 %v1838
        %v2158 = vpop.f32.mrf.mxu0
        %v2159 = vadd.f32 %v2046, %v2158
        %2160 = vmatmul.f32.gmra.mxu0 %v1839
        %v2161 = vpop.f32.mrf.mxu0
        %v2162 = vadd.f32 %v2049, %v2161
        %2163 = vmatmul.f32.gmra.mxu0 %v1840
        %v2164 = vpop.f32.mrf.mxu0
        %v2165 = vadd.f32 %v2052, %v2164
        %2166 = vmatmul.f32.gmra.mxu0 %v1841
        %v2167 = vpop.f32.mrf.mxu0
        %v2168 = vadd.f32 %v2055, %v2167
        %2169 = vmatmul.f32.gmra.mxu0 %v1842
        %v2170 = vpop.f32.mrf.mxu0
        %v2171 = vadd.f32 %v2058, %v2170
        %2172 = vmatmul.f32.gmra.mxu0 %v1843
        %v2173 = vpop.f32.mrf.mxu0
        %v2174 = vadd.f32 %v2061, %v2173
        %2175 = vmatmul.f32.gmra.mxu0 %v1844
        %v2176 = vpop.f32.mrf.mxu0
        %v2177 = vadd.f32 %v2064, %v2176
        %2178 = vmatmul.f32.gmra.mxu0 %v1845
        %v2179 = vpop.f32.mrf.mxu0
        %v2180 = vadd.f32 %v2067, %v2179
        %2181 = vmatmul.f32.gmra.mxu0 %v1846
        %v2182 = vpop.f32.mrf.mxu0
        %v2183 = vadd.f32 %v2070, %v2182
        %2184 = vmatmul.f32.gmra.mxu0 %v1847
        %v2185 = vpop.f32.mrf.mxu0
        %v2186 = vadd.f32 %v2073, %v2185
        %2187 = vmatmul.f32.gmra.mxu0 %v1848
        %v2188 = vpop.f32.mrf.mxu0
        %v2189 = vadd.f32 %v2076, %v2188
        %2190 = vmatmul.f32.gmra.mxu0 %v1849
        %v2191 = vpop.f32.mrf.mxu0
        %v2192 = vadd.f32 %v2079, %v2191
        %2193 = vmatmul.f32.gmra.mxu0 %v1850
        %v2194 = vpop.f32.mrf.mxu0
        %v2195 = vadd.f32 %v2082, %v2194
        %2196 = vmatmul.f32.gmra.mxu0 %v1851
        %v2197 = vpop.f32.mrf.mxu0
        %v2198 = vadd.f32 %v2085, %v2197
        %2199 = vmatmul.f32.gmra.mxu0 %v1852
        %v2200 = vpop.f32.mrf.mxu0
        %v2201 = vadd.f32 %v2088, %v2200
        %2202 = vmatmul.f32.gmra.mxu0 %v1853
        %v2203 = vpop.f32.mrf.mxu0
        %v2204 = vadd.f32 %v2091, %v2203
        %2205 = vmatmul.f32.gmra.mxu0 %v1854
        %v2206 = vpop.f32.mrf.mxu0
        %v2207 = vadd.f32 %v2094, %v2206
        %2208 = vmatmul.f32.gmra.mxu0 %v1855
        %v2209 = vpop.f32.mrf.mxu0
        %v2210 = vadd.f32 %v2097, %v2209
        %2211 = vdwg.mxu0
        %2212 = vmatpush.msra.mxu0 %v1969
        %2213 = vmatpush.msra.mxu0 %v1968
        %2214 = vmatpush.msra.mxu0 %v1967
        %2215 = vmatpush.msra.mxu0 %v1966
        %2216 = vmatpush.msra.mxu0 %v1965
        %2217 = vmatpush.msra.mxu0 %v1964
        %2218 = vmatpush.msra.mxu0 %v1963
        %2219 = vmatpush.msra.mxu0 %v1962
        %2220 = vmatpush.msra.mxu0 %v1961
        %2221 = vmatpush.msra.mxu0 %v1960
        %2222 = vmatpush.msra.mxu0 %v1959
        %2223 = vmatpush.msra.mxu0 %v1958
        %2224 = vmatpush.msra.mxu0 %v1957
        %2225 = vmatpush.msra.mxu0 %v1956
        %2226 = vmatpush.msra.mxu0 %v1955
        %2227 = vmatpush.msra.mxu0 %v1954
        %2228 = vmatmul.f32.gmra.mxu0 %v1857
        %v2229 = vpop.f32.mrf.mxu0
        %v2230 = vadd.f32 %v2117, %v2229
        %2231 = vmatmul.f32.gmra.mxu0 %v1858
        %v2232 = vpop.f32.mrf.mxu0
        %v2233 = vadd.f32 %v2120, %v2232
        %2234 = vmatmul.f32.gmra.mxu0 %v1859
        %v2235 = vpop.f32.mrf.mxu0
        %v2236 = vadd.f32 %v2123, %v2235
        %2237 = vmatmul.f32.gmra.mxu0 %v1860
        %v2238 = vpop.f32.mrf.mxu0
        %v2239 = vadd.f32 %v2126, %v2238
        %2240 = vmatmul.f32.gmra.mxu0 %v1861
        %v2241 = vpop.f32.mrf.mxu0
        %v2242 = vadd.f32 %v2129, %v2241
        %2243 = vmatmul.f32.gmra.mxu0 %v1862
        %v2244 = vpop.f32.mrf.mxu0
        %v2245 = vadd.f32 %v2132, %v2244
        %2246 = vmatmul.f32.gmra.mxu0 %v1863
        %v2247 = vpop.f32.mrf.mxu0
        %v2248 = vadd.f32 %v2135, %v2247
        %2249 = vmatmul.f32.gmra.mxu0 %v1864
        %v2250 = vpop.f32.mrf.mxu0
        %v2251 = vadd.f32 %v2138, %v2250
        %2252 = vmatmul.f32.gmra.mxu0 %v1865
        %v2253 = vpop.f32.mrf.mxu0
        %v2254 = vadd.f32 %v2141, %v2253
        %2255 = vmatmul.f32.gmra.mxu0 %v1866
        %v2256 = vpop.f32.mrf.mxu0
        %v2257 = vadd.f32 %v2144, %v2256
        %2258 = vmatmul.f32.gmra.mxu0 %v1867
        %v2259 = vpop.f32.mrf.mxu0
        %v2260 = vadd.f32 %v2147, %v2259
        %2261 = vmatmul.f32.gmra.mxu0 %v1868
        %v2262 = vpop.f32.mrf.mxu0
        %v2263 = vadd.f32 %v2150, %v2262
        %2264 = vmatmul.f32.gmra.mxu0 %v1869
        %v2265 = vpop.f32.mrf.mxu0
        %v2266 = vadd.f32 %v2153, %v2265
        %2267 = vmatmul.f32.gmra.mxu0 %v1870
        %v2268 = vpop.f32.mrf.mxu0
        %v2269 = vadd.f32 %v2156, %v2268
        %2270 = vmatmul.f32.gmra.mxu0 %v1871
        %v2271 = vpop.f32.mrf.mxu0
        %v2272 = vadd.f32 %v2159, %v2271
        %2273 = vmatmul.f32.gmra.mxu0 %v1872
        %v2274 = vpop.f32.mrf.mxu0
        %v2275 = vadd.f32 %v2162, %v2274
        %2276 = vmatmul.f32.gmra.mxu0 %v1873
        %v2277 = vpop.f32.mrf.mxu0
        %v2278 = vadd.f32 %v2165, %v2277
        %2279 = vmatmul.f32.gmra.mxu0 %v1874
        %v2280 = vpop.f32.mrf.mxu0
        %v2281 = vadd.f32 %v2168, %v2280
        %2282 = vmatmul.f32.gmra.mxu0 %v1875
        %v2283 = vpop.f32.mrf.mxu0
        %v2284 = vadd.f32 %v2171, %v2283
        %2285 = vmatmul.f32.gmra.mxu0 %v1876
        %v2286 = vpop.f32.mrf.mxu0
        %v2287 = vadd.f32 %v2174, %v2286
        %2288 = vmatmul.f32.gmra.mxu0 %v1877
        %v2289 = vpop.f32.mrf.mxu0
        %v2290 = vadd.f32 %v2177, %v2289
        %2291 = vmatmul.f32.gmra.mxu0 %v1878
        %v2292 = vpop.f32.mrf.mxu0
        %v2293 = vadd.f32 %v2180, %v2292
        %2294 = vmatmul.f32.gmra.mxu0 %v1879
        %v2295 = vpop.f32.mrf.mxu0
        %v2296 = vadd.f32 %v2183, %v2295
        %2297 = vmatmul.f32.gmra.mxu0 %v1880
        %v2298 = vpop.f32.mrf.mxu0
        %v2299 = vadd.f32 %v2186, %v2298
        %2300 = vmatmul.f32.gmra.mxu0 %v1881
        %v2301 = vpop.f32.mrf.mxu0
        %v2302 = vadd.f32 %v2189, %v2301
        %2303 = vmatmul.f32.gmra.mxu0 %v1882
        %v2304 = vpop.f32.mrf.mxu0
        %v2305 = vadd.f32 %v2192, %v2304
        %2306 = vmatmul.f32.gmra.mxu0 %v1883
        %v2307 = vpop.f32.mrf.mxu0
        %v2308 = vadd.f32 %v2195, %v2307
        %2309 = vmatmul.f32.gmra.mxu0 %v1884
        %v2310 = vpop.f32.mrf.mxu0
        %v2311 = vadd.f32 %v2198, %v2310
        %2312 = vmatmul.f32.gmra.mxu0 %v1885
        %v2313 = vpop.f32.mrf.mxu0
        %v2314 = vadd.f32 %v2201, %v2313
        %2315 = vmatmul.f32.gmra.mxu0 %v1886
        %v2316 = vpop.f32.mrf.mxu0
        %v2317 = vadd.f32 %v2204, %v2316
        %2318 = vmatmul.f32.gmra.mxu0 %v1887
        %v2319 = vpop.f32.mrf.mxu0
        %v2320 = vadd.f32 %v2207, %v2319
        %2321 = vmatmul.f32.gmra.mxu0 %v1888
        %v2322 = vpop.f32.mrf.mxu0
        %v2323 = vadd.f32 %v2210, %v2322
        %2324 = vdwg.mxu0
        %2325 = vmatpush.msra.mxu0 %v1985
        %2326 = vmatpush.msra.mxu0 %v1984
        %2327 = vmatpush.msra.mxu0 %v1983
        %2328 = vmatpush.msra.mxu0 %v1982
        %2329 = vmatpush.msra.mxu0 %v1981
        %2330 = vmatpush.msra.mxu0 %v1980
        %2331 = vmatpush.msra.mxu0 %v1979
        %2332 = vmatpush.msra.mxu0 %v1978
        %2333 = vmatpush.msra.mxu0 %v1977
        %2334 = vmatpush.msra.mxu0 %v1976
        %2335 = vmatpush.msra.mxu0 %v1975
        %2336 = vmatpush.msra.mxu0 %v1974
        %2337 = vmatpush.msra.mxu0 %v1973
        %2338 = vmatpush.msra.mxu0 %v1972
        %2339 = vmatpush.msra.mxu0 %v1971
        %2340 = vmatpush.msra.mxu0 %v1970
        %2341 = vmatmul.f32.gmra.mxu0 %v1889
        %v2342 = vpop.f32.mrf.mxu0
        %v2343 = vadd.f32 %v2230, %v2342
        %2344 = vmatmul.f32.gmra.mxu0 %v1890
        %v2345 = vpop.f32.mrf.mxu0
        %v2346 = vadd.f32 %v2233, %v2345
        %2347 = vmatmul.f32.gmra.mxu0 %v1891
        %v2348 = vpop.f32.mrf.mxu0
        %v2349 = vadd.f32 %v2236, %v2348
        %2350 = vmatmul.f32.gmra.mxu0 %v1892
        %v2351 = vpop.f32.mrf.mxu0
        %v2352 = vadd.f32 %v2239, %v2351
        %2353 = vmatmul.f32.gmra.mxu0 %v1893
        %v2354 = vpop.f32.mrf.mxu0
        %v2355 = vadd.f32 %v2242, %v2354
        %2356 = vmatmul.f32.gmra.mxu0 %v1894
        %v2357 = vpop.f32.mrf.mxu0
        %v2358 = vadd.f32 %v2245, %v2357
        %2359 = vmatmul.f32.gmra.mxu0 %v1895
        %v2360 = vpop.f32.mrf.mxu0
        %v2361 = vadd.f32 %v2248, %v2360
        %2362 = vmatmul.f32.gmra.mxu0 %v1896
        %v2363 = vpop.f32.mrf.mxu0
        %v2364 = vadd.f32 %v2251, %v2363
        %2365 = vmatmul.f32.gmra.mxu0 %v1897
        %v2366 = vpop.f32.mrf.mxu0
        %v2367 = vadd.f32 %v2254, %v2366
        %2368 = vmatmul.f32.gmra.mxu0 %v1898
        %v2369 = vpop.f32.mrf.mxu0
        %v2370 = vadd.f32 %v2257, %v2369
        %2371 = vmatmul.f32.gmra.mxu0 %v1899
        %v2372 = vpop.f32.mrf.mxu0
        %v2373 = vadd.f32 %v2260, %v2372
        %2374 = vmatmul.f32.gmra.mxu0 %v1900
        %v2375 = vpop.f32.mrf.mxu0
        %v2376 = vadd.f32 %v2263, %v2375
        %2377 = vmatmul.f32.gmra.mxu0 %v1901
        %v2378 = vpop.f32.mrf.mxu0
        %v2379 = vadd.f32 %v2266, %v2378
        %2380 = vmatmul.f32.gmra.mxu0 %v1902
        %v2381 = vpop.f32.mrf.mxu0
        %v2382 = vadd.f32 %v2269, %v2381
        %2383 = vmatmul.f32.gmra.mxu0 %v1903
        %v2384 = vpop.f32.mrf.mxu0
        %v2385 = vadd.f32 %v2272, %v2384
        %2386 = vmatmul.f32.gmra.mxu0 %v1904
        %v2387 = vpop.f32.mrf.mxu0
        %v2388 = vadd.f32 %v2275, %v2387
        %2389 = vmatmul.f32.gmra.mxu0 %v1905
        %v2390 = vpop.f32.mrf.mxu0
        %v2391 = vadd.f32 %v2278, %v2390
        %2392 = vmatmul.f32.gmra.mxu0 %v1906
        %v2393 = vpop.f32.mrf.mxu0
        %v2394 = vadd.f32 %v2281, %v2393
        %2395 = vmatmul.f32.gmra.mxu0 %v1907
        %v2396 = vpop.f32.mrf.mxu0
        %v2397 = vadd.f32 %v2284, %v2396
        %2398 = vmatmul.f32.gmra.mxu0 %v1908
        %v2399 = vpop.f32.mrf.mxu0
        %v2400 = vadd.f32 %v2287, %v2399
        %2401 = vmatmul.f32.gmra.mxu0 %v1909
        %v2402 = vpop.f32.mrf.mxu0
        %v2403 = vadd.f32 %v2290, %v2402
        %2404 = vmatmul.f32.gmra.mxu0 %v1910
        %v2405 = vpop.f32.mrf.mxu0
        %v2406 = vadd.f32 %v2293, %v2405
        %2407 = vmatmul.f32.gmra.mxu0 %v1911
        %v2408 = vpop.f32.mrf.mxu0
        %v2409 = vadd.f32 %v2296, %v2408
        %2410 = vmatmul.f32.gmra.mxu0 %v1912
        %v2411 = vpop.f32.mrf.mxu0
        %v2412 = vadd.f32 %v2299, %v2411
        %2413 = vmatmul.f32.gmra.mxu0 %v1913
        %v2414 = vpop.f32.mrf.mxu0
        %v2415 = vadd.f32 %v2302, %v2414
        %2416 = vmatmul.f32.gmra.mxu0 %v1914
        %v2417 = vpop.f32.mrf.mxu0
        %v2418 = vadd.f32 %v2305, %v2417
        %2419 = vmatmul.f32.gmra.mxu0 %v1915
        %v2420 = vpop.f32.mrf.mxu0
        %v2421 = vadd.f32 %v2308, %v2420
        %2422 = vmatmul.f32.gmra.mxu0 %v1916
        %v2423 = vpop.f32.mrf.mxu0
        %v2424 = vadd.f32 %v2311, %v2423
        %2425 = vmatmul.f32.gmra.mxu0 %v1917
        %v2426 = vpop.f32.mrf.mxu0
        %v2427 = vadd.f32 %v2314, %v2426
        %2428 = vmatmul.f32.gmra.mxu0 %v1918
        %v2429 = vpop.f32.mrf.mxu0
        %v2430 = vadd.f32 %v2317, %v2429
        %2431 = vmatmul.f32.gmra.mxu0 %v1919
        %v2432 = vpop.f32.mrf.mxu0
        %v2433 = vadd.f32 %v2320, %v2432
        %2434 = vmatmul.f32.gmra.mxu0 %v1920
        %v2435 = vpop.f32.mrf.mxu0
        %v2436 = vadd.f32 %v2323, %v2435
        %2437 = vdwg.mxu0
        %2438 = vst [vmem:[%s314 + $0x10] sm:$0xff] %v2343
        %2439 = vst [vmem:[%s314 + $0x30] sm:$0xff] %v2346
        %2440 = vst [vmem:[%s314 + $0x50] sm:$0xff] %v2349
        %2441 = vst [vmem:[%s314 + $0x70] sm:$0xff] %v2352
        %2442 = vst [vmem:[%s314 + $0x90] sm:$0xff] %v2355
        %2443 = vst [vmem:[%s314 + $0xb0] sm:$0xff] %v2358
        %2444 = vst [vmem:[%s314 + $0xd0] sm:$0xff] %v2361
        %2445 = vst [vmem:[%s314 + $0xf0] sm:$0xff] %v2364
        %2446 = vst [vmem:[%s314 + $0x110] sm:$0xff] %v2367
        %2447 = vst [vmem:[%s314 + $0x130] sm:$0xff] %v2370
        %2448 = vst [vmem:[%s314 + $0x150] sm:$0xff] %v2373
        %2449 = vst [vmem:[%s314 + $0x170] sm:$0xff] %v2376
        %2450 = vst [vmem:[%s314 + $0x190] sm:$0xff] %v2379
        %2451 = vst [vmem:[%s314 + $0x1b0] sm:$0xff] %v2382
        %2452 = vst [vmem:[%s314 + $0x1d0] sm:$0xff] %v2385
        %2453 = vst [vmem:[%s314 + $0x1f0] sm:$0xff] %v2388
        %2454 = vst [vmem:[%s314 + $0x210] sm:$0xff] %v2391
        %2455 = vst [vmem:[%s314 + $0x230] sm:$0xff] %v2394
        %2456 = vst [vmem:[%s314 + $0x250] sm:$0xff] %v2397
        %2457 = vst [vmem:[%s314 + $0x270] sm:$0xff] %v2400
        %2458 = vst [vmem:[%s314 + $0x290] sm:$0xff] %v2403
        %2459 = vst [vmem:[%s314 + $0x2b0] sm:$0xff] %v2406
        %2460 = vst [vmem:[%s314 + $0x2d0] sm:$0xff] %v2409
        %2461 = vst [vmem:[%s314 + $0x2f0] sm:$0xff] %v2412
        %2462 = vst [vmem:[%s314 + $0x310] sm:$0xff] %v2415
        %2463 = vst [vmem:[%s314 + $0x330] sm:$0xff] %v2418
        %2464 = vst [vmem:[%s314 + $0x350] sm:$0xff] %v2421
        %2465 = vst [vmem:[%s314 + $0x370] sm:$0xff] %v2424
        %2466 = vst [vmem:[%s314 + $0x390] sm:$0xff] %v2427
        %2467 = vst [vmem:[%s314 + $0x3b0] sm:$0xff] %v2430
        %2468 = vst [vmem:[%s314 + $0x3d0] sm:$0xff] %v2433
        %2469 = vst [vmem:[%s314 + $0x3f0] sm:$0xff] %v2436
        %v2470 = vld [vmem:[%s499 + $0x1] sm:$0xff]
        %v2471 = vld [vmem:[%s499 + $0x9] sm:$0xff]
        %v2472 = vld [vmem:[%s499 + $0x19] sm:$0xff]
        %v2473 = vld [vmem:[%s499 + $0x21] sm:$0xff]
        %v2474 = vld [vmem:[%s499 + $0x31] sm:$0xff]
        %v2475 = vld [vmem:[%s499 + $0x39] sm:$0xff]
        %v2476 = vld [vmem:[%s499 + $0x49] sm:$0xff]
        %v2477 = vld [vmem:[%s499 + $0x51] sm:$0xff]
        %v2478 = vld [vmem:[%s499 + $0x61] sm:$0xff]
        %v2479 = vld [vmem:[%s499 + $0x69] sm:$0xff]
        %v2480 = vld [vmem:[%s499 + $0x79] sm:$0xff]
        %v2481 = vld [vmem:[%s499 + $0x81] sm:$0xff]
        %v2482 = vld [vmem:[%s499 + $0x91] sm:$0xff]
        %v2483 = vld [vmem:[%s499 + $0x99] sm:$0xff]
        %v2484 = vld [vmem:[%s499 + $0xa9] sm:$0xff]
        %v2485 = vld [vmem:[%s499 + $0xb1] sm:$0xff]
        %v2486 = vld [vmem:[%s499 + $0xc1] sm:$0xff]
        %v2487 = vld [vmem:[%s499 + $0xc9] sm:$0xff]
        %v2488 = vld [vmem:[%s499 + $0xd9] sm:$0xff]
        %v2489 = vld [vmem:[%s499 + $0xe1] sm:$0xff]
        %v2490 = vld [vmem:[%s499 + $0xf1] sm:$0xff]
        %v2491 = vld [vmem:[%s499 + $0xf9] sm:$0xff]
        %v2492 = vld [vmem:[%s499 + $0x109] sm:$0xff]
        %v2493 = vld [vmem:[%s499 + $0x111] sm:$0xff]
        %v2494 = vld [vmem:[%s499 + $0x121] sm:$0xff]
        %v2495 = vld [vmem:[%s499 + $0x129] sm:$0xff]
        %v2496 = vld [vmem:[%s499 + $0x139] sm:$0xff]
        %v2497 = vld [vmem:[%s499 + $0x141] sm:$0xff]
        %v2498 = vld [vmem:[%s499 + $0x151] sm:$0xff]
        %v2499 = vld [vmem:[%s499 + $0x159] sm:$0xff]
        %v2500 = vld [vmem:[%s499 + $0x169] sm:$0xff]
        %v2501 = vld [vmem:[%s499 + $0x171] sm:$0xff]
        %v2502 = vld [vmem:[%s499 + $0x2] sm:$0xff]
        %v2503 = vld [vmem:[%s499 + $0xa] sm:$0xff]
        %v2504 = vld [vmem:[%s499 + $0x1a] sm:$0xff]
        %v2505 = vld [vmem:[%s499 + $0x22] sm:$0xff]
        %v2506 = vld [vmem:[%s499 + $0x32] sm:$0xff]
        %v2507 = vld [vmem:[%s499 + $0x3a] sm:$0xff]
        %v2508 = vld [vmem:[%s499 + $0x4a] sm:$0xff]
        %v2509 = vld [vmem:[%s499 + $0x52] sm:$0xff]
        %v2510 = vld [vmem:[%s499 + $0x62] sm:$0xff]
        %v2511 = vld [vmem:[%s499 + $0x6a] sm:$0xff]
        %v2512 = vld [vmem:[%s499 + $0x7a] sm:$0xff]
        %v2513 = vld [vmem:[%s499 + $0x82] sm:$0xff]
        %v2514 = vld [vmem:[%s499 + $0x92] sm:$0xff]
        %v2515 = vld [vmem:[%s499 + $0x9a] sm:$0xff]
        %v2516 = vld [vmem:[%s499 + $0xaa] sm:$0xff]
        %v2517 = vld [vmem:[%s499 + $0xb2] sm:$0xff]
        %v2518 = vld [vmem:[%s499 + $0xc2] sm:$0xff]
        %v2519 = vld [vmem:[%s499 + $0xca] sm:$0xff]
        %v2520 = vld [vmem:[%s499 + $0xda] sm:$0xff]
        %v2521 = vld [vmem:[%s499 + $0xe2] sm:$0xff]
        %v2522 = vld [vmem:[%s499 + $0xf2] sm:$0xff]
        %v2523 = vld [vmem:[%s499 + $0xfa] sm:$0xff]
        %v2524 = vld [vmem:[%s499 + $0x10a] sm:$0xff]
        %v2525 = vld [vmem:[%s499 + $0x112] sm:$0xff]
        %v2526 = vld [vmem:[%s499 + $0x122] sm:$0xff]
        %v2527 = vld [vmem:[%s499 + $0x12a] sm:$0xff]
        %v2528 = vld [vmem:[%s499 + $0x13a] sm:$0xff]
        %v2529 = vld [vmem:[%s499 + $0x142] sm:$0xff]
        %v2530 = vld [vmem:[%s499 + $0x152] sm:$0xff]
        %v2531 = vld [vmem:[%s499 + $0x15a] sm:$0xff]
        %v2532 = vld [vmem:[%s499 + $0x16a] sm:$0xff]
        %v2533 = vld [vmem:[%s499 + $0x172] sm:$0xff]
        %v2534 = vld [vmem:[%s1856 + $0x1] sm:$0xff]
        %v2535 = vld [vmem:[%s1856 + $0x9] sm:$0xff]
        %v2536 = vld [vmem:[%s1856 + $0x19] sm:$0xff]
        %v2537 = vld [vmem:[%s1856 + $0x21] sm:$0xff]
        %v2538 = vld [vmem:[%s1856 + $0x31] sm:$0xff]
        %v2539 = vld [vmem:[%s1856 + $0x39] sm:$0xff]
        %v2540 = vld [vmem:[%s1856 + $0x49] sm:$0xff]
        %v2541 = vld [vmem:[%s1856 + $0x51] sm:$0xff]
        %v2542 = vld [vmem:[%s1856 + $0x61] sm:$0xff]
        %v2543 = vld [vmem:[%s1856 + $0x69] sm:$0xff]
        %v2544 = vld [vmem:[%s1856 + $0x79] sm:$0xff]
        %v2545 = vld [vmem:[%s1856 + $0x81] sm:$0xff]
        %v2546 = vld [vmem:[%s1856 + $0x91] sm:$0xff]
        %v2547 = vld [vmem:[%s1856 + $0x99] sm:$0xff]
        %v2548 = vld [vmem:[%s1856 + $0xa9] sm:$0xff]
        %v2549 = vld [vmem:[%s1856 + $0xb1] sm:$0xff]
        %v2550 = vld [vmem:[%s1856 + $0xc1] sm:$0xff]
        %v2551 = vld [vmem:[%s1856 + $0xc9] sm:$0xff]
        %v2552 = vld [vmem:[%s1856 + $0xd9] sm:$0xff]
        %v2553 = vld [vmem:[%s1856 + $0xe1] sm:$0xff]
        %v2554 = vld [vmem:[%s1856 + $0xf1] sm:$0xff]
        %v2555 = vld [vmem:[%s1856 + $0xf9] sm:$0xff]
        %v2556 = vld [vmem:[%s1856 + $0x109] sm:$0xff]
        %v2557 = vld [vmem:[%s1856 + $0x111] sm:$0xff]
        %v2558 = vld [vmem:[%s1856 + $0x121] sm:$0xff]
        %v2559 = vld [vmem:[%s1856 + $0x129] sm:$0xff]
        %v2560 = vld [vmem:[%s1856 + $0x139] sm:$0xff]
        %v2561 = vld [vmem:[%s1856 + $0x141] sm:$0xff]
        %v2562 = vld [vmem:[%s1856 + $0x151] sm:$0xff]
        %v2563 = vld [vmem:[%s1856 + $0x159] sm:$0xff]
        %v2564 = vld [vmem:[%s1856 + $0x169] sm:$0xff]
        %v2565 = vld [vmem:[%s1856 + $0x171] sm:$0xff]
        %v2566 = vld [vmem:[%s1856 + $0x2] sm:$0xff]
        %v2567 = vld [vmem:[%s1856 + $0xa] sm:$0xff]
        %v2568 = vld [vmem:[%s1856 + $0x1a] sm:$0xff]
        %v2569 = vld [vmem:[%s1856 + $0x22] sm:$0xff]
        %v2570 = vld [vmem:[%s1856 + $0x32] sm:$0xff]
        %v2571 = vld [vmem:[%s1856 + $0x3a] sm:$0xff]
        %v2572 = vld [vmem:[%s1856 + $0x4a] sm:$0xff]
        %v2573 = vld [vmem:[%s1856 + $0x52] sm:$0xff]
        %v2574 = vld [vmem:[%s1856 + $0x62] sm:$0xff]
        %v2575 = vld [vmem:[%s1856 + $0x6a] sm:$0xff]
        %v2576 = vld [vmem:[%s1856 + $0x7a] sm:$0xff]
        %v2577 = vld [vmem:[%s1856 + $0x82] sm:$0xff]
        %v2578 = vld [vmem:[%s1856 + $0x92] sm:$0xff]
        %v2579 = vld [vmem:[%s1856 + $0x9a] sm:$0xff]
        %v2580 = vld [vmem:[%s1856 + $0xaa] sm:$0xff]
        %v2581 = vld [vmem:[%s1856 + $0xb2] sm:$0xff]
        %v2582 = vld [vmem:[%s1856 + $0xc2] sm:$0xff]
        %v2583 = vld [vmem:[%s1856 + $0xca] sm:$0xff]
        %v2584 = vld [vmem:[%s1856 + $0xda] sm:$0xff]
        %v2585 = vld [vmem:[%s1856 + $0xe2] sm:$0xff]
        %v2586 = vld [vmem:[%s1856 + $0xf2] sm:$0xff]
        %v2587 = vld [vmem:[%s1856 + $0xfa] sm:$0xff]
        %v2588 = vld [vmem:[%s1856 + $0x10a] sm:$0xff]
        %v2589 = vld [vmem:[%s1856 + $0x112] sm:$0xff]
        %v2590 = vld [vmem:[%s1856 + $0x122] sm:$0xff]
        %v2591 = vld [vmem:[%s1856 + $0x12a] sm:$0xff]
        %v2592 = vld [vmem:[%s1856 + $0x13a] sm:$0xff]
        %v2593 = vld [vmem:[%s1856 + $0x142] sm:$0xff]
        %v2594 = vld [vmem:[%s1856 + $0x152] sm:$0xff]
        %v2595 = vld [vmem:[%s1856 + $0x15a] sm:$0xff]
        %v2596 = vld [vmem:[%s1856 + $0x16a] sm:$0xff]
        %v2597 = vld [vmem:[%s1856 + $0x172] sm:$0xff]
        %s2598 = scalar_lea.vmem [#allocation8], 1536
        %v2599 = vld [vmem:[%s2598] sm:$0xff]
        %v2600 = vld [vmem:[%s2598 + $0x8] sm:$0xff]
        %v2601 = vld [vmem:[%s2598 + $0x10] sm:$0xff]
        %v2602 = vld [vmem:[%s2598 + $0x18] sm:$0xff]
        %v2603 = vld [vmem:[%s2598 + $0x20] sm:$0xff]
        %v2604 = vld [vmem:[%s2598 + $0x28] sm:$0xff]
        %v2605 = vld [vmem:[%s2598 + $0x30] sm:$0xff]
        %v2606 = vld [vmem:[%s2598 + $0x38] sm:$0xff]
        %v2607 = vld [vmem:[%s2598 + $0x40] sm:$0xff]
        %v2608 = vld [vmem:[%s2598 + $0x48] sm:$0xff]
        %v2609 = vld [vmem:[%s2598 + $0x50] sm:$0xff]
        %v2610 = vld [vmem:[%s2598 + $0x58] sm:$0xff]
        %v2611 = vld [vmem:[%s2598 + $0x60] sm:$0xff]
        %v2612 = vld [vmem:[%s2598 + $0x68] sm:$0xff]
        %v2613 = vld [vmem:[%s2598 + $0x70] sm:$0xff]
        %v2614 = vld [vmem:[%s2598 + $0x78] sm:$0xff]
        %v2615 = vld [vmem:[%s2598 + $0x80] sm:$0xff]
        %v2616 = vld [vmem:[%s2598 + $0x88] sm:$0xff]
        %v2617 = vld [vmem:[%s2598 + $0x90] sm:$0xff]
        %v2618 = vld [vmem:[%s2598 + $0x98] sm:$0xff]
        %v2619 = vld [vmem:[%s2598 + $0xa0] sm:$0xff]
        %v2620 = vld [vmem:[%s2598 + $0xa8] sm:$0xff]
        %v2621 = vld [vmem:[%s2598 + $0xb0] sm:$0xff]
        %v2622 = vld [vmem:[%s2598 + $0xb8] sm:$0xff]
        %v2623 = vld [vmem:[%s2598 + $0xc0] sm:$0xff]
        %v2624 = vld [vmem:[%s2598 + $0xc8] sm:$0xff]
        %v2625 = vld [vmem:[%s2598 + $0xd0] sm:$0xff]
        %v2626 = vld [vmem:[%s2598 + $0xd8] sm:$0xff]
        %v2627 = vld [vmem:[%s2598 + $0xe0] sm:$0xff]
        %v2628 = vld [vmem:[%s2598 + $0xe8] sm:$0xff]
        %v2629 = vld [vmem:[%s2598 + $0xf0] sm:$0xff]
        %v2630 = vld [vmem:[%s2598 + $0xf8] sm:$0xff]
        %v2631 = vld [vmem:[%s2598 + $0x100] sm:$0xff]
        %v2632 = vld [vmem:[%s2598 + $0x108] sm:$0xff]
        %v2633 = vld [vmem:[%s2598 + $0x110] sm:$0xff]
        %v2634 = vld [vmem:[%s2598 + $0x118] sm:$0xff]
        %v2635 = vld [vmem:[%s2598 + $0x120] sm:$0xff]
        %v2636 = vld [vmem:[%s2598 + $0x128] sm:$0xff]
        %v2637 = vld [vmem:[%s2598 + $0x130] sm:$0xff]
        %v2638 = vld [vmem:[%s2598 + $0x138] sm:$0xff]
        %v2639 = vld [vmem:[%s2598 + $0x140] sm:$0xff]
        %v2640 = vld [vmem:[%s2598 + $0x148] sm:$0xff]
        %v2641 = vld [vmem:[%s2598 + $0x150] sm:$0xff]
        %v2642 = vld [vmem:[%s2598 + $0x158] sm:$0xff]
        %v2643 = vld [vmem:[%s2598 + $0x160] sm:$0xff]
        %v2644 = vld [vmem:[%s2598 + $0x168] sm:$0xff]
        %v2645 = vld [vmem:[%s2598 + $0x170] sm:$0xff]
        %v2646 = vld [vmem:[%s2598 + $0x178] sm:$0xff]
        %v2647 = vld [vmem:[%s2598 + $0x180] sm:$0xff]
        %v2648 = vld [vmem:[%s2598 + $0x188] sm:$0xff]
        %v2649 = vld [vmem:[%s2598 + $0x190] sm:$0xff]
        %v2650 = vld [vmem:[%s2598 + $0x198] sm:$0xff]
        %v2651 = vld [vmem:[%s2598 + $0x1a0] sm:$0xff]
        %v2652 = vld [vmem:[%s2598 + $0x1a8] sm:$0xff]
        %v2653 = vld [vmem:[%s2598 + $0x1b0] sm:$0xff]
        %v2654 = vld [vmem:[%s2598 + $0x1b8] sm:$0xff]
        %v2655 = vld [vmem:[%s2598 + $0x1c0] sm:$0xff]
        %v2656 = vld [vmem:[%s2598 + $0x1c8] sm:$0xff]
        %v2657 = vld [vmem:[%s2598 + $0x1d0] sm:$0xff]
        %v2658 = vld [vmem:[%s2598 + $0x1d8] sm:$0xff]
        %v2659 = vld [vmem:[%s2598 + $0x1e0] sm:$0xff]
        %v2660 = vld [vmem:[%s2598 + $0x1e8] sm:$0xff]
        %v2661 = vld [vmem:[%s2598 + $0x1f0] sm:$0xff]
        %v2662 = vld [vmem:[%s2598 + $0x1f8] sm:$0xff]
        %2663 = vmatpush.msra.mxu0 %v2614
        %2664 = vmatpush.msra.mxu0 %v2613
        %2665 = vmatpush.msra.mxu0 %v2612
        %2666 = vmatpush.msra.mxu0 %v2611
        %2667 = vmatpush.msra.mxu0 %v2610
        %2668 = vmatpush.msra.mxu0 %v2609
        %2669 = vmatpush.msra.mxu0 %v2608
        %2670 = vmatpush.msra.mxu0 %v2607
        %2671 = vmatpush.msra.mxu0 %v2606
        %2672 = vmatpush.msra.mxu0 %v2605
        %2673 = vmatpush.msra.mxu0 %v2604
        %2674 = vmatpush.msra.mxu0 %v2603
        %2675 = vmatpush.msra.mxu0 %v2602
        %2676 = vmatpush.msra.mxu0 %v2601
        %2677 = vmatpush.msra.mxu0 %v2600
        %2678 = vmatpush.msra.mxu0 %v2599
        %2679 = vmatmul.f32.gmra.mxu0 %v2470
        %v2680 = vpop.f32.mrf.mxu0
        %v2681 = vadd.f32 %v629, %v2680
        %2682 = vmatmul.f32.gmra.mxu0 %v2471
        %v2683 = vpop.f32.mrf.mxu0
        %v2684 = vadd.f32 %v629, %v2683
        %2685 = vmatmul.f32.gmra.mxu0 %v2472
        %v2686 = vpop.f32.mrf.mxu0
        %v2687 = vadd.f32 %v629, %v2686
        %2688 = vmatmul.f32.gmra.mxu0 %v2473
        %v2689 = vpop.f32.mrf.mxu0
        %v2690 = vadd.f32 %v629, %v2689
        %2691 = vmatmul.f32.gmra.mxu0 %v2474
        %v2692 = vpop.f32.mrf.mxu0
        %v2693 = vadd.f32 %v629, %v2692
        %2694 = vmatmul.f32.gmra.mxu0 %v2475
        %v2695 = vpop.f32.mrf.mxu0
        %v2696 = vadd.f32 %v629, %v2695
        %2697 = vmatmul.f32.gmra.mxu0 %v2476
        %v2698 = vpop.f32.mrf.mxu0
        %v2699 = vadd.f32 %v629, %v2698
        %2700 = vmatmul.f32.gmra.mxu0 %v2477
        %v2701 = vpop.f32.mrf.mxu0
        %v2702 = vadd.f32 %v629, %v2701
        %2703 = vmatmul.f32.gmra.mxu0 %v2478
        %v2704 = vpop.f32.mrf.mxu0
        %v2705 = vadd.f32 %v629, %v2704
        %2706 = vmatmul.f32.gmra.mxu0 %v2479
        %v2707 = vpop.f32.mrf.mxu0
        %v2708 = vadd.f32 %v629, %v2707
        %2709 = vmatmul.f32.gmra.mxu0 %v2480
        %v2710 = vpop.f32.mrf.mxu0
        %v2711 = vadd.f32 %v629, %v2710
        %2712 = vmatmul.f32.gmra.mxu0 %v2481
        %v2713 = vpop.f32.mrf.mxu0
        %v2714 = vadd.f32 %v629, %v2713
        %2715 = vmatmul.f32.gmra.mxu0 %v2482
        %v2716 = vpop.f32.mrf.mxu0
        %v2717 = vadd.f32 %v629, %v2716
        %2718 = vmatmul.f32.gmra.mxu0 %v2483
        %v2719 = vpop.f32.mrf.mxu0
        %v2720 = vadd.f32 %v629, %v2719
        %2721 = vmatmul.f32.gmra.mxu0 %v2484
        %v2722 = vpop.f32.mrf.mxu0
        %v2723 = vadd.f32 %v629, %v2722
        %2724 = vmatmul.f32.gmra.mxu0 %v2485
        %v2725 = vpop.f32.mrf.mxu0
        %v2726 = vadd.f32 %v629, %v2725
        %2727 = vmatmul.f32.gmra.mxu0 %v2486
        %v2728 = vpop.f32.mrf.mxu0
        %v2729 = vadd.f32 %v629, %v2728
        %2730 = vmatmul.f32.gmra.mxu0 %v2487
        %v2731 = vpop.f32.mrf.mxu0
        %v2732 = vadd.f32 %v629, %v2731
        %2733 = vmatmul.f32.gmra.mxu0 %v2488
        %v2734 = vpop.f32.mrf.mxu0
        %v2735 = vadd.f32 %v629, %v2734
        %2736 = vmatmul.f32.gmra.mxu0 %v2489
        %v2737 = vpop.f32.mrf.mxu0
        %v2738 = vadd.f32 %v629, %v2737
        %2739 = vmatmul.f32.gmra.mxu0 %v2490
        %v2740 = vpop.f32.mrf.mxu0
        %v2741 = vadd.f32 %v629, %v2740
        %2742 = vmatmul.f32.gmra.mxu0 %v2491
        %v2743 = vpop.f32.mrf.mxu0
        %v2744 = vadd.f32 %v629, %v2743
        %2745 = vmatmul.f32.gmra.mxu0 %v2492
        %v2746 = vpop.f32.mrf.mxu0
        %v2747 = vadd.f32 %v629, %v2746
        %2748 = vmatmul.f32.gmra.mxu0 %v2493
        %v2749 = vpop.f32.mrf.mxu0
        %v2750 = vadd.f32 %v629, %v2749
        %2751 = vmatmul.f32.gmra.mxu0 %v2494
        %v2752 = vpop.f32.mrf.mxu0
        %v2753 = vadd.f32 %v629, %v2752
        %2754 = vmatmul.f32.gmra.mxu0 %v2495
        %v2755 = vpop.f32.mrf.mxu0
        %v2756 = vadd.f32 %v629, %v2755
        %2757 = vmatmul.f32.gmra.mxu0 %v2496
        %v2758 = vpop.f32.mrf.mxu0
        %v2759 = vadd.f32 %v629, %v2758
        %2760 = vmatmul.f32.gmra.mxu0 %v2497
        %v2761 = vpop.f32.mrf.mxu0
        %v2762 = vadd.f32 %v629, %v2761
        %2763 = vmatmul.f32.gmra.mxu0 %v2498
        %v2764 = vpop.f32.mrf.mxu0
        %v2765 = vadd.f32 %v629, %v2764
        %2766 = vmatmul.f32.gmra.mxu0 %v2499
        %v2767 = vpop.f32.mrf.mxu0
        %v2768 = vadd.f32 %v629, %v2767
        %2769 = vmatmul.f32.gmra.mxu0 %v2500
        %v2770 = vpop.f32.mrf.mxu0
        %v2771 = vadd.f32 %v629, %v2770
        %2772 = vmatmul.f32.gmra.mxu0 %v2501
        %v2773 = vpop.f32.mrf.mxu0
        %v2774 = vadd.f32 %v629, %v2773
        %2775 = vdwg.mxu0
        %2776 = vmatpush.msra.mxu0 %v2630
        %2777 = vmatpush.msra.mxu0 %v2629
        %2778 = vmatpush.msra.mxu0 %v2628
        %2779 = vmatpush.msra.mxu0 %v2627
        %2780 = vmatpush.msra.mxu0 %v2626
        %2781 = vmatpush.msra.mxu0 %v2625
        %2782 = vmatpush.msra.mxu0 %v2624
        %2783 = vmatpush.msra.mxu0 %v2623
        %2784 = vmatpush.msra.mxu0 %v2622
        %2785 = vmatpush.msra.mxu0 %v2621
        %2786 = vmatpush.msra.mxu0 %v2620
        %2787 = vmatpush.msra.mxu0 %v2619
        %2788 = vmatpush.msra.mxu0 %v2618
        %2789 = vmatpush.msra.mxu0 %v2617
        %2790 = vmatpush.msra.mxu0 %v2616
        %2791 = vmatpush.msra.mxu0 %v2615
        %2792 = vmatmul.f32.gmra.mxu0 %v2502
        %v2793 = vpop.f32.mrf.mxu0
        %v2794 = vadd.f32 %v2681, %v2793
        %2795 = vmatmul.f32.gmra.mxu0 %v2503
        %v2796 = vpop.f32.mrf.mxu0
        %v2797 = vadd.f32 %v2684, %v2796
        %2798 = vmatmul.f32.gmra.mxu0 %v2504
        %v2799 = vpop.f32.mrf.mxu0
        %v2800 = vadd.f32 %v2687, %v2799
        %2801 = vmatmul.f32.gmra.mxu0 %v2505
        %v2802 = vpop.f32.mrf.mxu0
        %v2803 = vadd.f32 %v2690, %v2802
        %2804 = vmatmul.f32.gmra.mxu0 %v2506
        %v2805 = vpop.f32.mrf.mxu0
        %v2806 = vadd.f32 %v2693, %v2805
        %2807 = vmatmul.f32.gmra.mxu0 %v2507
        %v2808 = vpop.f32.mrf.mxu0
        %v2809 = vadd.f32 %v2696, %v2808
        %2810 = vmatmul.f32.gmra.mxu0 %v2508
        %v2811 = vpop.f32.mrf.mxu0
        %v2812 = vadd.f32 %v2699, %v2811
        %2813 = vmatmul.f32.gmra.mxu0 %v2509
        %v2814 = vpop.f32.mrf.mxu0
        %v2815 = vadd.f32 %v2702, %v2814
        %2816 = vmatmul.f32.gmra.mxu0 %v2510
        %v2817 = vpop.f32.mrf.mxu0
        %v2818 = vadd.f32 %v2705, %v2817
        %2819 = vmatmul.f32.gmra.mxu0 %v2511
        %v2820 = vpop.f32.mrf.mxu0
        %v2821 = vadd.f32 %v2708, %v2820
        %2822 = vmatmul.f32.gmra.mxu0 %v2512
        %v2823 = vpop.f32.mrf.mxu0
        %v2824 = vadd.f32 %v2711, %v2823
        %2825 = vmatmul.f32.gmra.mxu0 %v2513
        %v2826 = vpop.f32.mrf.mxu0
        %v2827 = vadd.f32 %v2714, %v2826
        %2828 = vmatmul.f32.gmra.mxu0 %v2514
        %v2829 = vpop.f32.mrf.mxu0
        %v2830 = vadd.f32 %v2717, %v2829
        %2831 = vmatmul.f32.gmra.mxu0 %v2515
        %v2832 = vpop.f32.mrf.mxu0
        %v2833 = vadd.f32 %v2720, %v2832
        %2834 = vmatmul.f32.gmra.mxu0 %v2516
        %v2835 = vpop.f32.mrf.mxu0
        %v2836 = vadd.f32 %v2723, %v2835
        %2837 = vmatmul.f32.gmra.mxu0 %v2517
        %v2838 = vpop.f32.mrf.mxu0
        %v2839 = vadd.f32 %v2726, %v2838
        %2840 = vmatmul.f32.gmra.mxu0 %v2518
        %v2841 = vpop.f32.mrf.mxu0
        %v2842 = vadd.f32 %v2729, %v2841
        %2843 = vmatmul.f32.gmra.mxu0 %v2519
        %v2844 = vpop.f32.mrf.mxu0
        %v2845 = vadd.f32 %v2732, %v2844
        %2846 = vmatmul.f32.gmra.mxu0 %v2520
        %v2847 = vpop.f32.mrf.mxu0
        %v2848 = vadd.f32 %v2735, %v2847
        %2849 = vmatmul.f32.gmra.mxu0 %v2521
        %v2850 = vpop.f32.mrf.mxu0
        %v2851 = vadd.f32 %v2738, %v2850
        %2852 = vmatmul.f32.gmra.mxu0 %v2522
        %v2853 = vpop.f32.mrf.mxu0
        %v2854 = vadd.f32 %v2741, %v2853
        %2855 = vmatmul.f32.gmra.mxu0 %v2523
        %v2856 = vpop.f32.mrf.mxu0
        %v2857 = vadd.f32 %v2744, %v2856
        %2858 = vmatmul.f32.gmra.mxu0 %v2524
        %v2859 = vpop.f32.mrf.mxu0
        %v2860 = vadd.f32 %v2747, %v2859
        %2861 = vmatmul.f32.gmra.mxu0 %v2525
        %v2862 = vpop.f32.mrf.mxu0
        %v2863 = vadd.f32 %v2750, %v2862
        %2864 = vmatmul.f32.gmra.mxu0 %v2526
        %v2865 = vpop.f32.mrf.mxu0
        %v2866 = vadd.f32 %v2753, %v2865
        %2867 = vmatmul.f32.gmra.mxu0 %v2527
        %v2868 = vpop.f32.mrf.mxu0
        %v2869 = vadd.f32 %v2756, %v2868
        %2870 = vmatmul.f32.gmra.mxu0 %v2528
        %v2871 = vpop.f32.mrf.mxu0
        %v2872 = vadd.f32 %v2759, %v2871
        %2873 = vmatmul.f32.gmra.mxu0 %v2529
        %v2874 = vpop.f32.mrf.mxu0
        %v2875 = vadd.f32 %v2762, %v2874
        %2876 = vmatmul.f32.gmra.mxu0 %v2530
        %v2877 = vpop.f32.mrf.mxu0
        %v2878 = vadd.f32 %v2765, %v2877
        %2879 = vmatmul.f32.gmra.mxu0 %v2531
        %v2880 = vpop.f32.mrf.mxu0
        %v2881 = vadd.f32 %v2768, %v2880
        %2882 = vmatmul.f32.gmra.mxu0 %v2532
        %v2883 = vpop.f32.mrf.mxu0
        %v2884 = vadd.f32 %v2771, %v2883
        %2885 = vmatmul.f32.gmra.mxu0 %v2533
        %v2886 = vpop.f32.mrf.mxu0
        %v2887 = vadd.f32 %v2774, %v2886
        %2888 = vdwg.mxu0
        %2889 = vmatpush.msra.mxu0 %v2646
        %2890 = vmatpush.msra.mxu0 %v2645
        %2891 = vmatpush.msra.mxu0 %v2644
        %2892 = vmatpush.msra.mxu0 %v2643
        %2893 = vmatpush.msra.mxu0 %v2642
        %2894 = vmatpush.msra.mxu0 %v2641
        %2895 = vmatpush.msra.mxu0 %v2640
        %2896 = vmatpush.msra.mxu0 %v2639
        %2897 = vmatpush.msra.mxu0 %v2638
        %2898 = vmatpush.msra.mxu0 %v2637
        %2899 = vmatpush.msra.mxu0 %v2636
        %2900 = vmatpush.msra.mxu0 %v2635
        %2901 = vmatpush.msra.mxu0 %v2634
        %2902 = vmatpush.msra.mxu0 %v2633
        %2903 = vmatpush.msra.mxu0 %v2632
        %2904 = vmatpush.msra.mxu0 %v2631
        %2905 = vmatmul.f32.gmra.mxu0 %v2534
        %v2906 = vpop.f32.mrf.mxu0
        %v2907 = vadd.f32 %v2794, %v2906
        %2908 = vmatmul.f32.gmra.mxu0 %v2535
        %v2909 = vpop.f32.mrf.mxu0
        %v2910 = vadd.f32 %v2797, %v2909
        %2911 = vmatmul.f32.gmra.mxu0 %v2536
        %v2912 = vpop.f32.mrf.mxu0
        %v2913 = vadd.f32 %v2800, %v2912
        %2914 = vmatmul.f32.gmra.mxu0 %v2537
        %v2915 = vpop.f32.mrf.mxu0
        %v2916 = vadd.f32 %v2803, %v2915
        %2917 = vmatmul.f32.gmra.mxu0 %v2538
        %v2918 = vpop.f32.mrf.mxu0
        %v2919 = vadd.f32 %v2806, %v2918
        %2920 = vmatmul.f32.gmra.mxu0 %v2539
        %v2921 = vpop.f32.mrf.mxu0
        %v2922 = vadd.f32 %v2809, %v2921
        %2923 = vmatmul.f32.gmra.mxu0 %v2540
        %v2924 = vpop.f32.mrf.mxu0
        %v2925 = vadd.f32 %v2812, %v2924
        %2926 = vmatmul.f32.gmra.mxu0 %v2541
        %v2927 = vpop.f32.mrf.mxu0
        %v2928 = vadd.f32 %v2815, %v2927
        %2929 = vmatmul.f32.gmra.mxu0 %v2542
        %v2930 = vpop.f32.mrf.mxu0
        %v2931 = vadd.f32 %v2818, %v2930
        %2932 = vmatmul.f32.gmra.mxu0 %v2543
        %v2933 = vpop.f32.mrf.mxu0
        %v2934 = vadd.f32 %v2821, %v2933
        %2935 = vmatmul.f32.gmra.mxu0 %v2544
        %v2936 = vpop.f32.mrf.mxu0
        %v2937 = vadd.f32 %v2824, %v2936
        %2938 = vmatmul.f32.gmra.mxu0 %v2545
        %v2939 = vpop.f32.mrf.mxu0
        %v2940 = vadd.f32 %v2827, %v2939
        %2941 = vmatmul.f32.gmra.mxu0 %v2546
        %v2942 = vpop.f32.mrf.mxu0
        %v2943 = vadd.f32 %v2830, %v2942
        %2944 = vmatmul.f32.gmra.mxu0 %v2547
        %v2945 = vpop.f32.mrf.mxu0
        %v2946 = vadd.f32 %v2833, %v2945
        %2947 = vmatmul.f32.gmra.mxu0 %v2548
        %v2948 = vpop.f32.mrf.mxu0
        %v2949 = vadd.f32 %v2836, %v2948
        %2950 = vmatmul.f32.gmra.mxu0 %v2549
        %v2951 = vpop.f32.mrf.mxu0
        %v2952 = vadd.f32 %v2839, %v2951
        %2953 = vmatmul.f32.gmra.mxu0 %v2550
        %v2954 = vpop.f32.mrf.mxu0
        %v2955 = vadd.f32 %v2842, %v2954
        %2956 = vmatmul.f32.gmra.mxu0 %v2551
        %v2957 = vpop.f32.mrf.mxu0
        %v2958 = vadd.f32 %v2845, %v2957
        %2959 = vmatmul.f32.gmra.mxu0 %v2552
        %v2960 = vpop.f32.mrf.mxu0
        %v2961 = vadd.f32 %v2848, %v2960
        %2962 = vmatmul.f32.gmra.mxu0 %v2553
        %v2963 = vpop.f32.mrf.mxu0
        %v2964 = vadd.f32 %v2851, %v2963
        %2965 = vmatmul.f32.gmra.mxu0 %v2554
        %v2966 = vpop.f32.mrf.mxu0
        %v2967 = vadd.f32 %v2854, %v2966
        %2968 = vmatmul.f32.gmra.mxu0 %v2555
        %v2969 = vpop.f32.mrf.mxu0
        %v2970 = vadd.f32 %v2857, %v2969
        %2971 = vmatmul.f32.gmra.mxu0 %v2556
        %v2972 = vpop.f32.mrf.mxu0
        %v2973 = vadd.f32 %v2860, %v2972
        %2974 = vmatmul.f32.gmra.mxu0 %v2557
        %v2975 = vpop.f32.mrf.mxu0
        %v2976 = vadd.f32 %v2863, %v2975
        %2977 = vmatmul.f32.gmra.mxu0 %v2558
        %v2978 = vpop.f32.mrf.mxu0
        %v2979 = vadd.f32 %v2866, %v2978
        %2980 = vmatmul.f32.gmra.mxu0 %v2559
        %v2981 = vpop.f32.mrf.mxu0
        %v2982 = vadd.f32 %v2869, %v2981
        %2983 = vmatmul.f32.gmra.mxu0 %v2560
        %v2984 = vpop.f32.mrf.mxu0
        %v2985 = vadd.f32 %v2872, %v2984
        %2986 = vmatmul.f32.gmra.mxu0 %v2561
        %v2987 = vpop.f32.mrf.mxu0
        %v2988 = vadd.f32 %v2875, %v2987
        %2989 = vmatmul.f32.gmra.mxu0 %v2562
        %v2990 = vpop.f32.mrf.mxu0
        %v2991 = vadd.f32 %v2878, %v2990
        %2992 = vmatmul.f32.gmra.mxu0 %v2563
        %v2993 = vpop.f32.mrf.mxu0
        %v2994 = vadd.f32 %v2881, %v2993
        %2995 = vmatmul.f32.gmra.mxu0 %v2564
        %v2996 = vpop.f32.mrf.mxu0
        %v2997 = vadd.f32 %v2884, %v2996
        %2998 = vmatmul.f32.gmra.mxu0 %v2565
        %v2999 = vpop.f32.mrf.mxu0
        %v3000 = vadd.f32 %v2887, %v2999
        %3001 = vdwg.mxu0
        %3002 = vmatpush.msra.mxu0 %v2662
        %3003 = vmatpush.msra.mxu0 %v2661
        %3004 = vmatpush.msra.mxu0 %v2660
        %3005 = vmatpush.msra.mxu0 %v2659
        %3006 = vmatpush.msra.mxu0 %v2658
        %3007 = vmatpush.msra.mxu0 %v2657
        %3008 = vmatpush.msra.mxu0 %v2656
        %3009 = vmatpush.msra.mxu0 %v2655
        %3010 = vmatpush.msra.mxu0 %v2654
        %3011 = vmatpush.msra.mxu0 %v2653
        %3012 = vmatpush.msra.mxu0 %v2652
        %3013 = vmatpush.msra.mxu0 %v2651
        %3014 = vmatpush.msra.mxu0 %v2650
        %3015 = vmatpush.msra.mxu0 %v2649
        %3016 = vmatpush.msra.mxu0 %v2648
        %3017 = vmatpush.msra.mxu0 %v2647
        %3018 = vmatmul.f32.gmra.mxu0 %v2566
        %v3019 = vpop.f32.mrf.mxu0
        %v3020 = vadd.f32 %v2907, %v3019
        %3021 = vmatmul.f32.gmra.mxu0 %v2567
        %v3022 = vpop.f32.mrf.mxu0
        %v3023 = vadd.f32 %v2910, %v3022
        %3024 = vmatmul.f32.gmra.mxu0 %v2568
        %v3025 = vpop.f32.mrf.mxu0
        %v3026 = vadd.f32 %v2913, %v3025
        %3027 = vmatmul.f32.gmra.mxu0 %v2569
        %v3028 = vpop.f32.mrf.mxu0
        %v3029 = vadd.f32 %v2916, %v3028
        %3030 = vmatmul.f32.gmra.mxu0 %v2570
        %v3031 = vpop.f32.mrf.mxu0
        %v3032 = vadd.f32 %v2919, %v3031
        %3033 = vmatmul.f32.gmra.mxu0 %v2571
        %v3034 = vpop.f32.mrf.mxu0
        %v3035 = vadd.f32 %v2922, %v3034
        %3036 = vmatmul.f32.gmra.mxu0 %v2572
        %v3037 = vpop.f32.mrf.mxu0
        %v3038 = vadd.f32 %v2925, %v3037
        %3039 = vmatmul.f32.gmra.mxu0 %v2573
        %v3040 = vpop.f32.mrf.mxu0
        %v3041 = vadd.f32 %v2928, %v3040
        %3042 = vmatmul.f32.gmra.mxu0 %v2574
        %v3043 = vpop.f32.mrf.mxu0
        %v3044 = vadd.f32 %v2931, %v3043
        %3045 = vmatmul.f32.gmra.mxu0 %v2575
        %v3046 = vpop.f32.mrf.mxu0
        %v3047 = vadd.f32 %v2934, %v3046
        %3048 = vmatmul.f32.gmra.mxu0 %v2576
        %v3049 = vpop.f32.mrf.mxu0
        %v3050 = vadd.f32 %v2937, %v3049
        %3051 = vmatmul.f32.gmra.mxu0 %v2577
        %v3052 = vpop.f32.mrf.mxu0
        %v3053 = vadd.f32 %v2940, %v3052
        %3054 = vmatmul.f32.gmra.mxu0 %v2578
        %v3055 = vpop.f32.mrf.mxu0
        %v3056 = vadd.f32 %v2943, %v3055
        %3057 = vmatmul.f32.gmra.mxu0 %v2579
        %v3058 = vpop.f32.mrf.mxu0
        %v3059 = vadd.f32 %v2946, %v3058
        %3060 = vmatmul.f32.gmra.mxu0 %v2580
        %v3061 = vpop.f32.mrf.mxu0
        %v3062 = vadd.f32 %v2949, %v3061
        %3063 = vmatmul.f32.gmra.mxu0 %v2581
        %v3064 = vpop.f32.mrf.mxu0
        %v3065 = vadd.f32 %v2952, %v3064
        %3066 = vmatmul.f32.gmra.mxu0 %v2582
        %v3067 = vpop.f32.mrf.mxu0
        %v3068 = vadd.f32 %v2955, %v3067
        %3069 = vmatmul.f32.gmra.mxu0 %v2583
        %v3070 = vpop.f32.mrf.mxu0
        %v3071 = vadd.f32 %v2958, %v3070
        %3072 = vmatmul.f32.gmra.mxu0 %v2584
        %v3073 = vpop.f32.mrf.mxu0
        %v3074 = vadd.f32 %v2961, %v3073
        %3075 = vmatmul.f32.gmra.mxu0 %v2585
        %v3076 = vpop.f32.mrf.mxu0
        %v3077 = vadd.f32 %v2964, %v3076
        %3078 = vmatmul.f32.gmra.mxu0 %v2586
        %v3079 = vpop.f32.mrf.mxu0
        %v3080 = vadd.f32 %v2967, %v3079
        %3081 = vmatmul.f32.gmra.mxu0 %v2587
        %v3082 = vpop.f32.mrf.mxu0
        %v3083 = vadd.f32 %v2970, %v3082
        %3084 = vmatmul.f32.gmra.mxu0 %v2588
        %v3085 = vpop.f32.mrf.mxu0
        %v3086 = vadd.f32 %v2973, %v3085
        %3087 = vmatmul.f32.gmra.mxu0 %v2589
        %v3088 = vpop.f32.mrf.mxu0
        %v3089 = vadd.f32 %v2976, %v3088
        %3090 = vmatmul.f32.gmra.mxu0 %v2590
        %v3091 = vpop.f32.mrf.mxu0
        %v3092 = vadd.f32 %v2979, %v3091
        %3093 = vmatmul.f32.gmra.mxu0 %v2591
        %v3094 = vpop.f32.mrf.mxu0
        %v3095 = vadd.f32 %v2982, %v3094
        %3096 = vmatmul.f32.gmra.mxu0 %v2592
        %v3097 = vpop.f32.mrf.mxu0
        %v3098 = vadd.f32 %v2985, %v3097
        %3099 = vmatmul.f32.gmra.mxu0 %v2593
        %v3100 = vpop.f32.mrf.mxu0
        %v3101 = vadd.f32 %v2988, %v3100
        %3102 = vmatmul.f32.gmra.mxu0 %v2594
        %v3103 = vpop.f32.mrf.mxu0
        %v3104 = vadd.f32 %v2991, %v3103
        %3105 = vmatmul.f32.gmra.mxu0 %v2595
        %v3106 = vpop.f32.mrf.mxu0
        %v3107 = vadd.f32 %v2994, %v3106
        %3108 = vmatmul.f32.gmra.mxu0 %v2596
        %v3109 = vpop.f32.mrf.mxu0
        %v3110 = vadd.f32 %v2997, %v3109
        %3111 = vmatmul.f32.gmra.mxu0 %v2597
        %v3112 = vpop.f32.mrf.mxu0
        %v3113 = vadd.f32 %v3000, %v3112
        %3114 = vdwg.mxu0
        %3115 = vst [vmem:[%s314 + $0x18] sm:$0xff] %v3020
        %3116 = vst [vmem:[%s314 + $0x38] sm:$0xff] %v3023
        %3117 = vst [vmem:[%s314 + $0x58] sm:$0xff] %v3026
        %3118 = vst [vmem:[%s314 + $0x78] sm:$0xff] %v3029
        %3119 = vst [vmem:[%s314 + $0x98] sm:$0xff] %v3032
        %3120 = vst [vmem:[%s314 + $0xb8] sm:$0xff] %v3035
        %3121 = vst [vmem:[%s314 + $0xd8] sm:$0xff] %v3038
        %3122 = vst [vmem:[%s314 + $0xf8] sm:$0xff] %v3041
        %3123 = vst [vmem:[%s314 + $0x118] sm:$0xff] %v3044
        %3124 = vst [vmem:[%s314 + $0x138] sm:$0xff] %v3047
        %3125 = vst [vmem:[%s314 + $0x158] sm:$0xff] %v3050
        %3126 = vst [vmem:[%s314 + $0x178] sm:$0xff] %v3053
        %3127 = vst [vmem:[%s314 + $0x198] sm:$0xff] %v3056
        %3128 = vst [vmem:[%s314 + $0x1b8] sm:$0xff] %v3059
        %3129 = vst [vmem:[%s314 + $0x1d8] sm:$0xff] %v3062
        %3130 = vst [vmem:[%s314 + $0x1f8] sm:$0xff] %v3065
        %3131 = vst [vmem:[%s314 + $0x218] sm:$0xff] %v3068
        %3132 = vst [vmem:[%s314 + $0x238] sm:$0xff] %v3071
        %3133 = vst [vmem:[%s314 + $0x258] sm:$0xff] %v3074
        %3134 = vst [vmem:[%s314 + $0x278] sm:$0xff] %v3077
        %3135 = vst [vmem:[%s314 + $0x298] sm:$0xff] %v3080
        %3136 = vst [vmem:[%s314 + $0x2b8] sm:$0xff] %v3083
        %3137 = vst [vmem:[%s314 + $0x2d8] sm:$0xff] %v3086
        %3138 = vst [vmem:[%s314 + $0x2f8] sm:$0xff] %v3089
        %3139 = vst [vmem:[%s314 + $0x318] sm:$0xff] %v3092
        %3140 = vst [vmem:[%s314 + $0x338] sm:$0xff] %v3095
        %3141 = vst [vmem:[%s314 + $0x358] sm:$0xff] %v3098
        %3142 = vst [vmem:[%s314 + $0x378] sm:$0xff] %v3101
        %3143 = vst [vmem:[%s314 + $0x398] sm:$0xff] %v3104
        %3144 = vst [vmem:[%s314 + $0x3b8] sm:$0xff] %v3107
        %3145 = vst [vmem:[%s314 + $0x3d8] sm:$0xff] %v3110
        %3146 = vst [vmem:[%s314 + $0x3f8] sm:$0xff] %v3113
        %s3147 = sand.u32 %s148, 1
        %s3148 = scalar_lea.sflag [#allocation5], %s3147
        %s3149 = sand.u32 %s148, 1
        %s3150 = smul.addr %s3149, 1024
        %s3151 = scalar_lea.vmem [#allocation9], %s3150
        // Predicated region
        $region49: #{tpu_custom_call.1} parent=35 // pred_check
          %p3152 = pneg %p158
        $region50: #{tpu_custom_call.1} parent=35 // pred_check_branch
          %3154 = sbr.rel (%p3152) target = $region52
        $region51: #{tpu_custom_call.1} parent=35 // pred_region
          %s3155 = smul.u32 16, %s29
          %3157 = vsyncadd %s3148, 0
          %s3158 = smul.addr %s3155, 8
          %s3159 = smul.addr %s28, 128
          %s3160 = sadd.s32 %s3158, %s3159
          %s3161 = smul.addr %s3160, 8
          %s3162 = scalar_lea.hbm %s4, %s3161
          %s3163 = sshll.u32 %s3151, 4
          %s3164 = int_to_ptr.vmem [resolvable:$true] %s3163
          %s3165 = sshll.u32 %s3162, 4
          %s3166 = int_to_ptr.hbm [resolvable:$true] %s3165
          %3171 = dma.vmem_to_hbm [thread:$0]  %s3164, 16384, %s3166, %s3148, 512, 512, 32
        $region52: #{tpu_custom_call.1} parent=35 // pred_fallthru
          _
      $region36: #{tpu_custom_call.1} parent=5 // pred_fallthru
        _
      %p3172 = scmp.le.s32.totalorder 2, %s19
      // Predicated region
      $region53: #{tpu_custom_call.1} parent=5 // pred_check
        %p3173 = pneg %p3172
      $region54: #{tpu_custom_call.1} parent=5 // pred_check_branch
        %3175 = sbr.rel (%p3173) target = $region56
      $region55: #{tpu_custom_call.1} parent=5 // pred_region
        %s3176 = ssub.s32 %s19, 2
        // Predicated region
        $region57: #{tpu_custom_call.1} parent=55 // pred_check
          %p3177 = pneg %p164
        $region58: #{tpu_custom_call.1} parent=55 // pred_check_branch
          %3179 = sbr.rel (%p3177) target = $region60
        $region59: #{tpu_custom_call.1} parent=55 // pred_region
          %s3180 = sand.u32 %s149, 1
          %s3181 = scalar_lea.sflag [#allocation5], %s3180
          %s3182 = sand.u32 %s149, 1
          %s3183 = smul.addr %s3182, 1024
          %s3184 = scalar_lea.vmem [#allocation9], %s3183
          %3186 = dma.done %s3181, 16384
        $region60: #{tpu_custom_call.1} parent=55 // pred_fallthru
          _
      $region56: #{tpu_custom_call.1} parent=5 // pred_fallthru
        _
    $region6: #{tpu_custom_call.1} parent=1 // loop_footer
      %s23 = sadd.s32 1, %s19
    $region7: #{tpu_custom_call.1} parent=1 // loop_footer_branch
      %18 = sbr.rel target = $region3
    $region8: #{tpu_custom_call.1} parent=1 // loop_exit
      _
    %3187 = vsyncpa [#allocation4], 1
    %s3188 = scalar_lea.sflag [#allocation4], 1
    %3189 = vsyncpa %s3188, 1
    %3190 = vsyncpa [#allocation7], 1
    %s3191 = scalar_lea.sflag [#allocation7], 1
    %3192 = vsyncpa %s3191, 1
    %3193 = vsyncpa [#allocation5], 1
    %s3194 = scalar_lea.sflag [#allocation5], 1
    %3195 = vsyncpa %s3194, 1

</llo_original>
